<compile_context>
chip_gen: v5e
topology: v5e:2x2
jax: 0.10.0
libtpu: 0.0.40
codegen_flags: <defaults>
</compile_context>

<pallas_src>
import jax
import jax.numpy as jnp
from jax.experimental import pallas as pl
from jax.experimental.pallas import tpu as pltpu


_PAD_OFF = 8  # sublane-aligned left interior offset inside the padded scratch


def _netmodule_kernel(x_ref, w1_ref, b1_ref, w2_ref, b2_ref, o_ref, xpad, ypad):
    """One image per grid step: y = Conv3BN_2(Conv3BN_1(x)) with BN folded."""
    H, W, Cin = x_ref.shape
    Cout = o_ref.shape[-1]
    HW = H * W

    def conv3x3_bn_relu(pad_ref, w_ref, b_ref, cin, cout):
        # pad_ref holds the zero-padded image; interior at [1:H+1, OFF:OFF+W].
        acc = jnp.zeros((HW, cout), jnp.float32)
        for dy in range(3):
            for dx in range(3):
                k = dy * 3 + dx
                patch = pad_ref[dy:dy + H,
                                _PAD_OFF - 1 + dx:_PAD_OFF - 1 + dx + W, :]
                acc = acc + jnp.dot(patch.reshape(HW, cin), w_ref[k],
                                    preferred_element_type=jnp.float32)
        return jnp.maximum(acc + b_ref[...], 0.0)            # (HW, cout)

    # ---- layer 1 --------------------------------------------------------
    xpad[...] = jnp.zeros_like(xpad)
    xpad[1:H + 1, _PAD_OFF:_PAD_OFF + W, :] = x_ref[...]
    y1 = conv3x3_bn_relu(xpad, w1_ref, b1_ref, Cin, Cout)

    # ---- layer 2 (intermediate stays in VMEM) ---------------------------
    ypad[...] = jnp.zeros_like(ypad)
    ypad[1:H + 1, _PAD_OFF:_PAD_OFF + W, :] = y1.reshape(H, W, Cout)
    y2 = conv3x3_bn_relu(ypad, w2_ref, b2_ref, Cout, Cout)

    o_ref[...] = y2.reshape(H, W, Cout).astype(o_ref.dtype)


def _fold_bn(p):
    """Fold eval-mode BatchNorm into the preceding conv's weight and bias."""
    scale = p["gamma"] / jnp.sqrt(p["var"] + p["eps"])          # (Cout,)
    w = p["conv_w"] * scale[:, None, None, None]                # (Cout,Cin,3,3)
    b = (p["conv_b"] - p["mean"]) * scale + p["beta"]           # (Cout,)
    cout, cin = w.shape[0], w.shape[1]
    # (Cout,Cin,3,3) -> (3,3,Cin,Cout) -> (9,Cin,Cout); tap index k = dy*3+dx.
    wk = jnp.transpose(w, (2, 3, 1, 0)).reshape(9, cin, cout)
    return wk.astype(jnp.float32), b.reshape(1, cout).astype(jnp.float32)


def netmodule_pallas(x_nchw, layer1, layer2):
    B, Cin, H, W = x_nchw.shape
    Cout = layer1["conv_w"].shape[0]

    w1k, b1 = _fold_bn(layer1)          # (9,Cin,Cout), (1,Cout)
    w2k, b2 = _fold_bn(layer2)          # (9,Cout,Cout), (1,Cout)

    # NCHW -> NHWC so channels sit on the lane axis (layout plumbing only).
    x = jnp.transpose(x_nchw, (0, 2, 3, 1)).astype(jnp.float32)

    WB = _PAD_OFF + W + 8               # padded scratch width (multiple of 8)
    full = lambda *shape: pl.BlockSpec(shape, lambda b: (0,) * len(shape))

    out = pl.pallas_call(
        _netmodule_kernel,
        out_shape=jax.ShapeDtypeStruct((B, H, W, Cout), jnp.float32),
        grid_spec=pltpu.PrefetchScalarGridSpec(
            num_scalar_prefetch=0,
            grid=(B,),
            in_specs=[
                pl.BlockSpec((pl.Squeezed(), H, W, Cin), lambda b: (b, 0, 0, 0)),
                full(9, Cin, Cout),      # folded conv1 weights (per tap)
                full(1, Cout),           # folded conv1 bias
                full(9, Cout, Cout),     # folded conv2 weights (per tap)
                full(1, Cout),           # folded conv2 bias
            ],
            out_specs=pl.BlockSpec((pl.Squeezed(), H, W, Cout),
                                   lambda b: (b, 0, 0, 0)),
            scratch_shapes=[
                pltpu.VMEM((H + 2, WB, Cin), jnp.float32),   # padded x
                pltpu.VMEM((H + 2, WB, Cout), jnp.float32),  # padded layer-1 out
            ],
        ),
        compiler_params=pltpu.CompilerParams(
            dimension_semantics=("parallel",)),
    )(x, w1k, b1, w2k, b2)

    return jnp.transpose(out, (0, 3, 1, 2))   # back to NCHW


def netmodule_reference(x, layer1, layer2):
    """Pure-JAX reference matching the PyTorch forward (eval-mode BN)."""
    def conv3bn(x, p):
        y = jax.lax.conv_general_dilated(
            x, p["conv_w"], window_strides=(1, 1), padding=((1, 1), (1, 1)),
            dimension_numbers=("NCHW", "OIHW", "NCHW"),
            precision=jax.lax.Precision.HIGHEST)
        y = y + p["conv_b"][None, :, None, None]
        scale = p["gamma"] / jnp.sqrt(p["var"] + p["eps"])
        y = (y - p["mean"][None, :, None, None]) * scale[None, :, None, None] \
            + p["beta"][None, :, None, None]
        return jax.nn.relu(y)
    return conv3bn(conv3bn(x, layer1), layer2)


def _make_layer(key, cin, cout):
    k = jax.random.split(key, 6)
    fan_in = float(cin * 9)
    return {
        "conv_w": jax.random.normal(k[0], (cout, cin, 3, 3), jnp.float32)
                  / jnp.sqrt(fan_in),
        "conv_b": 0.1 * jax.random.normal(k[1], (cout,), jnp.float32),
        "gamma": 1.0 + 0.1 * jax.random.normal(k[2], (cout,), jnp.float32),
        "beta": 0.1 * jax.random.normal(k[3], (cout,), jnp.float32),
        "mean": 0.1 * jax.random.normal(k[4], (cout,), jnp.float32),
        "var": 0.5 + jax.random.uniform(k[5], (cout,), jnp.float32),
        "eps": 1e-5,
    }


if __name__ == "__main__":
    B, Cin, Cout, H, W = 2, 4, 8, 16, 16
    key = jax.random.PRNGKey(0)
    kx, k1, k2 = jax.random.split(key, 3)

    x = jax.random.normal(kx, (B, Cin, H, W), dtype=jnp.float32)
    layer1 = _make_layer(k1, Cin, Cout)
    layer2 = _make_layer(k2, Cout, Cout)

    # TODO(synk): BatchNorm uses eval-mode running statistics (folded into the
    # convs); training-mode batch statistics are not modeled.

    out = netmodule_pallas(x, layer1, layer2)
    out = jax.block_until_ready(out)

    ref = netmodule_reference(x, layer1, layer2)
    assert out.shape == (B, Cout, H, W)
    assert jnp.allclose(out, ref, atol=1e-3, rtol=1e-3), \
        f"max abs err {jnp.max(jnp.abs(out - ref))}"

    print("KERNEL_OK")
</pallas_src>

<mosaic_0001>
module attributes {stable_mosaic.version = 11 : i64} {
  func.func @_netmodule_kernel(%arg0: i32, %arg1: memref<1x16x16x4xf32, #tpu.memory_space<vmem>>, %arg2: memref<9x4x8xf32, #tpu.memory_space<vmem>>, %arg3: memref<1x8xf32, #tpu.memory_space<vmem>>, %arg4: memref<9x8x8xf32, #tpu.memory_space<vmem>>, %arg5: memref<1x8xf32, #tpu.memory_space<vmem>>, %arg6: memref<1x16x16x8xf32, #tpu.memory_space<vmem>>, %arg7: memref<18x32x4xf32, #tpu.memory_space<vmem>>, %arg8: memref<18x32x8xf32, #tpu.memory_space<vmem>>) attributes {dimension_semantics = [#tpu.dimension_semantics<parallel>], iteration_bounds = array<i64: 2>, scalar_prefetch = 0 : i64, scratch_operands = 2 : i64, tpu.core_type = #tpu.core_type<tc>, window_params = [{transform_indices = @transform_0, window_bounds = array<i64: 1, 16, 16, 4>}, {pipeline_mode = #tpu.pipeline_mode<synchronous>, transform_indices = @transform_1, window_bounds = array<i64: 9, 4, 8>}, {pipeline_mode = #tpu.pipeline_mode<synchronous>, transform_indices = @transform_2, window_bounds = array<i64: 1, 8>}, {pipeline_mode = #tpu.pipeline_mode<synchronous>, transform_indices = @transform_3, window_bounds = array<i64: 9, 8, 8>}, {pipeline_mode = #tpu.pipeline_mode<synchronous>, transform_indices = @transform_4, window_bounds = array<i64: 1, 8>}, {transform_indices = @transform_5, window_bounds = array<i64: 1, 16, 16, 8>}]} {
    %cst = arith.constant 0.000000e+00 : f32
    %0 = vector.broadcast %cst : f32 to vector<18x32x4xf32>
    %c0 = arith.constant 0 : index
    %c0_0 = arith.constant 0 : index
    %c0_1 = arith.constant 0 : index
    %1 = vector.load %arg7[%c0, %c0_0, %c0_1] : memref<18x32x4xf32, #tpu.memory_space<vmem>>, vector<18x32x4xf32>
    tpu.vector_store %arg7[%c0, %c0_0, %c0_1], %0 {strides = array<i32>} : memref<18x32x4xf32, #tpu.memory_space<vmem>>, vector<18x32x4xf32>,
    %c0_2 = arith.constant 0 : index
    %c0_3 = arith.constant 0 : index
    %c0_4 = arith.constant 0 : index
    %c0_5 = arith.constant 0 : index
    %2 = vector.load %arg1[%c0_2, %c0_3, %c0_4, %c0_5] : memref<1x16x16x4xf32, #tpu.memory_space<vmem>>, vector<1x16x16x4xf32>
    %3 = vector.shape_cast %2 : vector<1x16x16x4xf32> to vector<16x16x4xf32>
    %c1 = arith.constant 1 : index
    %c8 = arith.constant 8 : index
    %c0_6 = arith.constant 0 : index
    %4 = vector.load %arg7[%c1, %c8, %c0_6] : memref<18x32x4xf32, #tpu.memory_space<vmem>>, vector<16x16x4xf32>
    tpu.vector_store %arg7[%c1, %c8, %c0_6], %3 {strides = array<i32>} : memref<18x32x4xf32, #tpu.memory_space<vmem>>, vector<16x16x4xf32>,
    %cst_7 = arith.constant 0.000000e+00 : f32
    %5 = vector.broadcast %cst_7 : f32 to vector<256x8xf32>
    %c0_8 = arith.constant 0 : index
    %c7 = arith.constant 7 : index
    %c0_9 = arith.constant 0 : index
    %6 = vector.load %arg7[%c0_8, %c7, %c0_9] : memref<18x32x4xf32, #tpu.memory_space<vmem>>, vector<16x16x4xf32>
    %7 = vector.shape_cast %6 : vector<16x16x4xf32> to vector<256x4xf32>
    %c0_10 = arith.constant 0 : index
    %c0_11 = arith.constant 0 : index
    %c0_12 = arith.constant 0 : index
    %8 = vector.load %arg2[%c0_10, %c0_11, %c0_12] : memref<9x4x8xf32, #tpu.memory_space<vmem>>, vector<1x4x8xf32>
    %9 = vector.shape_cast %8 : vector<1x4x8xf32> to vector<4x8xf32>
    %cst_13 = arith.constant dense<0.000000e+00> : vector<256x8xf32>
    %10 = tpu.matmul %7, %9, %cst_13 {dimension_numbers = #tpu.dot_dimension_numbers<[1], [0], [0], [1], [0, 0, 1, 1], [], []>} : vector<256x4xf32>, vector<4x8xf32>, vector<256x8xf32> -> vector<256x8xf32>
    %11 = arith.addf %5, %10 : vector<256x8xf32>
    %c0_14 = arith.constant 0 : index
    %c8_15 = arith.constant 8 : index
    %c0_16 = arith.constant 0 : index
    %12 = vector.load %arg7[%c0_14, %c8_15, %c0_16] : memref<18x32x4xf32, #tpu.memory_space<vmem>>, vector<16x16x4xf32>
    %13 = vector.shape_cast %12 : vector<16x16x4xf32> to vector<256x4xf32>
    %c1_17 = arith.constant 1 : index
    %c0_18 = arith.constant 0 : index
    %c0_19 = arith.constant 0 : index
    %14 = vector.load %arg2[%c1_17, %c0_18, %c0_19] : memref<9x4x8xf32, #tpu.memory_space<vmem>>, vector<1x4x8xf32>
    %15 = vector.shape_cast %14 : vector<1x4x8xf32> to vector<4x8xf32>
    %cst_20 = arith.constant dense<0.000000e+00> : vector<256x8xf32>
    %16 = tpu.matmul %13, %15, %cst_20 {dimension_numbers = #tpu.dot_dimension_numbers<[1], [0], [0], [1], [0, 0, 1, 1], [], []>} : vector<256x4xf32>, vector<4x8xf32>, vector<256x8xf32> -> vector<256x8xf32>
    %17 = arith.addf %11, %16 : vector<256x8xf32>
    %c0_21 = arith.constant 0 : index
    %c9 = arith.constant 9 : index
    %c0_22 = arith.constant 0 : index
    %18 = vector.load %arg7[%c0_21, %c9, %c0_22] : memref<18x32x4xf32, #tpu.memory_space<vmem>>, vector<16x16x4xf32>
    %19 = vector.shape_cast %18 : vector<16x16x4xf32> to vector<256x4xf32>
    %c2 = arith.constant 2 : index
    %c0_23 = arith.constant 0 : index
    %c0_24 = arith.constant 0 : index
    %20 = vector.load %arg2[%c2, %c0_23, %c0_24] : memref<9x4x8xf32, #tpu.memory_space<vmem>>, vector<1x4x8xf32>
    %21 = vector.shape_cast %20 : vector<1x4x8xf32> to vector<4x8xf32>
    %cst_25 = arith.constant dense<0.000000e+00> : vector<256x8xf32>
    %22 = tpu.matmul %19, %21, %cst_25 {dimension_numbers = #tpu.dot_dimension_numbers<[1], [0], [0], [1], [0, 0, 1, 1], [], []>} : vector<256x4xf32>, vector<4x8xf32>, vector<256x8xf32> -> vector<256x8xf32>
    %23 = arith.addf %17, %22 : vector<256x8xf32>
    %c1_26 = arith.constant 1 : index
    %c7_27 = arith.constant 7 : index
    %c0_28 = arith.constant 0 : index
    %24 = vector.load %arg7[%c1_26, %c7_27, %c0_28] : memref<18x32x4xf32, #tpu.memory_space<vmem>>, vector<16x16x4xf32>
    %25 = vector.shape_cast %24 : vector<16x16x4xf32> to vector<256x4xf32>
    %c3 = arith.constant 3 : index
    %c0_29 = arith.constant 0 : index
    %c0_30 = arith.constant 0 : index
    %26 = vector.load %arg2[%c3, %c0_29, %c0_30] : memref<9x4x8xf32, #tpu.memory_space<vmem>>, vector<1x4x8xf32>
    %27 = vector.shape_cast %26 : vector<1x4x8xf32> to vector<4x8xf32>
    %cst_31 = arith.constant dense<0.000000e+00> : vector<256x8xf32>
    %28 = tpu.matmul %25, %27, %cst_31 {dimension_numbers = #tpu.dot_dimension_numbers<[1], [0], [0], [1], [0, 0, 1, 1], [], []>} : vector<256x4xf32>, vector<4x8xf32>, vector<256x8xf32> -> vector<256x8xf32>
    %29 = arith.addf %23, %28 : vector<256x8xf32>
    %c1_32 = arith.constant 1 : index
    %c8_33 = arith.constant 8 : index
    %c0_34 = arith.constant 0 : index
    %30 = vector.load %arg7[%c1_32, %c8_33, %c0_34] : memref<18x32x4xf32, #tpu.memory_space<vmem>>, vector<16x16x4xf32>
    %31 = vector.shape_cast %30 : vector<16x16x4xf32> to vector<256x4xf32>
    %c4 = arith.constant 4 : index
    %c0_35 = arith.constant 0 : index
    %c0_36 = arith.constant 0 : index
    %32 = vector.load %arg2[%c4, %c0_35, %c0_36] : memref<9x4x8xf32, #tpu.memory_space<vmem>>, vector<1x4x8xf32>
    %33 = vector.shape_cast %32 : vector<1x4x8xf32> to vector<4x8xf32>
    %cst_37 = arith.constant dense<0.000000e+00> : vector<256x8xf32>
    %34 = tpu.matmul %31, %33, %cst_37 {dimension_numbers = #tpu.dot_dimension_numbers<[1], [0], [0], [1], [0, 0, 1, 1], [], []>} : vector<256x4xf32>, vector<4x8xf32>, vector<256x8xf32> -> vector<256x8xf32>
    %35 = arith.addf %29, %34 : vector<256x8xf32>
    %c1_38 = arith.constant 1 : index
    %c9_39 = arith.constant 9 : index
    %c0_40 = arith.constant 0 : index
    %36 = vector.load %arg7[%c1_38, %c9_39, %c0_40] : memref<18x32x4xf32, #tpu.memory_space<vmem>>, vector<16x16x4xf32>
    %37 = vector.shape_cast %36 : vector<16x16x4xf32> to vector<256x4xf32>
    %c5 = arith.constant 5 : index
    %c0_41 = arith.constant 0 : index
    %c0_42 = arith.constant 0 : index
    %38 = vector.load %arg2[%c5, %c0_41, %c0_42] : memref<9x4x8xf32, #tpu.memory_space<vmem>>, vector<1x4x8xf32>
    %39 = vector.shape_cast %38 : vector<1x4x8xf32> to vector<4x8xf32>
    %cst_43 = arith.constant dense<0.000000e+00> : vector<256x8xf32>
    %40 = tpu.matmul %37, %39, %cst_43 {dimension_numbers = #tpu.dot_dimension_numbers<[1], [0], [0], [1], [0, 0, 1, 1], [], []>} : vector<256x4xf32>, vector<4x8xf32>, vector<256x8xf32> -> vector<256x8xf32>
    %41 = arith.addf %35, %40 : vector<256x8xf32>
    %c2_44 = arith.constant 2 : index
    %c7_45 = arith.constant 7 : index
    %c0_46 = arith.constant 0 : index
    %42 = vector.load %arg7[%c2_44, %c7_45, %c0_46] : memref<18x32x4xf32, #tpu.memory_space<vmem>>, vector<16x16x4xf32>
    %43 = vector.shape_cast %42 : vector<16x16x4xf32> to vector<256x4xf32>
    %c6 = arith.constant 6 : index
    %c0_47 = arith.constant 0 : index
    %c0_48 = arith.constant 0 : index
    %44 = vector.load %arg2[%c6, %c0_47, %c0_48] : memref<9x4x8xf32, #tpu.memory_space<vmem>>, vector<1x4x8xf32>
    %45 = vector.shape_cast %44 : vector<1x4x8xf32> to vector<4x8xf32>
    %cst_49 = arith.constant dense<0.000000e+00> : vector<256x8xf32>
    %46 = tpu.matmul %43, %45, %cst_49 {dimension_numbers = #tpu.dot_dimension_numbers<[1], [0], [0], [1], [0, 0, 1, 1], [], []>} : vector<256x4xf32>, vector<4x8xf32>, vector<256x8xf32> -> vector<256x8xf32>
    %47 = arith.addf %41, %46 : vector<256x8xf32>
    %c2_50 = arith.constant 2 : index
    %c8_51 = arith.constant 8 : index
    %c0_52 = arith.constant 0 : index
    %48 = vector.load %arg7[%c2_50, %c8_51, %c0_52] : memref<18x32x4xf32, #tpu.memory_space<vmem>>, vector<16x16x4xf32>
    %49 = vector.shape_cast %48 : vector<16x16x4xf32> to vector<256x4xf32>
    %c7_53 = arith.constant 7 : index
    %c0_54 = arith.constant 0 : index
    %c0_55 = arith.constant 0 : index
    %50 = vector.load %arg2[%c7_53, %c0_54, %c0_55] : memref<9x4x8xf32, #tpu.memory_space<vmem>>, vector<1x4x8xf32>
    %51 = vector.shape_cast %50 : vector<1x4x8xf32> to vector<4x8xf32>
    %cst_56 = arith.constant dense<0.000000e+00> : vector<256x8xf32>
    %52 = tpu.matmul %49, %51, %cst_56 {dimension_numbers = #tpu.dot_dimension_numbers<[1], [0], [0], [1], [0, 0, 1, 1], [], []>} : vector<256x4xf32>, vector<4x8xf32>, vector<256x8xf32> -> vector<256x8xf32>
    %53 = arith.addf %47, %52 : vector<256x8xf32>
    %c2_57 = arith.constant 2 : index
    %c9_58 = arith.constant 9 : index
    %c0_59 = arith.constant 0 : index
    %54 = vector.load %arg7[%c2_57, %c9_58, %c0_59] : memref<18x32x4xf32, #tpu.memory_space<vmem>>, vector<16x16x4xf32>
    %55 = vector.shape_cast %54 : vector<16x16x4xf32> to vector<256x4xf32>
    %c8_60 = arith.constant 8 : index
    %c0_61 = arith.constant 0 : index
    %c0_62 = arith.constant 0 : index
    %56 = vector.load %arg2[%c8_60, %c0_61, %c0_62] : memref<9x4x8xf32, #tpu.memory_space<vmem>>, vector<1x4x8xf32>
    %57 = vector.shape_cast %56 : vector<1x4x8xf32> to vector<4x8xf32>
    %cst_63 = arith.constant dense<0.000000e+00> : vector<256x8xf32>
    %58 = tpu.matmul %55, %57, %cst_63 {dimension_numbers = #tpu.dot_dimension_numbers<[1], [0], [0], [1], [0, 0, 1, 1], [], []>} : vector<256x4xf32>, vector<4x8xf32>, vector<256x8xf32> -> vector<256x8xf32>
    %59 = arith.addf %53, %58 : vector<256x8xf32>
    %c0_64 = arith.constant 0 : index
    %c0_65 = arith.constant 0 : index
    %60 = vector.load %arg3[%c0_64, %c0_65] : memref<1x8xf32, #tpu.memory_space<vmem>>, vector<1x8xf32>
    %61 = vector.broadcast %60 : vector<1x8xf32> to vector<256x8xf32>
    %62 = arith.addf %59, %61 : vector<256x8xf32>
    %cst_66 = arith.constant 0.000000e+00 : f32
    %63 = vector.broadcast %cst_66 : f32 to vector<256x8xf32>
    %64 = arith.maximumf %62, %63 : vector<256x8xf32>
    %cst_67 = arith.constant 0.000000e+00 : f32
    %65 = vector.broadcast %cst_67 : f32 to vector<18x32x8xf32>
    %c0_68 = arith.constant 0 : index
    %c0_69 = arith.constant 0 : index
    %c0_70 = arith.constant 0 : index
    %66 = vector.load %arg8[%c0_68, %c0_69, %c0_70] : memref<18x32x8xf32, #tpu.memory_space<vmem>>, vector<18x32x8xf32>
    tpu.vector_store %arg8[%c0_68, %c0_69, %c0_70], %65 {strides = array<i32>} : memref<18x32x8xf32, #tpu.memory_space<vmem>>, vector<18x32x8xf32>,
    %67 = vector.shape_cast %64 : vector<256x8xf32> to vector<16x16x8xf32>
    %c1_71 = arith.constant 1 : index
    %c8_72 = arith.constant 8 : index
    %c0_73 = arith.constant 0 : index
    %68 = vector.load %arg8[%c1_71, %c8_72, %c0_73] : memref<18x32x8xf32, #tpu.memory_space<vmem>>, vector<16x16x8xf32>
    tpu.vector_store %arg8[%c1_71, %c8_72, %c0_73], %67 {strides = array<i32>} : memref<18x32x8xf32, #tpu.memory_space<vmem>>, vector<16x16x8xf32>,
    %cst_74 = arith.constant 0.000000e+00 : f32
    %69 = vector.broadcast %cst_74 : f32 to vector<256x8xf32>
    %c0_75 = arith.constant 0 : index
    %c7_76 = arith.constant 7 : index
    %c0_77 = arith.constant 0 : index
    %70 = vector.load %arg8[%c0_75, %c7_76, %c0_77] : memref<18x32x8xf32, #tpu.memory_space<vmem>>, vector<16x16x8xf32>
    %71 = vector.shape_cast %70 : vector<16x16x8xf32> to vector<256x8xf32>
    %c0_78 = arith.constant 0 : index
    %c0_79 = arith.constant 0 : index
    %c0_80 = arith.constant 0 : index
    %72 = vector.load %arg4[%c0_78, %c0_79, %c0_80] : memref<9x8x8xf32, #tpu.memory_space<vmem>>, vector<1x8x8xf32>
    %73 = vector.shape_cast %72 : vector<1x8x8xf32> to vector<8x8xf32>
    %cst_81 = arith.constant dense<0.000000e+00> : vector<256x8xf32>
    %74 = tpu.matmul %71, %73, %cst_81 {dimension_numbers = #tpu.dot_dimension_numbers<[1], [0], [0], [1], [0, 0, 1, 1], [], []>} : vector<256x8xf32>, vector<8x8xf32>, vector<256x8xf32> -> vector<256x8xf32>
    %75 = arith.addf %69, %74 : vector<256x8xf32>
    %c0_82 = arith.constant 0 : index
    %c8_83 = arith.constant 8 : index
    %c0_84 = arith.constant 0 : index
    %76 = vector.load %arg8[%c0_82, %c8_83, %c0_84] : memref<18x32x8xf32, #tpu.memory_space<vmem>>, vector<16x16x8xf32>
    %77 = vector.shape_cast %76 : vector<16x16x8xf32> to vector<256x8xf32>
    %c1_85 = arith.constant 1 : index
    %c0_86 = arith.constant 0 : index
    %c0_87 = arith.constant 0 : index
    %78 = vector.load %arg4[%c1_85, %c0_86, %c0_87] : memref<9x8x8xf32, #tpu.memory_space<vmem>>, vector<1x8x8xf32>
    %79 = vector.shape_cast %78 : vector<1x8x8xf32> to vector<8x8xf32>
    %cst_88 = arith.constant dense<0.000000e+00> : vector<256x8xf32>
    %80 = tpu.matmul %77, %79, %cst_88 {dimension_numbers = #tpu.dot_dimension_numbers<[1], [0], [0], [1], [0, 0, 1, 1], [], []>} : vector<256x8xf32>, vector<8x8xf32>, vector<256x8xf32> -> vector<256x8xf32>
    %81 = arith.addf %75, %80 : vector<256x8xf32>
    %c0_89 = arith.constant 0 : index
    %c9_90 = arith.constant 9 : index
    %c0_91 = arith.constant 0 : index
    %82 = vector.load %arg8[%c0_89, %c9_90, %c0_91] : memref<18x32x8xf32, #tpu.memory_space<vmem>>, vector<16x16x8xf32>
    %83 = vector.shape_cast %82 : vector<16x16x8xf32> to vector<256x8xf32>
    %c2_92 = arith.constant 2 : index
    %c0_93 = arith.constant 0 : index
    %c0_94 = arith.constant 0 : index
    %84 = vector.load %arg4[%c2_92, %c0_93, %c0_94] : memref<9x8x8xf32, #tpu.memory_space<vmem>>, vector<1x8x8xf32>
    %85 = vector.shape_cast %84 : vector<1x8x8xf32> to vector<8x8xf32>
    %cst_95 = arith.constant dense<0.000000e+00> : vector<256x8xf32>
    %86 = tpu.matmul %83, %85, %cst_95 {dimension_numbers = #tpu.dot_dimension_numbers<[1], [0], [0], [1], [0, 0, 1, 1], [], []>} : vector<256x8xf32>, vector<8x8xf32>, vector<256x8xf32> -> vector<256x8xf32>
    %87 = arith.addf %81, %86 : vector<256x8xf32>
    %c1_96 = arith.constant 1 : index
    %c7_97 = arith.constant 7 : index
    %c0_98 = arith.constant 0 : index
    %88 = vector.load %arg8[%c1_96, %c7_97, %c0_98] : memref<18x32x8xf32, #tpu.memory_space<vmem>>, vector<16x16x8xf32>
    %89 = vector.shape_cast %88 : vector<16x16x8xf32> to vector<256x8xf32>
    %c3_99 = arith.constant 3 : index
    %c0_100 = arith.constant 0 : index
    %c0_101 = arith.constant 0 : index
    %90 = vector.load %arg4[%c3_99, %c0_100, %c0_101] : memref<9x8x8xf32, #tpu.memory_space<vmem>>, vector<1x8x8xf32>
    %91 = vector.shape_cast %90 : vector<1x8x8xf32> to vector<8x8xf32>
    %cst_102 = arith.constant dense<0.000000e+00> : vector<256x8xf32>
    %92 = tpu.matmul %89, %91, %cst_102 {dimension_numbers = #tpu.dot_dimension_numbers<[1], [0], [0], [1], [0, 0, 1, 1], [], []>} : vector<256x8xf32>, vector<8x8xf32>, vector<256x8xf32> -> vector<256x8xf32>
    %93 = arith.addf %87, %92 : vector<256x8xf32>
    %c1_103 = arith.constant 1 : index
    %c8_104 = arith.constant 8 : index
    %c0_105 = arith.constant 0 : index
    %94 = vector.load %arg8[%c1_103, %c8_104, %c0_105] : memref<18x32x8xf32, #tpu.memory_space<vmem>>, vector<16x16x8xf32>
    %95 = vector.shape_cast %94 : vector<16x16x8xf32> to vector<256x8xf32>
    %c4_106 = arith.constant 4 : index
    %c0_107 = arith.constant 0 : index
    %c0_108 = arith.constant 0 : index
    %96 = vector.load %arg4[%c4_106, %c0_107, %c0_108] : memref<9x8x8xf32, #tpu.memory_space<vmem>>, vector<1x8x8xf32>
    %97 = vector.shape_cast %96 : vector<1x8x8xf32> to vector<8x8xf32>
    %cst_109 = arith.constant dense<0.000000e+00> : vector<256x8xf32>
    %98 = tpu.matmul %95, %97, %cst_109 {dimension_numbers = #tpu.dot_dimension_numbers<[1], [0], [0], [1], [0, 0, 1, 1], [], []>} : vector<256x8xf32>, vector<8x8xf32>, vector<256x8xf32> -> vector<256x8xf32>
    %99 = arith.addf %93, %98 : vector<256x8xf32>
    %c1_110 = arith.constant 1 : index
    %c9_111 = arith.constant 9 : index
    %c0_112 = arith.constant 0 : index
    %100 = vector.load %arg8[%c1_110, %c9_111, %c0_112] : memref<18x32x8xf32, #tpu.memory_space<vmem>>, vector<16x16x8xf32>
    %101 = vector.shape_cast %100 : vector<16x16x8xf32> to vector<256x8xf32>
    %c5_113 = arith.constant 5 : index
    %c0_114 = arith.constant 0 : index
    %c0_115 = arith.constant 0 : index
    %102 = vector.load %arg4[%c5_113, %c0_114, %c0_115] : memref<9x8x8xf32, #tpu.memory_space<vmem>>, vector<1x8x8xf32>
    %103 = vector.shape_cast %102 : vector<1x8x8xf32> to vector<8x8xf32>
    %cst_116 = arith.constant dense<0.000000e+00> : vector<256x8xf32>
    %104 = tpu.matmul %101, %103, %cst_116 {dimension_numbers = #tpu.dot_dimension_numbers<[1], [0], [0], [1], [0, 0, 1, 1], [], []>} : vector<256x8xf32>, vector<8x8xf32>, vector<256x8xf32> -> vector<256x8xf32>
    %105 = arith.addf %99, %104 : vector<256x8xf32>
    %c2_117 = arith.constant 2 : index
    %c7_118 = arith.constant 7 : index
    %c0_119 = arith.constant 0 : index
    %106 = vector.load %arg8[%c2_117, %c7_118, %c0_119] : memref<18x32x8xf32, #tpu.memory_space<vmem>>, vector<16x16x8xf32>
    %107 = vector.shape_cast %106 : vector<16x16x8xf32> to vector<256x8xf32>
    %c6_120 = arith.constant 6 : index
    %c0_121 = arith.constant 0 : index
    %c0_122 = arith.constant 0 : index
    %108 = vector.load %arg4[%c6_120, %c0_121, %c0_122] : memref<9x8x8xf32, #tpu.memory_space<vmem>>, vector<1x8x8xf32>
    %109 = vector.shape_cast %108 : vector<1x8x8xf32> to vector<8x8xf32>
    %cst_123 = arith.constant dense<0.000000e+00> : vector<256x8xf32>
    %110 = tpu.matmul %107, %109, %cst_123 {dimension_numbers = #tpu.dot_dimension_numbers<[1], [0], [0], [1], [0, 0, 1, 1], [], []>} : vector<256x8xf32>, vector<8x8xf32>, vector<256x8xf32> -> vector<256x8xf32>
    %111 = arith.addf %105, %110 : vector<256x8xf32>
    %c2_124 = arith.constant 2 : index
    %c8_125 = arith.constant 8 : index
    %c0_126 = arith.constant 0 : index
    %112 = vector.load %arg8[%c2_124, %c8_125, %c0_126] : memref<18x32x8xf32, #tpu.memory_space<vmem>>, vector<16x16x8xf32>
    %113 = vector.shape_cast %112 : vector<16x16x8xf32> to vector<256x8xf32>
    %c7_127 = arith.constant 7 : index
    %c0_128 = arith.constant 0 : index
    %c0_129 = arith.constant 0 : index
    %114 = vector.load %arg4[%c7_127, %c0_128, %c0_129] : memref<9x8x8xf32, #tpu.memory_space<vmem>>, vector<1x8x8xf32>
    %115 = vector.shape_cast %114 : vector<1x8x8xf32> to vector<8x8xf32>
    %cst_130 = arith.constant dense<0.000000e+00> : vector<256x8xf32>
    %116 = tpu.matmul %113, %115, %cst_130 {dimension_numbers = #tpu.dot_dimension_numbers<[1], [0], [0], [1], [0, 0, 1, 1], [], []>} : vector<256x8xf32>, vector<8x8xf32>, vector<256x8xf32> -> vector<256x8xf32>
    %117 = arith.addf %111, %116 : vector<256x8xf32>
    %c2_131 = arith.constant 2 : index
    %c9_132 = arith.constant 9 : index
    %c0_133 = arith.constant 0 : index
    %118 = vector.load %arg8[%c2_131, %c9_132, %c0_133] : memref<18x32x8xf32, #tpu.memory_space<vmem>>, vector<16x16x8xf32>
    %119 = vector.shape_cast %118 : vector<16x16x8xf32> to vector<256x8xf32>
    %c8_134 = arith.constant 8 : index
    %c0_135 = arith.constant 0 : index
    %c0_136 = arith.constant 0 : index
    %120 = vector.load %arg4[%c8_134, %c0_135, %c0_136] : memref<9x8x8xf32, #tpu.memory_space<vmem>>, vector<1x8x8xf32>
    %121 = vector.shape_cast %120 : vector<1x8x8xf32> to vector<8x8xf32>
    %cst_137 = arith.constant dense<0.000000e+00> : vector<256x8xf32>
    %122 = tpu.matmul %119, %121, %cst_137 {dimension_numbers = #tpu.dot_dimension_numbers<[1], [0], [0], [1], [0, 0, 1, 1], [], []>} : vector<256x8xf32>, vector<8x8xf32>, vector<256x8xf32> -> vector<256x8xf32>
    %123 = arith.addf %117, %122 : vector<256x8xf32>
    %c0_138 = arith.constant 0 : index
    %c0_139 = arith.constant 0 : index
    %124 = vector.load %arg5[%c0_138, %c0_139] : memref<1x8xf32, #tpu.memory_space<vmem>>, vector<1x8xf32>
    %125 = vector.broadcast %124 : vector<1x8xf32> to vector<256x8xf32>
    %126 = arith.addf %123, %125 : vector<256x8xf32>
    %cst_140 = arith.constant 0.000000e+00 : f32
    %127 = vector.broadcast %cst_140 : f32 to vector<256x8xf32>
    %128 = arith.maximumf %126, %127 : vector<256x8xf32>
    %129 = vector.shape_cast %128 : vector<256x8xf32> to vector<16x16x8xf32>
    %c0_141 = arith.constant 0 : index
    %c0_142 = arith.constant 0 : index
    %c0_143 = arith.constant 0 : index
    %c0_144 = arith.constant 0 : index
    %130 = vector.load %arg6[%c0_141, %c0_142, %c0_143, %c0_144] : memref<1x16x16x8xf32, #tpu.memory_space<vmem>>, vector<1x16x16x8xf32>
    %131 = vector.shape_cast %130 : vector<1x16x16x8xf32> to vector<16x16x8xf32>
    %132 = vector.shape_cast %129 : vector<16x16x8xf32> to vector<1x16x16x8xf32>
    tpu.vector_store %arg6[%c0_141, %c0_142, %c0_143, %c0_144], %132 {strides = array<i32>} : memref<1x16x16x8xf32, #tpu.memory_space<vmem>>, vector<1x16x16x8xf32>,
    return
  }
  func.func @transform_0(%arg0: i32) -> (i32, i32, i32, i32) {
    %c0_i32 = arith.constant 0 : i32
    %c0_i32_0 = arith.constant 0 : i32
    %c0_i32_1 = arith.constant 0 : i32
    %c0_i32_2 = arith.constant 0 : i32
    return %arg0, %c0_i32, %c0_i32_0, %c0_i32_1 : i32, i32, i32, i32
  }
  func.func @transform_1(%arg0: i32) -> (i32, i32, i32) {
    %c0_i32 = arith.constant 0 : i32
    %c0_i32_0 = arith.constant 0 : i32
    %c0_i32_1 = arith.constant 0 : i32
    %c0_i32_2 = arith.constant 0 : i32
    return %c0_i32, %c0_i32_0, %c0_i32_1 : i32, i32, i32
  }
  func.func @transform_2(%arg0: i32) -> (i32, i32) {
    %c0_i32 = arith.constant 0 : i32
    %c0_i32_0 = arith.constant 0 : i32
    %c0_i32_1 = arith.constant 0 : i32
    return %c0_i32, %c0_i32_0 : i32, i32
  }
  func.func @transform_3(%arg0: i32) -> (i32, i32, i32) {
    %c0_i32 = arith.constant 0 : i32
    %c0_i32_0 = arith.constant 0 : i32
    %c0_i32_1 = arith.constant 0 : i32
    %c0_i32_2 = arith.constant 0 : i32
    return %c0_i32, %c0_i32_0, %c0_i32_1 : i32, i32, i32
  }
  func.func @transform_4(%arg0: i32) -> (i32, i32) {
    %c0_i32 = arith.constant 0 : i32
    %c0_i32_0 = arith.constant 0 : i32
    %c0_i32_1 = arith.constant 0 : i32
    return %c0_i32, %c0_i32_0 : i32, i32
  }
  func.func @transform_5(%arg0: i32) -> (i32, i32, i32, i32) {
    %c0_i32 = arith.constant 0 : i32
    %c0_i32_0 = arith.constant 0 : i32
    %c0_i32_1 = arith.constant 0 : i32
    %c0_i32_2 = arith.constant 0 : i32
    return %arg0, %c0_i32, %c0_i32_0, %c0_i32_1 : i32, i32, i32, i32
  }
}

</mosaic_0001>

<llo_original>
// kernel: tpu_custom_call.1
$region0: #{tpu_custom_call.1}
  #allocation0 [shape = 'u32[]', space=smem, size = 0x4, offset = 0x4, fixed_abs, tag = 'smem constant byte address 0x4 - core index']
  #allocation1 [shape = 'u32[72,128]{1,0:T(1,128)}', space=vmem, size = 0x9000, scoped, tag = 'internal scratch']
  #allocation2 [shape = 'f32[18,32,4]{2,1,0:T(8,128)}', space=vmem, size = 0x48000, scoped, tag = 'scratch operand']
  #allocation3 [shape = 'f32[18,32,8]{2,1,0:T(8,128)}', space=vmem, size = 0x48000, scoped, tag = 'scratch operand']
  %s0 = inlined_call_operand.vmem [shape: f32[2,16,16,4], index: 0, kind: input, shape index: {}]
  %s1 = inlined_call_operand.vmem [shape: f32[9,4,8], index: 1, kind: input, shape index: {}]
  %s2 = inlined_call_operand.vmem [shape: f32[1,8], index: 2, kind: input, shape index: {}]
  %s3 = inlined_call_operand.vmem [shape: f32[9,8,8], index: 3, kind: input, shape index: {}]
  %s4 = inlined_call_operand.vmem [shape: f32[1,8], index: 4, kind: input, shape index: {}]
  %s5 = inlined_call_operand.vmem [shape: f32[2,16,16,8], index: 5, kind: output, shape index: {}]
  %s6 = sld [smem:[#allocation0]]
  $region53: #{tpu_custom_call.1} parent=0
    _
  %s8 = ssub.s32 1, %s6
  %s9 = scalar_select 0, %s8, %s6
  loop: start=0, step=1, limit=4
  $region2: #{tpu_custom_call.1} parent=0 // loop_pre_header
    _
  $region3: #{tpu_custom_call.1} parent=0 // loop_header
    %s11 = sphi 0, %s15
    %p12 = scmp.ge.s32.totalorder %s11, 4
    %s21 = sphi 0, %s23
    %s24 = sphi 0, %s21
    %s25 = sphi 0, %s24
    %s41 = sphi 0, %s25
    %s45 = sphi 0, %s45
    %s47 = sphi 0, %s45
    %s48 = sphi 0, %s47
    %s62 = sphi 0, %s48
    %s66 = sphi 0, %s66
    %s68 = sphi 0, %s66
    %s69 = sphi 0, %s68
    %s83 = sphi 0, %s69
    %s87 = sphi 0, %s87
    %s89 = sphi 0, %s87
    %s90 = sphi 0, %s89
    %s104 = sphi 0, %s90
    %s108 = sphi 0, %s108
    %s110 = sphi 0, %s108
    %s111 = sphi 0, %s110
    %s125 = sphi 0, %s111
    %s131 = sphi 0, %s133
    %s134 = sphi 0, %s131
    %s135 = sphi 0, %s134
    %s151 = sphi 0, %s135
  $region4: #{tpu_custom_call.1} parent=0 // loop_header_branch
    %14 = sbr.rel (%p12) target = $region8
  $region5: #{tpu_custom_call.1} parent=0 // loop_body
    %s16 = ssub.s32 %s11, 1
    %s17 = ssub.s32 %s11, 2
    %s18 = sadd.s32 %s11, 1
    %s19 = ssub.s32 %s11, %s18
    %p20 = scmp.eq.s32.totalorder %s19, 0
    %s22 = sadd.s32 %s21, 1
    %s23 = scalar_select %p20, %s21, %s22
    %p26 = pneg %p20
    %p27 = scmp.eq.s32.totalorder %s11, 1
    %p28 = por %p26, %p27
    %p29 = scmp.ne.s32.totalorder %s21, %s24
    %p30 = scmp.eq.s32.totalorder %s11, 0
    %p31 = por %p29, %p30
    %p32 = scmp.ne.s32.totalorder %s21, %s24
    %p33 = scmp.eq.s32.totalorder %s16, 1
    %p34 = por %p32, %p33
    %p35 = scmp.ne.s32.totalorder %s24, %s25
    %p36 = scmp.eq.s32.totalorder %s16, 0
    %p37 = por %p35, %p36
    %p38 = scmp.ne.s32.totalorder %s24, %s25
    %p39 = scmp.eq.s32.totalorder %s17, 1
    %p40 = por %p38, %p39
    %p42 = scmp.ne.s32.totalorder %s25, %s41
    %p43 = scmp.eq.s32.totalorder %s17, 0
    %p44 = por %p42, %p43
    %s46 = sadd.s32 %s45, 1
    %p49 = scmp.eq.s32.totalorder %s11, 1
    %p50 = scmp.ne.s32.totalorder %s45, %s47
    %p51 = scmp.eq.s32.totalorder %s11, 0
    %p52 = por %p50, %p51
    %p53 = scmp.ne.s32.totalorder %s45, %s47
    %p54 = scmp.eq.s32.totalorder %s16, 1
    %p55 = por %p53, %p54
    %p56 = scmp.ne.s32.totalorder %s47, %s48
    %p57 = scmp.eq.s32.totalorder %s16, 0
    %p58 = por %p56, %p57
    %p59 = scmp.ne.s32.totalorder %s47, %s48
    %p60 = scmp.eq.s32.totalorder %s17, 1
    %p61 = por %p59, %p60
    %p63 = scmp.ne.s32.totalorder %s48, %s62
    %p64 = scmp.eq.s32.totalorder %s17, 0
    %p65 = por %p63, %p64
    %s67 = sadd.s32 %s66, 1
    %p70 = scmp.eq.s32.totalorder %s11, 1
    %p71 = scmp.ne.s32.totalorder %s66, %s68
    %p72 = scmp.eq.s32.totalorder %s11, 0
    %p73 = por %p71, %p72
    %p74 = scmp.ne.s32.totalorder %s66, %s68
    %p75 = scmp.eq.s32.totalorder %s16, 1
    %p76 = por %p74, %p75
    %p77 = scmp.ne.s32.totalorder %s68, %s69
    %p78 = scmp.eq.s32.totalorder %s16, 0
    %p79 = por %p77, %p78
    %p80 = scmp.ne.s32.totalorder %s68, %s69
    %p81 = scmp.eq.s32.totalorder %s17, 1
    %p82 = por %p80, %p81
    %p84 = scmp.ne.s32.totalorder %s69, %s83
    %p85 = scmp.eq.s32.totalorder %s17, 0
    %p86 = por %p84, %p85
    %s88 = sadd.s32 %s87, 1
    %p91 = scmp.eq.s32.totalorder %s11, 1
    %p92 = scmp.ne.s32.totalorder %s87, %s89
    %p93 = scmp.eq.s32.totalorder %s11, 0
    %p94 = por %p92, %p93
    %p95 = scmp.ne.s32.totalorder %s87, %s89
    %p96 = scmp.eq.s32.totalorder %s16, 1
    %p97 = por %p95, %p96
    %p98 = scmp.ne.s32.totalorder %s89, %s90
    %p99 = scmp.eq.s32.totalorder %s16, 0
    %p100 = por %p98, %p99
    %p101 = scmp.ne.s32.totalorder %s89, %s90
    %p102 = scmp.eq.s32.totalorder %s17, 1
    %p103 = por %p101, %p102
    %p105 = scmp.ne.s32.totalorder %s90, %s104
    %p106 = scmp.eq.s32.totalorder %s17, 0
    %p107 = por %p105, %p106
    %s109 = sadd.s32 %s108, 1
    %p112 = scmp.eq.s32.totalorder %s11, 1
    %p113 = scmp.ne.s32.totalorder %s108, %s110
    %p114 = scmp.eq.s32.totalorder %s11, 0
    %p115 = por %p113, %p114
    %p116 = scmp.ne.s32.totalorder %s108, %s110
    %p117 = scmp.eq.s32.totalorder %s16, 1
    %p118 = por %p116, %p117
    %p119 = scmp.ne.s32.totalorder %s110, %s111
    %p120 = scmp.eq.s32.totalorder %s16, 0
    %p121 = por %p119, %p120
    %p122 = scmp.ne.s32.totalorder %s110, %s111
    %p123 = scmp.eq.s32.totalorder %s17, 1
    %p124 = por %p122, %p123
    %p126 = scmp.ne.s32.totalorder %s111, %s125
    %p127 = scmp.eq.s32.totalorder %s17, 0
    %p128 = por %p126, %p127
    %s129 = ssub.s32 %s11, %s18
    %p130 = scmp.eq.s32.totalorder %s129, 0
    %s132 = sadd.s32 %s131, 1
    %s133 = scalar_select %p130, %s131, %s132
    %p136 = pneg %p130
    %p137 = scmp.eq.s32.totalorder %s11, 1
    %p138 = por %p136, %p137
    %p139 = scmp.ne.s32.totalorder %s131, %s134
    %p140 = scmp.eq.s32.totalorder %s11, 0
    %p141 = por %p139, %p140
    %p142 = scmp.ne.s32.totalorder %s131, %s134
    %p143 = scmp.eq.s32.totalorder %s16, 1
    %p144 = por %p142, %p143
    %p145 = scmp.ne.s32.totalorder %s134, %s135
    %p146 = scmp.eq.s32.totalorder %s16, 0
    %p147 = por %p145, %p146
    %p148 = scmp.ne.s32.totalorder %s134, %s135
    %p149 = scmp.eq.s32.totalorder %s17, 1
    %p150 = por %p148, %p149
    %p152 = scmp.ne.s32.totalorder %s135, %s151
    %p153 = scmp.eq.s32.totalorder %s17, 0
    %p154 = por %p152, %p153
    %p155 = scmp.le.s32.totalorder 1, %s11
    %p156 = scmp.lt.s32.totalorder %s11, 3
    %p157 = pnand %p155, %p156
    %p158 = pneg %p157
    // Predicated region
    $region9: #{tpu_custom_call.1} parent=5 // pred_check
      _
    $region10: #{tpu_custom_call.1} parent=5 // pred_check_branch
      %160 = sbr.rel (%p157) target = $region12
    $region11: #{tpu_custom_call.1} parent=5 // pred_region
      %s161 = ssub.s32 %s11, 1
      // Predicated region
      $region13: #{tpu_custom_call.1} parent=11 // pred_check
        %p162 = pneg %p58
      $region14: #{tpu_custom_call.1} parent=11 // pred_check_branch
        %164 = sbr.rel (%p162) target = $region16
      $region15: #{tpu_custom_call.1} parent=11 // pred_region
        _
      $region16: #{tpu_custom_call.1} parent=11 // pred_fallthru
        _
      // Predicated region
      $region17: #{tpu_custom_call.1} parent=11 // pred_check
        %p165 = pneg %p79
      $region18: #{tpu_custom_call.1} parent=11 // pred_check_branch
        %167 = sbr.rel (%p165) target = $region20
      $region19: #{tpu_custom_call.1} parent=11 // pred_region
        _
      $region20: #{tpu_custom_call.1} parent=11 // pred_fallthru
        _
      // Predicated region
      $region21: #{tpu_custom_call.1} parent=11 // pred_check
        %p168 = pneg %p100
      $region22: #{tpu_custom_call.1} parent=11 // pred_check_branch
        %170 = sbr.rel (%p168) target = $region24
      $region23: #{tpu_custom_call.1} parent=11 // pred_region
        _
      $region24: #{tpu_custom_call.1} parent=11 // pred_fallthru
        _
      // Predicated region
      $region25: #{tpu_custom_call.1} parent=11 // pred_check
        %p171 = pneg %p121
      $region26: #{tpu_custom_call.1} parent=11 // pred_check_branch
        %173 = sbr.rel (%p171) target = $region28
      $region27: #{tpu_custom_call.1} parent=11 // pred_region
        _
      $region28: #{tpu_custom_call.1} parent=11 // pred_fallthru
        _
    $region12: #{tpu_custom_call.1} parent=5 // pred_fallthru
      _
    %p174 = scmp.lt.s32.totalorder %s11, 2
    // Predicated region
    $region29: #{tpu_custom_call.1} parent=5 // pred_check
      %p175 = pneg %p174
    $region30: #{tpu_custom_call.1} parent=5 // pred_check_branch
      %177 = sbr.rel (%p175) target = $region32
    $region31: #{tpu_custom_call.1} parent=5 // pred_region
      // Predicated region
      $region33: #{tpu_custom_call.1} parent=31 // pred_check
        %p178 = pneg %p31
      $region34: #{tpu_custom_call.1} parent=31 // pred_check_branch
        %180 = sbr.rel (%p178) target = $region36
      $region35: #{tpu_custom_call.1} parent=31 // pred_region
        %p181 = scmp.lt.s32.totalorder %s11, 1
        %s182 = scalar_select %p181, %s11, 1
        %s183 = smul.addr %s182, 32
        %s184 = smul.addr %s183, 8
        %s185 = scalar_lea.vmem %s0, %s184
      $region36: #{tpu_custom_call.1} parent=31 // pred_fallthru
        _
    $region32: #{tpu_custom_call.1} parent=5 // pred_fallthru
      _
    %p186 = scmp.le.s32.totalorder 1, %s11
    %p187 = scmp.lt.s32.totalorder %s11, 3
    %p188 = pnand %p186, %p187
    %p189 = pneg %p188
    // Predicated region
    $region37: #{tpu_custom_call.1} parent=5 // pred_check
      _
    $region38: #{tpu_custom_call.1} parent=5 // pred_check_branch
      %191 = sbr.rel (%p188) target = $region40
    $region39: #{tpu_custom_call.1} parent=5 // pred_region
      %s192 = ssub.s32 %s11, 1
      %p193 = scmp.lt.s32.totalorder %s16, 1
      %s194 = scalar_select %p193, %s16, 1
      %s195 = smul.addr %s194, 32
      %s196 = smul.addr %s195, 8
      %s197 = scalar_lea.vmem %s0, %s196
      %p198 = pneg %p37
      %p199 = pneg %p34
      %p200 = pneg %p58
      %p201 = pneg %p55
      %p202 = pneg %p79
      %p203 = pneg %p76
      %p204 = pneg %p100
      %p205 = pneg %p97
      %p206 = pneg %p121
      %p207 = pneg %p118
      %p208 = pneg %p147
      %p209 = pneg %p144
      %p210 = scmp.lt.s32.totalorder %s16, 1
      %s211 = scalar_select %p210, %s16, 1
      %s212 = smul.addr %s211, 32
      %s213 = smul.addr %s212, 8
      %s214 = scalar_lea.vmem %s5, %s213
      %p215 = scmp.lt.s32.totalorder %s16, 1
      %s216 = scalar_select %p215, %s16, 1
      %s217 = smul.addr %s216, 32
      %s218 = smul.addr %s217, 8
      %s219 = scalar_lea.vmem %s0, %s218
      %p220 = scmp.lt.s32.totalorder %s16, 1
      %s221 = scalar_select %p220, %s16, 1
      %s222 = smul.addr %s221, 32
      %s223 = smul.addr %s222, 8
      %s224 = scalar_lea.vmem %s5, %s223
      %vm225 = vcmask 31744
      %226 = vst.msk [vmem:[#allocation2] sm:$0xff] %vm225, 0.0
      %227 = vst.msk [vmem:[#allocation2 + $0x8] sm:$0xff] %vm225, 0.0
      %228 = vst.msk [vmem:[#allocation2 + $0x10] sm:$0xff] %vm225, 0.0
      %229 = vst.msk [vmem:[#allocation2 + $0x18] sm:$0xff] %vm225, 0.0
      %230 = vst.msk [vmem:[#allocation2 + $0x20] sm:$0xff] %vm225, 0.0
      %231 = vst.msk [vmem:[#allocation2 + $0x28] sm:$0xff] %vm225, 0.0
      %232 = vst.msk [vmem:[#allocation2 + $0x30] sm:$0xff] %vm225, 0.0
      %233 = vst.msk [vmem:[#allocation2 + $0x38] sm:$0xff] %vm225, 0.0
      %234 = vst.msk [vmem:[#allocation2 + $0x40] sm:$0xff] %vm225, 0.0
      %235 = vst.msk [vmem:[#allocation2 + $0x48] sm:$0xff] %vm225, 0.0
      %236 = vst.msk [vmem:[#allocation2 + $0x50] sm:$0xff] %vm225, 0.0
      %237 = vst.msk [vmem:[#allocation2 + $0x58] sm:$0xff] %vm225, 0.0
      %238 = vst.msk [vmem:[#allocation2 + $0x60] sm:$0xff] %vm225, 0.0
      %239 = vst.msk [vmem:[#allocation2 + $0x68] sm:$0xff] %vm225, 0.0
      %240 = vst.msk [vmem:[#allocation2 + $0x70] sm:$0xff] %vm225, 0.0
      %241 = vst.msk [vmem:[#allocation2 + $0x78] sm:$0xff] %vm225, 0.0
      %242 = vst.msk [vmem:[#allocation2 + $0x80] sm:$0xff] %vm225, 0.0
      %243 = vst.msk [vmem:[#allocation2 + $0x88] sm:$0xff] %vm225, 0.0
      %244 = vst.msk [vmem:[#allocation2 + $0x90] sm:$0xff] %vm225, 0.0
      %245 = vst.msk [vmem:[#allocation2 + $0x98] sm:$0xff] %vm225, 0.0
      %246 = vst.msk [vmem:[#allocation2 + $0xa0] sm:$0xff] %vm225, 0.0
      %247 = vst.msk [vmem:[#allocation2 + $0xa8] sm:$0xff] %vm225, 0.0
      %248 = vst.msk [vmem:[#allocation2 + $0xb0] sm:$0xff] %vm225, 0.0
      %249 = vst.msk [vmem:[#allocation2 + $0xb8] sm:$0xff] %vm225, 0.0
      %250 = vst.msk [vmem:[#allocation2 + $0xc0] sm:$0xff] %vm225, 0.0
      %251 = vst.msk [vmem:[#allocation2 + $0xc8] sm:$0xff] %vm225, 0.0
      %252 = vst.msk [vmem:[#allocation2 + $0xd0] sm:$0xff] %vm225, 0.0
      %253 = vst.msk [vmem:[#allocation2 + $0xd8] sm:$0xff] %vm225, 0.0
      %254 = vst.msk [vmem:[#allocation2 + $0xe0] sm:$0xff] %vm225, 0.0
      %255 = vst.msk [vmem:[#allocation2 + $0xe8] sm:$0xff] %vm225, 0.0
      %256 = vst.msk [vmem:[#allocation2 + $0xf0] sm:$0xff] %vm225, 0.0
      %257 = vst.msk [vmem:[#allocation2 + $0xf8] sm:$0xff] %vm225, 0.0
      %258 = vst.msk [vmem:[#allocation2 + $0x100] sm:$0xff] %vm225, 0.0
      %259 = vst.msk [vmem:[#allocation2 + $0x108] sm:$0xff] %vm225, 0.0
      %260 = vst.msk [vmem:[#allocation2 + $0x110] sm:$0xff] %vm225, 0.0
      %261 = vst.msk [vmem:[#allocation2 + $0x118] sm:$0xff] %vm225, 0.0
      %262 = vst.msk [vmem:[#allocation2 + $0x120] sm:$0xff] %vm225, 0.0
      %263 = vst.msk [vmem:[#allocation2 + $0x128] sm:$0xff] %vm225, 0.0
      %264 = vst.msk [vmem:[#allocation2 + $0x130] sm:$0xff] %vm225, 0.0
      %265 = vst.msk [vmem:[#allocation2 + $0x138] sm:$0xff] %vm225, 0.0
      %266 = vst.msk [vmem:[#allocation2 + $0x140] sm:$0xff] %vm225, 0.0
      %267 = vst.msk [vmem:[#allocation2 + $0x148] sm:$0xff] %vm225, 0.0
      %268 = vst.msk [vmem:[#allocation2 + $0x150] sm:$0xff] %vm225, 0.0
      %269 = vst.msk [vmem:[#allocation2 + $0x158] sm:$0xff] %vm225, 0.0
      %270 = vst.msk [vmem:[#allocation2 + $0x160] sm:$0xff] %vm225, 0.0
      %271 = vst.msk [vmem:[#allocation2 + $0x168] sm:$0xff] %vm225, 0.0
      %272 = vst.msk [vmem:[#allocation2 + $0x170] sm:$0xff] %vm225, 0.0
      %273 = vst.msk [vmem:[#allocation2 + $0x178] sm:$0xff] %vm225, 0.0
      %274 = vst.msk [vmem:[#allocation2 + $0x180] sm:$0xff] %vm225, 0.0
      %275 = vst.msk [vmem:[#allocation2 + $0x188] sm:$0xff] %vm225, 0.0
      %276 = vst.msk [vmem:[#allocation2 + $0x190] sm:$0xff] %vm225, 0.0
      %277 = vst.msk [vmem:[#allocation2 + $0x198] sm:$0xff] %vm225, 0.0
      %278 = vst.msk [vmem:[#allocation2 + $0x1a0] sm:$0xff] %vm225, 0.0
      %279 = vst.msk [vmem:[#allocation2 + $0x1a8] sm:$0xff] %vm225, 0.0
      %280 = vst.msk [vmem:[#allocation2 + $0x1b0] sm:$0xff] %vm225, 0.0
      %281 = vst.msk [vmem:[#allocation2 + $0x1b8] sm:$0xff] %vm225, 0.0
      %282 = vst.msk [vmem:[#allocation2 + $0x1c0] sm:$0xff] %vm225, 0.0
      %283 = vst.msk [vmem:[#allocation2 + $0x1c8] sm:$0xff] %vm225, 0.0
      %284 = vst.msk [vmem:[#allocation2 + $0x1d0] sm:$0xff] %vm225, 0.0
      %285 = vst.msk [vmem:[#allocation2 + $0x1d8] sm:$0xff] %vm225, 0.0
      %286 = vst.msk [vmem:[#allocation2 + $0x1e0] sm:$0xff] %vm225, 0.0
      %287 = vst.msk [vmem:[#allocation2 + $0x1e8] sm:$0xff] %vm225, 0.0
      %288 = vst.msk [vmem:[#allocation2 + $0x1f0] sm:$0xff] %vm225, 0.0
      %289 = vst.msk [vmem:[#allocation2 + $0x1f8] sm:$0xff] %vm225, 0.0
      %290 = vst.msk [vmem:[#allocation2 + $0x200] sm:$0xff] %vm225, 0.0
      %291 = vst.msk [vmem:[#allocation2 + $0x208] sm:$0xff] %vm225, 0.0
      %292 = vst.msk [vmem:[#allocation2 + $0x210] sm:$0xff] %vm225, 0.0
      %293 = vst.msk [vmem:[#allocation2 + $0x218] sm:$0xff] %vm225, 0.0
      %294 = vst.msk [vmem:[#allocation2 + $0x220] sm:$0xff] %vm225, 0.0
      %295 = vst.msk [vmem:[#allocation2 + $0x228] sm:$0xff] %vm225, 0.0
      %296 = vst.msk [vmem:[#allocation2 + $0x230] sm:$0xff] %vm225, 0.0
      %297 = vst.msk [vmem:[#allocation2 + $0x238] sm:$0xff] %vm225, 0.0
      %v298 = vld [vmem:[%s219] sm:$0xff]
      %v299 = vld [vmem:[%s219 + $0x8] sm:$0xff]
      %v300 = vld [vmem:[%s219 + $0x10] sm:$0xff]
      %v301 = vld [vmem:[%s219 + $0x18] sm:$0xff]
      %v302 = vld [vmem:[%s219 + $0x20] sm:$0xff]
      %v303 = vld [vmem:[%s219 + $0x28] sm:$0xff]
      %v304 = vld [vmem:[%s219 + $0x30] sm:$0xff]
      %v305 = vld [vmem:[%s219 + $0x38] sm:$0xff]
      %v306 = vld [vmem:[%s219 + $0x40] sm:$0xff]
      %v307 = vld [vmem:[%s219 + $0x48] sm:$0xff]
      %v308 = vld [vmem:[%s219 + $0x50] sm:$0xff]
      %v309 = vld [vmem:[%s219 + $0x58] sm:$0xff]
      %v310 = vld [vmem:[%s219 + $0x60] sm:$0xff]
      %v311 = vld [vmem:[%s219 + $0x68] sm:$0xff]
      %v312 = vld [vmem:[%s219 + $0x70] sm:$0xff]
      %v313 = vld [vmem:[%s219 + $0x78] sm:$0xff]
      %v314 = vld [vmem:[%s219 + $0x80] sm:$0xff]
      %v315 = vld [vmem:[%s219 + $0x88] sm:$0xff]
      %v316 = vld [vmem:[%s219 + $0x90] sm:$0xff]
      %v317 = vld [vmem:[%s219 + $0x98] sm:$0xff]
      %v318 = vld [vmem:[%s219 + $0xa0] sm:$0xff]
      %v319 = vld [vmem:[%s219 + $0xa8] sm:$0xff]
      %v320 = vld [vmem:[%s219 + $0xb0] sm:$0xff]
      %v321 = vld [vmem:[%s219 + $0xb8] sm:$0xff]
      %v322 = vld [vmem:[%s219 + $0xc0] sm:$0xff]
      %v323 = vld [vmem:[%s219 + $0xc8] sm:$0xff]
      %v324 = vld [vmem:[%s219 + $0xd0] sm:$0xff]
      %v325 = vld [vmem:[%s219 + $0xd8] sm:$0xff]
      %v326 = vld [vmem:[%s219 + $0xe0] sm:$0xff]
      %v327 = vld [vmem:[%s219 + $0xe8] sm:$0xff]
      %v328 = vld [vmem:[%s219 + $0xf0] sm:$0xff]
      %v329 = vld [vmem:[%s219 + $0xf8] sm:$0xff]
      %s330 = scalar_lea.vmem [#allocation2], 32
      %331 = vst.msk [vmem:[%s330 + $0x8] sm:$0xff] %vm225, %v298
      %332 = vst.msk [vmem:[%s330 + $0x10] sm:$0xff] %vm225, %v299
      %333 = vst.msk [vmem:[%s330 + $0x28] sm:$0xff] %vm225, %v300
      %334 = vst.msk [vmem:[%s330 + $0x30] sm:$0xff] %vm225, %v301
      %335 = vst.msk [vmem:[%s330 + $0x48] sm:$0xff] %vm225, %v302
      %336 = vst.msk [vmem:[%s330 + $0x50] sm:$0xff] %vm225, %v303
      %337 = vst.msk [vmem:[%s330 + $0x68] sm:$0xff] %vm225, %v304
      %338 = vst.msk [vmem:[%s330 + $0x70] sm:$0xff] %vm225, %v305
      %339 = vst.msk [vmem:[%s330 + $0x88] sm:$0xff] %vm225, %v306
      %340 = vst.msk [vmem:[%s330 + $0x90] sm:$0xff] %vm225, %v307
      %341 = vst.msk [vmem:[%s330 + $0xa8] sm:$0xff] %vm225, %v308
      %342 = vst.msk [vmem:[%s330 + $0xb0] sm:$0xff] %vm225, %v309
      %343 = vst.msk [vmem:[%s330 + $0xc8] sm:$0xff] %vm225, %v310
      %344 = vst.msk [vmem:[%s330 + $0xd0] sm:$0xff] %vm225, %v311
      %345 = vst.msk [vmem:[%s330 + $0xe8] sm:$0xff] %vm225, %v312
      %346 = vst.msk [vmem:[%s330 + $0xf0] sm:$0xff] %vm225, %v313
      %347 = vst.msk [vmem:[%s330 + $0x108] sm:$0xff] %vm225, %v314
      %348 = vst.msk [vmem:[%s330 + $0x110] sm:$0xff] %vm225, %v315
      %349 = vst.msk [vmem:[%s330 + $0x128] sm:$0xff] %vm225, %v316
      %350 = vst.msk [vmem:[%s330 + $0x130] sm:$0xff] %vm225, %v317
      %351 = vst.msk [vmem:[%s330 + $0x148] sm:$0xff] %vm225, %v318
      %352 = vst.msk [vmem:[%s330 + $0x150] sm:$0xff] %vm225, %v319
      %353 = vst.msk [vmem:[%s330 + $0x168] sm:$0xff] %vm225, %v320
      %354 = vst.msk [vmem:[%s330 + $0x170] sm:$0xff] %vm225, %v321
      %355 = vst.msk [vmem:[%s330 + $0x188] sm:$0xff] %vm225, %v322
      %356 = vst.msk [vmem:[%s330 + $0x190] sm:$0xff] %vm225, %v323
      %357 = vst.msk [vmem:[%s330 + $0x1a8] sm:$0xff] %vm225, %v324
      %358 = vst.msk [vmem:[%s330 + $0x1b0] sm:$0xff] %vm225, %v325
      %359 = vst.msk [vmem:[%s330 + $0x1c8] sm:$0xff] %vm225, %v326
      %360 = vst.msk [vmem:[%s330 + $0x1d0] sm:$0xff] %vm225, %v327
      %361 = vst.msk [vmem:[%s330 + $0x1e8] sm:$0xff] %vm225, %v328
      %362 = vst.msk [vmem:[%s330 + $0x1f0] sm:$0xff] %vm225, %v329
      %v363 = vld [vmem:[#allocation2 + $0x7] sm:$0xff]
      %v364 = vld [vmem:[#allocation2 + $0xf] sm:$0xff]
      %v365 = vld [vmem:[#allocation2 + $0x27] sm:$0xff]
      %v366 = vld [vmem:[#allocation2 + $0x2f] sm:$0xff]
      %v367 = vld [vmem:[#allocation2 + $0x47] sm:$0xff]
      %v368 = vld [vmem:[#allocation2 + $0x4f] sm:$0xff]
      %v369 = vld [vmem:[#allocation2 + $0x67] sm:$0xff]
      %v370 = vld [vmem:[#allocation2 + $0x6f] sm:$0xff]
      %v371 = vld [vmem:[#allocation2 + $0x87] sm:$0xff]
      %v372 = vld [vmem:[#allocation2 + $0x8f] sm:$0xff]
      %v373 = vld [vmem:[#allocation2 + $0xa7] sm:$0xff]
      %v374 = vld [vmem:[#allocation2 + $0xaf] sm:$0xff]
      %v375 = vld [vmem:[#allocation2 + $0xc7] sm:$0xff]
      %v376 = vld [vmem:[#allocation2 + $0xcf] sm:$0xff]
      %v377 = vld [vmem:[#allocation2 + $0xe7] sm:$0xff]
      %v378 = vld [vmem:[#allocation2 + $0xef] sm:$0xff]
      %v379 = vld [vmem:[#allocation2 + $0x107] sm:$0xff]
      %v380 = vld [vmem:[#allocation2 + $0x10f] sm:$0xff]
      %v381 = vld [vmem:[#allocation2 + $0x127] sm:$0xff]
      %v382 = vld [vmem:[#allocation2 + $0x12f] sm:$0xff]
      %v383 = vld [vmem:[#allocation2 + $0x147] sm:$0xff]
      %v384 = vld [vmem:[#allocation2 + $0x14f] sm:$0xff]
      %v385 = vld [vmem:[#allocation2 + $0x167] sm:$0xff]
      %v386 = vld [vmem:[#allocation2 + $0x16f] sm:$0xff]
      %v387 = vld [vmem:[#allocation2 + $0x187] sm:$0xff]
      %v388 = vld [vmem:[#allocation2 + $0x18f] sm:$0xff]
      %v389 = vld [vmem:[#allocation2 + $0x1a7] sm:$0xff]
      %v390 = vld [vmem:[#allocation2 + $0x1af] sm:$0xff]
      %v391 = vld [vmem:[#allocation2 + $0x1c7] sm:$0xff]
      %v392 = vld [vmem:[#allocation2 + $0x1cf] sm:$0xff]
      %v393 = vld [vmem:[#allocation2 + $0x1e7] sm:$0xff]
      %v394 = vld [vmem:[#allocation2 + $0x1ef] sm:$0xff]
      %v395 = vld [vmem:[%s1] sm:$0xf]
      %v396 = vld [vmem:[#allocation2 + $0x8] sm:$0xff]
      %v397 = vld [vmem:[#allocation2 + $0x10] sm:$0xff]
      %v398 = vld [vmem:[#allocation2 + $0x28] sm:$0xff]
      %v399 = vld [vmem:[#allocation2 + $0x30] sm:$0xff]
      %v400 = vld [vmem:[#allocation2 + $0x48] sm:$0xff]
      %v401 = vld [vmem:[#allocation2 + $0x50] sm:$0xff]
      %v402 = vld [vmem:[#allocation2 + $0x68] sm:$0xff]
      %v403 = vld [vmem:[#allocation2 + $0x70] sm:$0xff]
      %v404 = vld [vmem:[#allocation2 + $0x88] sm:$0xff]
      %v405 = vld [vmem:[#allocation2 + $0x90] sm:$0xff]
      %v406 = vld [vmem:[#allocation2 + $0xa8] sm:$0xff]
      %v407 = vld [vmem:[#allocation2 + $0xb0] sm:$0xff]
      %v408 = vld [vmem:[#allocation2 + $0xc8] sm:$0xff]
      %v409 = vld [vmem:[#allocation2 + $0xd0] sm:$0xff]
      %v410 = vld [vmem:[#allocation2 + $0xe8] sm:$0xff]
      %v411 = vld [vmem:[#allocation2 + $0xf0] sm:$0xff]
      %v412 = vld [vmem:[#allocation2 + $0x108] sm:$0xff]
      %v413 = vld [vmem:[#allocation2 + $0x110] sm:$0xff]
      %v414 = vld [vmem:[#allocation2 + $0x128] sm:$0xff]
      %v415 = vld [vmem:[#allocation2 + $0x130] sm:$0xff]
      %v416 = vld [vmem:[#allocation2 + $0x148] sm:$0xff]
      %v417 = vld [vmem:[#allocation2 + $0x150] sm:$0xff]
      %v418 = vld [vmem:[#allocation2 + $0x168] sm:$0xff]
      %v419 = vld [vmem:[#allocation2 + $0x170] sm:$0xff]
      %v420 = vld [vmem:[#allocation2 + $0x188] sm:$0xff]
      %v421 = vld [vmem:[#allocation2 + $0x190] sm:$0xff]
      %v422 = vld [vmem:[#allocation2 + $0x1a8] sm:$0xff]
      %v423 = vld [vmem:[#allocation2 + $0x1b0] sm:$0xff]
      %v424 = vld [vmem:[#allocation2 + $0x1c8] sm:$0xff]
      %v425 = vld [vmem:[#allocation2 + $0x1d0] sm:$0xff]
      %v426 = vld [vmem:[#allocation2 + $0x1e8] sm:$0xff]
      %v427 = vld [vmem:[#allocation2 + $0x1f0] sm:$0xff]
      %s428 = scalar_lea.vmem %s1, 4
      %v429 = vld [vmem:[%s428] sm:$0xf]
      %v431 = vsel %vm225, %v396, 0
      %v434 = vsel %vm225, %v397, 0
      %v437 = vsel %vm225, %v398, 0
      %v440 = vsel %vm225, %v399, 0
      %v443 = vsel %vm225, %v400, 0
      %v446 = vsel %vm225, %v401, 0
      %v449 = vsel %vm225, %v402, 0
      %v452 = vsel %vm225, %v403, 0
      %v455 = vsel %vm225, %v404, 0
      %v458 = vsel %vm225, %v405, 0
      %v461 = vsel %vm225, %v406, 0
      %v464 = vsel %vm225, %v407, 0
      %v467 = vsel %vm225, %v408, 0
      %v470 = vsel %vm225, %v409, 0
      %v473 = vsel %vm225, %v410, 0
      %v476 = vsel %vm225, %v411, 0
      %v479 = vsel %vm225, %v412, 0
      %v482 = vsel %vm225, %v413, 0
      %v485 = vsel %vm225, %v414, 0
      %v488 = vsel %vm225, %v415, 0
      %v491 = vsel %vm225, %v416, 0
      %v494 = vsel %vm225, %v417, 0
      %v497 = vsel %vm225, %v418, 0
      %v500 = vsel %vm225, %v419, 0
      %v503 = vsel %vm225, %v420, 0
      %v506 = vsel %vm225, %v421, 0
      %v509 = vsel %vm225, %v422, 0
      %v512 = vsel %vm225, %v423, 0
      %v515 = vsel %vm225, %v424, 0
      %v518 = vsel %vm225, %v425, 0
      %v521 = vsel %vm225, %v426, 0
      %v524 = vsel %vm225, %v427, 0
      %vm526 = vcmask 1043456
      %v528 = vsel %vm526, %v429, 0
      %530 = vmatpush.msra.mxu0 0.0
      %531 = vmatpush.msra.mxu0 0.0
      %532 = vmatpush.msra.mxu0 0.0
      %533 = vmatpush.msra.mxu0 0.0
      %534 = vmatpush.msra.mxu0 0.0
      %535 = vmatpush.msra.mxu0 0.0
      %536 = vmatpush.msra.mxu0 0.0
      %537 = vmatpush.msra.mxu0 0.0
      %538 = vmatpush.msra.mxu0 0.0
      %539 = vmatpush.msra.mxu0 0.0
      %540 = vmatpush.msra.mxu0 0.0
      %541 = vmatpush.msra.mxu0 0.0
      %542 = vmatpush.msra.mxu0 0.0
      %543 = vmatpush.msra.mxu0 0.0
      %544 = vmatpush.msra.mxu0 0.0
      %545 = vmatpush.msra.mxu0 %v528
      %546 = vmatmul.f32.gmra.mxu0 %v431
      %v547 = vpop.f32.mrf.mxu0
      %v548 = vadd.f32 0.0, %v547
      %549 = vmatmul.f32.gmra.mxu0 %v434
      %v550 = vpop.f32.mrf.mxu0
      %v551 = vadd.f32 0.0, %v550
      %552 = vmatmul.f32.gmra.mxu0 %v437
      %v553 = vpop.f32.mrf.mxu0
      %v554 = vadd.f32 0.0, %v553
      %555 = vmatmul.f32.gmra.mxu0 %v440
      %v556 = vpop.f32.mrf.mxu0
      %v557 = vadd.f32 0.0, %v556
      %558 = vmatmul.f32.gmra.mxu0 %v443
      %v559 = vpop.f32.mrf.mxu0
      %v560 = vadd.f32 0.0, %v559
      %561 = vmatmul.f32.gmra.mxu0 %v446
      %v562 = vpop.f32.mrf.mxu0
      %v563 = vadd.f32 0.0, %v562
      %564 = vmatmul.f32.gmra.mxu0 %v449
      %v565 = vpop.f32.mrf.mxu0
      %v566 = vadd.f32 0.0, %v565
      %567 = vmatmul.f32.gmra.mxu0 %v452
      %v568 = vpop.f32.mrf.mxu0
      %v569 = vadd.f32 0.0, %v568
      %570 = vmatmul.f32.gmra.mxu0 %v455
      %v571 = vpop.f32.mrf.mxu0
      %v572 = vadd.f32 0.0, %v571
      %573 = vmatmul.f32.gmra.mxu0 %v458
      %v574 = vpop.f32.mrf.mxu0
      %v575 = vadd.f32 0.0, %v574
      %576 = vmatmul.f32.gmra.mxu0 %v461
      %v577 = vpop.f32.mrf.mxu0
      %v578 = vadd.f32 0.0, %v577
      %579 = vmatmul.f32.gmra.mxu0 %v464
      %v580 = vpop.f32.mrf.mxu0
      %v581 = vadd.f32 0.0, %v580
      %582 = vmatmul.f32.gmra.mxu0 %v467
      %v583 = vpop.f32.mrf.mxu0
      %v584 = vadd.f32 0.0, %v583
      %585 = vmatmul.f32.gmra.mxu0 %v470
      %v586 = vpop.f32.mrf.mxu0
      %v587 = vadd.f32 0.0, %v586
      %588 = vmatmul.f32.gmra.mxu0 %v473
      %v589 = vpop.f32.mrf.mxu0
      %v590 = vadd.f32 0.0, %v589
      %591 = vmatmul.f32.gmra.mxu0 %v476
      %v592 = vpop.f32.mrf.mxu0
      %v593 = vadd.f32 0.0, %v592
      %594 = vmatmul.f32.gmra.mxu0 %v479
      %v595 = vpop.f32.mrf.mxu0
      %v596 = vadd.f32 0.0, %v595
      %597 = vmatmul.f32.gmra.mxu0 %v482
      %v598 = vpop.f32.mrf.mxu0
      %v599 = vadd.f32 0.0, %v598
      %600 = vmatmul.f32.gmra.mxu0 %v485
      %v601 = vpop.f32.mrf.mxu0
      %v602 = vadd.f32 0.0, %v601
      %603 = vmatmul.f32.gmra.mxu0 %v488
      %v604 = vpop.f32.mrf.mxu0
      %v605 = vadd.f32 0.0, %v604
      %606 = vmatmul.f32.gmra.mxu0 %v491
      %v607 = vpop.f32.mrf.mxu0
      %v608 = vadd.f32 0.0, %v607
      %609 = vmatmul.f32.gmra.mxu0 %v494
      %v610 = vpop.f32.mrf.mxu0
      %v611 = vadd.f32 0.0, %v610
      %612 = vmatmul.f32.gmra.mxu0 %v497
      %v613 = vpop.f32.mrf.mxu0
      %v614 = vadd.f32 0.0, %v613
      %615 = vmatmul.f32.gmra.mxu0 %v500
      %v616 = vpop.f32.mrf.mxu0
      %v617 = vadd.f32 0.0, %v616
      %618 = vmatmul.f32.gmra.mxu0 %v503
      %v619 = vpop.f32.mrf.mxu0
      %v620 = vadd.f32 0.0, %v619
      %621 = vmatmul.f32.gmra.mxu0 %v506
      %v622 = vpop.f32.mrf.mxu0
      %v623 = vadd.f32 0.0, %v622
      %624 = vmatmul.f32.gmra.mxu0 %v509
      %v625 = vpop.f32.mrf.mxu0
      %v626 = vadd.f32 0.0, %v625
      %627 = vmatmul.f32.gmra.mxu0 %v512
      %v628 = vpop.f32.mrf.mxu0
      %v629 = vadd.f32 0.0, %v628
      %630 = vmatmul.f32.gmra.mxu0 %v515
      %v631 = vpop.f32.mrf.mxu0
      %v632 = vadd.f32 0.0, %v631
      %633 = vmatmul.f32.gmra.mxu0 %v518
      %v634 = vpop.f32.mrf.mxu0
      %v635 = vadd.f32 0.0, %v634
      %636 = vmatmul.f32.gmra.mxu0 %v521
      %v637 = vpop.f32.mrf.mxu0
      %v638 = vadd.f32 0.0, %v637
      %639 = vmatmul.f32.gmra.mxu0 %v524
      %v640 = vpop.f32.mrf.mxu0
      %v641 = vadd.f32 0.0, %v640
      %642 = vdwg.mxu0
      %v644 = vsel %vm225, %v363, 0
      %v647 = vsel %vm225, %v364, 0
      %v650 = vsel %vm225, %v365, 0
      %v653 = vsel %vm225, %v366, 0
      %v656 = vsel %vm225, %v367, 0
      %v659 = vsel %vm225, %v368, 0
      %v662 = vsel %vm225, %v369, 0
      %v665 = vsel %vm225, %v370, 0
      %v668 = vsel %vm225, %v371, 0
      %v671 = vsel %vm225, %v372, 0
      %v674 = vsel %vm225, %v373, 0
      %v677 = vsel %vm225, %v374, 0
      %v680 = vsel %vm225, %v375, 0
      %v683 = vsel %vm225, %v376, 0
      %v686 = vsel %vm225, %v377, 0
      %v689 = vsel %vm225, %v378, 0
      %v692 = vsel %vm225, %v379, 0
      %v695 = vsel %vm225, %v380, 0
      %v698 = vsel %vm225, %v381, 0
      %v701 = vsel %vm225, %v382, 0
      %v704 = vsel %vm225, %v383, 0
      %v707 = vsel %vm225, %v384, 0
      %v710 = vsel %vm225, %v385, 0
      %v713 = vsel %vm225, %v386, 0
      %v716 = vsel %vm225, %v387, 0
      %v719 = vsel %vm225, %v388, 0
      %v722 = vsel %vm225, %v389, 0
      %v725 = vsel %vm225, %v390, 0
      %v728 = vsel %vm225, %v391, 0
      %v731 = vsel %vm225, %v392, 0
      %v734 = vsel %vm225, %v393, 0
      %v737 = vsel %vm225, %v394, 0
      %v740 = vsel %vm526, %v395, 0
      %742 = vmatpush.msra.mxu0 0.0
      %743 = vmatpush.msra.mxu0 0.0
      %744 = vmatpush.msra.mxu0 0.0
      %745 = vmatpush.msra.mxu0 0.0
      %746 = vmatpush.msra.mxu0 0.0
      %747 = vmatpush.msra.mxu0 0.0
      %748 = vmatpush.msra.mxu0 0.0
      %749 = vmatpush.msra.mxu0 0.0
      %750 = vmatpush.msra.mxu0 0.0
      %751 = vmatpush.msra.mxu0 0.0
      %752 = vmatpush.msra.mxu0 0.0
      %753 = vmatpush.msra.mxu0 0.0
      %754 = vmatpush.msra.mxu0 0.0
      %755 = vmatpush.msra.mxu0 0.0
      %756 = vmatpush.msra.mxu0 0.0
      %757 = vmatpush.msra.mxu0 %v740
      %758 = vmatmul.f32.gmra.mxu0 %v644
      %v759 = vpop.f32.mrf.mxu0
      %v760 = vadd.f32 %v548, %v759
      %761 = vmatmul.f32.gmra.mxu0 %v647
      %v762 = vpop.f32.mrf.mxu0
      %v763 = vadd.f32 %v551, %v762
      %764 = vmatmul.f32.gmra.mxu0 %v650
      %v765 = vpop.f32.mrf.mxu0
      %v766 = vadd.f32 %v554, %v765
      %767 = vmatmul.f32.gmra.mxu0 %v653
      %v768 = vpop.f32.mrf.mxu0
      %v769 = vadd.f32 %v557, %v768
      %770 = vmatmul.f32.gmra.mxu0 %v656
      %v771 = vpop.f32.mrf.mxu0
      %v772 = vadd.f32 %v560, %v771
      %773 = vmatmul.f32.gmra.mxu0 %v659
      %v774 = vpop.f32.mrf.mxu0
      %v775 = vadd.f32 %v563, %v774
      %776 = vmatmul.f32.gmra.mxu0 %v662
      %v777 = vpop.f32.mrf.mxu0
      %v778 = vadd.f32 %v566, %v777
      %779 = vmatmul.f32.gmra.mxu0 %v665
      %v780 = vpop.f32.mrf.mxu0
      %v781 = vadd.f32 %v569, %v780
      %782 = vmatmul.f32.gmra.mxu0 %v668
      %v783 = vpop.f32.mrf.mxu0
      %v784 = vadd.f32 %v572, %v783
      %785 = vmatmul.f32.gmra.mxu0 %v671
      %v786 = vpop.f32.mrf.mxu0
      %v787 = vadd.f32 %v575, %v786
      %788 = vmatmul.f32.gmra.mxu0 %v674
      %v789 = vpop.f32.mrf.mxu0
      %v790 = vadd.f32 %v578, %v789
      %791 = vmatmul.f32.gmra.mxu0 %v677
      %v792 = vpop.f32.mrf.mxu0
      %v793 = vadd.f32 %v581, %v792
      %794 = vmatmul.f32.gmra.mxu0 %v680
      %v795 = vpop.f32.mrf.mxu0
      %v796 = vadd.f32 %v584, %v795
      %797 = vmatmul.f32.gmra.mxu0 %v683
      %v798 = vpop.f32.mrf.mxu0
      %v799 = vadd.f32 %v587, %v798
      %800 = vmatmul.f32.gmra.mxu0 %v686
      %v801 = vpop.f32.mrf.mxu0
      %v802 = vadd.f32 %v590, %v801
      %803 = vmatmul.f32.gmra.mxu0 %v689
      %v804 = vpop.f32.mrf.mxu0
      %v805 = vadd.f32 %v593, %v804
      %806 = vmatmul.f32.gmra.mxu0 %v692
      %v807 = vpop.f32.mrf.mxu0
      %v808 = vadd.f32 %v596, %v807
      %809 = vmatmul.f32.gmra.mxu0 %v695
      %v810 = vpop.f32.mrf.mxu0
      %v811 = vadd.f32 %v599, %v810
      %812 = vmatmul.f32.gmra.mxu0 %v698
      %v813 = vpop.f32.mrf.mxu0
      %v814 = vadd.f32 %v602, %v813
      %815 = vmatmul.f32.gmra.mxu0 %v701
      %v816 = vpop.f32.mrf.mxu0
      %v817 = vadd.f32 %v605, %v816
      %818 = vmatmul.f32.gmra.mxu0 %v704
      %v819 = vpop.f32.mrf.mxu0
      %v820 = vadd.f32 %v608, %v819
      %821 = vmatmul.f32.gmra.mxu0 %v707
      %v822 = vpop.f32.mrf.mxu0
      %v823 = vadd.f32 %v611, %v822
      %824 = vmatmul.f32.gmra.mxu0 %v710
      %v825 = vpop.f32.mrf.mxu0
      %v826 = vadd.f32 %v614, %v825
      %827 = vmatmul.f32.gmra.mxu0 %v713
      %v828 = vpop.f32.mrf.mxu0
      %v829 = vadd.f32 %v617, %v828
      %830 = vmatmul.f32.gmra.mxu0 %v716
      %v831 = vpop.f32.mrf.mxu0
      %v832 = vadd.f32 %v620, %v831
      %833 = vmatmul.f32.gmra.mxu0 %v719
      %v834 = vpop.f32.mrf.mxu0
      %v835 = vadd.f32 %v623, %v834
      %836 = vmatmul.f32.gmra.mxu0 %v722
      %v837 = vpop.f32.mrf.mxu0
      %v838 = vadd.f32 %v626, %v837
      %839 = vmatmul.f32.gmra.mxu0 %v725
      %v840 = vpop.f32.mrf.mxu0
      %v841 = vadd.f32 %v629, %v840
      %842 = vmatmul.f32.gmra.mxu0 %v728
      %v843 = vpop.f32.mrf.mxu0
      %v844 = vadd.f32 %v632, %v843
      %845 = vmatmul.f32.gmra.mxu0 %v731
      %v846 = vpop.f32.mrf.mxu0
      %v847 = vadd.f32 %v635, %v846
      %848 = vmatmul.f32.gmra.mxu0 %v734
      %v849 = vpop.f32.mrf.mxu0
      %v850 = vadd.f32 %v638, %v849
      %851 = vmatmul.f32.gmra.mxu0 %v737
      %v852 = vpop.f32.mrf.mxu0
      %v853 = vadd.f32 %v641, %v852
      %854 = vdwg.mxu0
      %v855 = vld [vmem:[#allocation2 + $0x9] sm:$0xff]
      %v856 = vld [vmem:[#allocation2 + $0x11] sm:$0xff]
      %v857 = vld [vmem:[#allocation2 + $0x29] sm:$0xff]
      %v858 = vld [vmem:[#allocation2 + $0x31] sm:$0xff]
      %v859 = vld [vmem:[#allocation2 + $0x49] sm:$0xff]
      %v860 = vld [vmem:[#allocation2 + $0x51] sm:$0xff]
      %v861 = vld [vmem:[#allocation2 + $0x69] sm:$0xff]
      %v862 = vld [vmem:[#allocation2 + $0x71] sm:$0xff]
      %v863 = vld [vmem:[#allocation2 + $0x89] sm:$0xff]
      %v864 = vld [vmem:[#allocation2 + $0x91] sm:$0xff]
      %v865 = vld [vmem:[#allocation2 + $0xa9] sm:$0xff]
      %v866 = vld [vmem:[#allocation2 + $0xb1] sm:$0xff]
      %v867 = vld [vmem:[#allocation2 + $0xc9] sm:$0xff]
      %v868 = vld [vmem:[#allocation2 + $0xd1] sm:$0xff]
      %v869 = vld [vmem:[#allocation2 + $0xe9] sm:$0xff]
      %v870 = vld [vmem:[#allocation2 + $0xf1] sm:$0xff]
      %v871 = vld [vmem:[#allocation2 + $0x109] sm:$0xff]
      %v872 = vld [vmem:[#allocation2 + $0x111] sm:$0xff]
      %v873 = vld [vmem:[#allocation2 + $0x129] sm:$0xff]
      %v874 = vld [vmem:[#allocation2 + $0x131] sm:$0xff]
      %v875 = vld [vmem:[#allocation2 + $0x149] sm:$0xff]
      %v876 = vld [vmem:[#allocation2 + $0x151] sm:$0xff]
      %v877 = vld [vmem:[#allocation2 + $0x169] sm:$0xff]
      %v878 = vld [vmem:[#allocation2 + $0x171] sm:$0xff]
      %v879 = vld [vmem:[#allocation2 + $0x189] sm:$0xff]
      %v880 = vld [vmem:[#allocation2 + $0x191] sm:$0xff]
      %v881 = vld [vmem:[#allocation2 + $0x1a9] sm:$0xff]
      %v882 = vld [vmem:[#allocation2 + $0x1b1] sm:$0xff]
      %v883 = vld [vmem:[#allocation2 + $0x1c9] sm:$0xff]
      %v884 = vld [vmem:[#allocation2 + $0x1d1] sm:$0xff]
      %v885 = vld [vmem:[#allocation2 + $0x1e9] sm:$0xff]
      %v886 = vld [vmem:[#allocation2 + $0x1f1] sm:$0xff]
      %s887 = scalar_lea.vmem %s1, 8
      %v888 = vld [vmem:[%s887] sm:$0xf]
      %v890 = vsel %vm225, %v855, 0
      %v893 = vsel %vm225, %v856, 0
      %v896 = vsel %vm225, %v857, 0
      %v899 = vsel %vm225, %v858, 0
      %v902 = vsel %vm225, %v859, 0
      %v905 = vsel %vm225, %v860, 0
      %v908 = vsel %vm225, %v861, 0
      %v911 = vsel %vm225, %v862, 0
      %v914 = vsel %vm225, %v863, 0
      %v917 = vsel %vm225, %v864, 0
      %v920 = vsel %vm225, %v865, 0
      %v923 = vsel %vm225, %v866, 0
      %v926 = vsel %vm225, %v867, 0
      %v929 = vsel %vm225, %v868, 0
      %v932 = vsel %vm225, %v869, 0
      %v935 = vsel %vm225, %v870, 0
      %v938 = vsel %vm225, %v871, 0
      %v941 = vsel %vm225, %v872, 0
      %v944 = vsel %vm225, %v873, 0
      %v947 = vsel %vm225, %v874, 0
      %v950 = vsel %vm225, %v875, 0
      %v953 = vsel %vm225, %v876, 0
      %v956 = vsel %vm225, %v877, 0
      %v959 = vsel %vm225, %v878, 0
      %v962 = vsel %vm225, %v879, 0
      %v965 = vsel %vm225, %v880, 0
      %v968 = vsel %vm225, %v881, 0
      %v971 = vsel %vm225, %v882, 0
      %v974 = vsel %vm225, %v883, 0
      %v977 = vsel %vm225, %v884, 0
      %v980 = vsel %vm225, %v885, 0
      %v983 = vsel %vm225, %v886, 0
      %v986 = vsel %vm526, %v888, 0
      %988 = vmatpush.msra.mxu0 0.0
      %989 = vmatpush.msra.mxu0 0.0
      %990 = vmatpush.msra.mxu0 0.0
      %991 = vmatpush.msra.mxu0 0.0
      %992 = vmatpush.msra.mxu0 0.0
      %993 = vmatpush.msra.mxu0 0.0
      %994 = vmatpush.msra.mxu0 0.0
      %995 = vmatpush.msra.mxu0 0.0
      %996 = vmatpush.msra.mxu0 0.0
      %997 = vmatpush.msra.mxu0 0.0
      %998 = vmatpush.msra.mxu0 0.0
      %999 = vmatpush.msra.mxu0 0.0
      %1000 = vmatpush.msra.mxu0 0.0
      %1001 = vmatpush.msra.mxu0 0.0
      %1002 = vmatpush.msra.mxu0 0.0
      %1003 = vmatpush.msra.mxu0 %v986
      %1004 = vmatmul.f32.gmra.mxu0 %v890
      %v1005 = vpop.f32.mrf.mxu0
      %v1006 = vadd.f32 0.0, %v1005
      %1007 = vmatmul.f32.gmra.mxu0 %v893
      %v1008 = vpop.f32.mrf.mxu0
      %v1009 = vadd.f32 0.0, %v1008
      %1010 = vmatmul.f32.gmra.mxu0 %v896
      %v1011 = vpop.f32.mrf.mxu0
      %v1012 = vadd.f32 0.0, %v1011
      %1013 = vmatmul.f32.gmra.mxu0 %v899
      %v1014 = vpop.f32.mrf.mxu0
      %v1015 = vadd.f32 0.0, %v1014
      %1016 = vmatmul.f32.gmra.mxu0 %v902
      %v1017 = vpop.f32.mrf.mxu0
      %v1018 = vadd.f32 0.0, %v1017
      %1019 = vmatmul.f32.gmra.mxu0 %v905
      %v1020 = vpop.f32.mrf.mxu0
      %v1021 = vadd.f32 0.0, %v1020
      %1022 = vmatmul.f32.gmra.mxu0 %v908
      %v1023 = vpop.f32.mrf.mxu0
      %v1024 = vadd.f32 0.0, %v1023
      %1025 = vmatmul.f32.gmra.mxu0 %v911
      %v1026 = vpop.f32.mrf.mxu0
      %v1027 = vadd.f32 0.0, %v1026
      %1028 = vmatmul.f32.gmra.mxu0 %v914
      %v1029 = vpop.f32.mrf.mxu0
      %v1030 = vadd.f32 0.0, %v1029
      %1031 = vmatmul.f32.gmra.mxu0 %v917
      %v1032 = vpop.f32.mrf.mxu0
      %v1033 = vadd.f32 0.0, %v1032
      %1034 = vmatmul.f32.gmra.mxu0 %v920
      %v1035 = vpop.f32.mrf.mxu0
      %v1036 = vadd.f32 0.0, %v1035
      %1037 = vmatmul.f32.gmra.mxu0 %v923
      %v1038 = vpop.f32.mrf.mxu0
      %v1039 = vadd.f32 0.0, %v1038
      %1040 = vmatmul.f32.gmra.mxu0 %v926
      %v1041 = vpop.f32.mrf.mxu0
      %v1042 = vadd.f32 0.0, %v1041
      %1043 = vmatmul.f32.gmra.mxu0 %v929
      %v1044 = vpop.f32.mrf.mxu0
      %v1045 = vadd.f32 0.0, %v1044
      %1046 = vmatmul.f32.gmra.mxu0 %v932
      %v1047 = vpop.f32.mrf.mxu0
      %v1048 = vadd.f32 0.0, %v1047
      %1049 = vmatmul.f32.gmra.mxu0 %v935
      %v1050 = vpop.f32.mrf.mxu0
      %v1051 = vadd.f32 0.0, %v1050
      %1052 = vmatmul.f32.gmra.mxu0 %v938
      %v1053 = vpop.f32.mrf.mxu0
      %v1054 = vadd.f32 0.0, %v1053
      %1055 = vmatmul.f32.gmra.mxu0 %v941
      %v1056 = vpop.f32.mrf.mxu0
      %v1057 = vadd.f32 0.0, %v1056
      %1058 = vmatmul.f32.gmra.mxu0 %v944
      %v1059 = vpop.f32.mrf.mxu0
      %v1060 = vadd.f32 0.0, %v1059
      %1061 = vmatmul.f32.gmra.mxu0 %v947
      %v1062 = vpop.f32.mrf.mxu0
      %v1063 = vadd.f32 0.0, %v1062
      %1064 = vmatmul.f32.gmra.mxu0 %v950
      %v1065 = vpop.f32.mrf.mxu0
      %v1066 = vadd.f32 0.0, %v1065
      %1067 = vmatmul.f32.gmra.mxu0 %v953
      %v1068 = vpop.f32.mrf.mxu0
      %v1069 = vadd.f32 0.0, %v1068
      %1070 = vmatmul.f32.gmra.mxu0 %v956
      %v1071 = vpop.f32.mrf.mxu0
      %v1072 = vadd.f32 0.0, %v1071
      %1073 = vmatmul.f32.gmra.mxu0 %v959
      %v1074 = vpop.f32.mrf.mxu0
      %v1075 = vadd.f32 0.0, %v1074
      %1076 = vmatmul.f32.gmra.mxu0 %v962
      %v1077 = vpop.f32.mrf.mxu0
      %v1078 = vadd.f32 0.0, %v1077
      %1079 = vmatmul.f32.gmra.mxu0 %v965
      %v1080 = vpop.f32.mrf.mxu0
      %v1081 = vadd.f32 0.0, %v1080
      %1082 = vmatmul.f32.gmra.mxu0 %v968
      %v1083 = vpop.f32.mrf.mxu0
      %v1084 = vadd.f32 0.0, %v1083
      %1085 = vmatmul.f32.gmra.mxu0 %v971
      %v1086 = vpop.f32.mrf.mxu0
      %v1087 = vadd.f32 0.0, %v1086
      %1088 = vmatmul.f32.gmra.mxu0 %v974
      %v1089 = vpop.f32.mrf.mxu0
      %v1090 = vadd.f32 0.0, %v1089
      %1091 = vmatmul.f32.gmra.mxu0 %v977
      %v1092 = vpop.f32.mrf.mxu0
      %v1093 = vadd.f32 0.0, %v1092
      %1094 = vmatmul.f32.gmra.mxu0 %v980
      %v1095 = vpop.f32.mrf.mxu0
      %v1096 = vadd.f32 0.0, %v1095
      %1097 = vmatmul.f32.gmra.mxu0 %v983
      %v1098 = vpop.f32.mrf.mxu0
      %v1099 = vadd.f32 0.0, %v1098
      %1100 = vdwg.mxu0
      %v1101 = vadd.f32 %v760, %v1006
      %v1102 = vadd.f32 %v763, %v1009
      %v1103 = vadd.f32 %v766, %v1012
      %v1104 = vadd.f32 %v769, %v1015
      %v1105 = vadd.f32 %v772, %v1018
      %v1106 = vadd.f32 %v775, %v1021
      %v1107 = vadd.f32 %v778, %v1024
      %v1108 = vadd.f32 %v781, %v1027
      %v1109 = vadd.f32 %v784, %v1030
      %v1110 = vadd.f32 %v787, %v1033
      %v1111 = vadd.f32 %v790, %v1036
      %v1112 = vadd.f32 %v793, %v1039
      %v1113 = vadd.f32 %v796, %v1042
      %v1114 = vadd.f32 %v799, %v1045
      %v1115 = vadd.f32 %v802, %v1048
      %v1116 = vadd.f32 %v805, %v1051
      %v1117 = vadd.f32 %v808, %v1054
      %v1118 = vadd.f32 %v811, %v1057
      %v1119 = vadd.f32 %v814, %v1060
      %v1120 = vadd.f32 %v817, %v1063
      %v1121 = vadd.f32 %v820, %v1066
      %v1122 = vadd.f32 %v823, %v1069
      %v1123 = vadd.f32 %v826, %v1072
      %v1124 = vadd.f32 %v829, %v1075
      %v1125 = vadd.f32 %v832, %v1078
      %v1126 = vadd.f32 %v835, %v1081
      %v1127 = vadd.f32 %v838, %v1084
      %v1128 = vadd.f32 %v841, %v1087
      %v1129 = vadd.f32 %v844, %v1090
      %v1130 = vadd.f32 %v847, %v1093
      %v1131 = vadd.f32 %v850, %v1096
      %v1132 = vadd.f32 %v853, %v1099
      %v1133 = vld [vmem:[%s330 + $0x7] sm:$0xff]
      %v1134 = vld [vmem:[%s330 + $0xf] sm:$0xff]
      %v1135 = vld [vmem:[%s330 + $0x27] sm:$0xff]
      %v1136 = vld [vmem:[%s330 + $0x2f] sm:$0xff]
      %v1137 = vld [vmem:[%s330 + $0x47] sm:$0xff]
      %v1138 = vld [vmem:[%s330 + $0x4f] sm:$0xff]
      %v1139 = vld [vmem:[%s330 + $0x67] sm:$0xff]
      %v1140 = vld [vmem:[%s330 + $0x6f] sm:$0xff]
      %v1141 = vld [vmem:[%s330 + $0x87] sm:$0xff]
      %v1142 = vld [vmem:[%s330 + $0x8f] sm:$0xff]
      %v1143 = vld [vmem:[%s330 + $0xa7] sm:$0xff]
      %v1144 = vld [vmem:[%s330 + $0xaf] sm:$0xff]
      %v1145 = vld [vmem:[%s330 + $0xc7] sm:$0xff]
      %v1146 = vld [vmem:[%s330 + $0xcf] sm:$0xff]
      %v1147 = vld [vmem:[%s330 + $0xe7] sm:$0xff]
      %v1148 = vld [vmem:[%s330 + $0xef] sm:$0xff]
      %v1149 = vld [vmem:[%s330 + $0x107] sm:$0xff]
      %v1150 = vld [vmem:[%s330 + $0x10f] sm:$0xff]
      %v1151 = vld [vmem:[%s330 + $0x127] sm:$0xff]
      %v1152 = vld [vmem:[%s330 + $0x12f] sm:$0xff]
      %v1153 = vld [vmem:[%s330 + $0x147] sm:$0xff]
      %v1154 = vld [vmem:[%s330 + $0x14f] sm:$0xff]
      %v1155 = vld [vmem:[%s330 + $0x167] sm:$0xff]
      %v1156 = vld [vmem:[%s330 + $0x16f] sm:$0xff]
      %v1157 = vld [vmem:[%s330 + $0x187] sm:$0xff]
      %v1158 = vld [vmem:[%s330 + $0x18f] sm:$0xff]
      %v1159 = vld [vmem:[%s330 + $0x1a7] sm:$0xff]
      %v1160 = vld [vmem:[%s330 + $0x1af] sm:$0xff]
      %v1161 = vld [vmem:[%s330 + $0x1c7] sm:$0xff]
      %v1162 = vld [vmem:[%s330 + $0x1cf] sm:$0xff]
      %v1163 = vld [vmem:[%s330 + $0x1e7] sm:$0xff]
      %v1164 = vld [vmem:[%s330 + $0x1ef] sm:$0xff]
      %s1165 = scalar_lea.vmem %s1, 12
      %v1166 = vld [vmem:[%s1165] sm:$0xf]
      %v1168 = vsel %vm225, %v1133, 0
      %v1171 = vsel %vm225, %v1134, 0
      %v1174 = vsel %vm225, %v1135, 0
      %v1177 = vsel %vm225, %v1136, 0
      %v1180 = vsel %vm225, %v1137, 0
      %v1183 = vsel %vm225, %v1138, 0
      %v1186 = vsel %vm225, %v1139, 0
      %v1189 = vsel %vm225, %v1140, 0
      %v1192 = vsel %vm225, %v1141, 0
      %v1195 = vsel %vm225, %v1142, 0
      %v1198 = vsel %vm225, %v1143, 0
      %v1201 = vsel %vm225, %v1144, 0
      %v1204 = vsel %vm225, %v1145, 0
      %v1207 = vsel %vm225, %v1146, 0
      %v1210 = vsel %vm225, %v1147, 0
      %v1213 = vsel %vm225, %v1148, 0
      %v1216 = vsel %vm225, %v1149, 0
      %v1219 = vsel %vm225, %v1150, 0
      %v1222 = vsel %vm225, %v1151, 0
      %v1225 = vsel %vm225, %v1152, 0
      %v1228 = vsel %vm225, %v1153, 0
      %v1231 = vsel %vm225, %v1154, 0
      %v1234 = vsel %vm225, %v1155, 0
      %v1237 = vsel %vm225, %v1156, 0
      %v1240 = vsel %vm225, %v1157, 0
      %v1243 = vsel %vm225, %v1158, 0
      %v1246 = vsel %vm225, %v1159, 0
      %v1249 = vsel %vm225, %v1160, 0
      %v1252 = vsel %vm225, %v1161, 0
      %v1255 = vsel %vm225, %v1162, 0
      %v1258 = vsel %vm225, %v1163, 0
      %v1261 = vsel %vm225, %v1164, 0
      %v1264 = vsel %vm526, %v1166, 0
      %1266 = vmatpush.msra.mxu0 0.0
      %1267 = vmatpush.msra.mxu0 0.0
      %1268 = vmatpush.msra.mxu0 0.0
      %1269 = vmatpush.msra.mxu0 0.0
      %1270 = vmatpush.msra.mxu0 0.0
      %1271 = vmatpush.msra.mxu0 0.0
      %1272 = vmatpush.msra.mxu0 0.0
      %1273 = vmatpush.msra.mxu0 0.0
      %1274 = vmatpush.msra.mxu0 0.0
      %1275 = vmatpush.msra.mxu0 0.0
      %1276 = vmatpush.msra.mxu0 0.0
      %1277 = vmatpush.msra.mxu0 0.0
      %1278 = vmatpush.msra.mxu0 0.0
      %1279 = vmatpush.msra.mxu0 0.0
      %1280 = vmatpush.msra.mxu0 0.0
      %1281 = vmatpush.msra.mxu0 %v1264
      %1282 = vmatmul.f32.gmra.mxu0 %v1168
      %v1283 = vpop.f32.mrf.mxu0
      %v1284 = vadd.f32 0.0, %v1283
      %1285 = vmatmul.f32.gmra.mxu0 %v1171
      %v1286 = vpop.f32.mrf.mxu0
      %v1287 = vadd.f32 0.0, %v1286
      %1288 = vmatmul.f32.gmra.mxu0 %v1174
      %v1289 = vpop.f32.mrf.mxu0
      %v1290 = vadd.f32 0.0, %v1289
      %1291 = vmatmul.f32.gmra.mxu0 %v1177
      %v1292 = vpop.f32.mrf.mxu0
      %v1293 = vadd.f32 0.0, %v1292
      %1294 = vmatmul.f32.gmra.mxu0 %v1180
      %v1295 = vpop.f32.mrf.mxu0
      %v1296 = vadd.f32 0.0, %v1295
      %1297 = vmatmul.f32.gmra.mxu0 %v1183
      %v1298 = vpop.f32.mrf.mxu0
      %v1299 = vadd.f32 0.0, %v1298
      %1300 = vmatmul.f32.gmra.mxu0 %v1186
      %v1301 = vpop.f32.mrf.mxu0
      %v1302 = vadd.f32 0.0, %v1301
      %1303 = vmatmul.f32.gmra.mxu0 %v1189
      %v1304 = vpop.f32.mrf.mxu0
      %v1305 = vadd.f32 0.0, %v1304
      %1306 = vmatmul.f32.gmra.mxu0 %v1192
      %v1307 = vpop.f32.mrf.mxu0
      %v1308 = vadd.f32 0.0, %v1307
      %1309 = vmatmul.f32.gmra.mxu0 %v1195
      %v1310 = vpop.f32.mrf.mxu0
      %v1311 = vadd.f32 0.0, %v1310
      %1312 = vmatmul.f32.gmra.mxu0 %v1198
      %v1313 = vpop.f32.mrf.mxu0
      %v1314 = vadd.f32 0.0, %v1313
      %1315 = vmatmul.f32.gmra.mxu0 %v1201
      %v1316 = vpop.f32.mrf.mxu0
      %v1317 = vadd.f32 0.0, %v1316
      %1318 = vmatmul.f32.gmra.mxu0 %v1204
      %v1319 = vpop.f32.mrf.mxu0
      %v1320 = vadd.f32 0.0, %v1319
      %1321 = vmatmul.f32.gmra.mxu0 %v1207
      %v1322 = vpop.f32.mrf.mxu0
      %v1323 = vadd.f32 0.0, %v1322
      %1324 = vmatmul.f32.gmra.mxu0 %v1210
      %v1325 = vpop.f32.mrf.mxu0
      %v1326 = vadd.f32 0.0, %v1325
      %1327 = vmatmul.f32.gmra.mxu0 %v1213
      %v1328 = vpop.f32.mrf.mxu0
      %v1329 = vadd.f32 0.0, %v1328
      %1330 = vmatmul.f32.gmra.mxu0 %v1216
      %v1331 = vpop.f32.mrf.mxu0
      %v1332 = vadd.f32 0.0, %v1331
      %1333 = vmatmul.f32.gmra.mxu0 %v1219
      %v1334 = vpop.f32.mrf.mxu0
      %v1335 = vadd.f32 0.0, %v1334
      %1336 = vmatmul.f32.gmra.mxu0 %v1222
      %v1337 = vpop.f32.mrf.mxu0
      %v1338 = vadd.f32 0.0, %v1337
      %1339 = vmatmul.f32.gmra.mxu0 %v1225
      %v1340 = vpop.f32.mrf.mxu0
      %v1341 = vadd.f32 0.0, %v1340
      %1342 = vmatmul.f32.gmra.mxu0 %v1228
      %v1343 = vpop.f32.mrf.mxu0
      %v1344 = vadd.f32 0.0, %v1343
      %1345 = vmatmul.f32.gmra.mxu0 %v1231
      %v1346 = vpop.f32.mrf.mxu0
      %v1347 = vadd.f32 0.0, %v1346
      %1348 = vmatmul.f32.gmra.mxu0 %v1234
      %v1349 = vpop.f32.mrf.mxu0
      %v1350 = vadd.f32 0.0, %v1349
      %1351 = vmatmul.f32.gmra.mxu0 %v1237
      %v1352 = vpop.f32.mrf.mxu0
      %v1353 = vadd.f32 0.0, %v1352
      %1354 = vmatmul.f32.gmra.mxu0 %v1240
      %v1355 = vpop.f32.mrf.mxu0
      %v1356 = vadd.f32 0.0, %v1355
      %1357 = vmatmul.f32.gmra.mxu0 %v1243
      %v1358 = vpop.f32.mrf.mxu0
      %v1359 = vadd.f32 0.0, %v1358
      %1360 = vmatmul.f32.gmra.mxu0 %v1246
      %v1361 = vpop.f32.mrf.mxu0
      %v1362 = vadd.f32 0.0, %v1361
      %1363 = vmatmul.f32.gmra.mxu0 %v1249
      %v1364 = vpop.f32.mrf.mxu0
      %v1365 = vadd.f32 0.0, %v1364
      %1366 = vmatmul.f32.gmra.mxu0 %v1252
      %v1367 = vpop.f32.mrf.mxu0
      %v1368 = vadd.f32 0.0, %v1367
      %1369 = vmatmul.f32.gmra.mxu0 %v1255
      %v1370 = vpop.f32.mrf.mxu0
      %v1371 = vadd.f32 0.0, %v1370
      %1372 = vmatmul.f32.gmra.mxu0 %v1258
      %v1373 = vpop.f32.mrf.mxu0
      %v1374 = vadd.f32 0.0, %v1373
      %1375 = vmatmul.f32.gmra.mxu0 %v1261
      %v1376 = vpop.f32.mrf.mxu0
      %v1377 = vadd.f32 0.0, %v1376
      %1378 = vdwg.mxu0
      %v1379 = vadd.f32 %v1101, %v1284
      %v1380 = vadd.f32 %v1102, %v1287
      %v1381 = vadd.f32 %v1103, %v1290
      %v1382 = vadd.f32 %v1104, %v1293
      %v1383 = vadd.f32 %v1105, %v1296
      %v1384 = vadd.f32 %v1106, %v1299
      %v1385 = vadd.f32 %v1107, %v1302
      %v1386 = vadd.f32 %v1108, %v1305
      %v1387 = vadd.f32 %v1109, %v1308
      %v1388 = vadd.f32 %v1110, %v1311
      %v1389 = vadd.f32 %v1111, %v1314
      %v1390 = vadd.f32 %v1112, %v1317
      %v1391 = vadd.f32 %v1113, %v1320
      %v1392 = vadd.f32 %v1114, %v1323
      %v1393 = vadd.f32 %v1115, %v1326
      %v1394 = vadd.f32 %v1116, %v1329
      %v1395 = vadd.f32 %v1117, %v1332
      %v1396 = vadd.f32 %v1118, %v1335
      %v1397 = vadd.f32 %v1119, %v1338
      %v1398 = vadd.f32 %v1120, %v1341
      %v1399 = vadd.f32 %v1121, %v1344
      %v1400 = vadd.f32 %v1122, %v1347
      %v1401 = vadd.f32 %v1123, %v1350
      %v1402 = vadd.f32 %v1124, %v1353
      %v1403 = vadd.f32 %v1125, %v1356
      %v1404 = vadd.f32 %v1126, %v1359
      %v1405 = vadd.f32 %v1127, %v1362
      %v1406 = vadd.f32 %v1128, %v1365
      %v1407 = vadd.f32 %v1129, %v1368
      %v1408 = vadd.f32 %v1130, %v1371
      %v1409 = vadd.f32 %v1131, %v1374
      %v1410 = vadd.f32 %v1132, %v1377
      %v1411 = vld [vmem:[%s330 + $0x8] sm:$0xff]
      %v1412 = vld [vmem:[%s330 + $0x10] sm:$0xff]
      %v1413 = vld [vmem:[%s330 + $0x28] sm:$0xff]
      %v1414 = vld [vmem:[%s330 + $0x30] sm:$0xff]
      %v1415 = vld [vmem:[%s330 + $0x48] sm:$0xff]
      %v1416 = vld [vmem:[%s330 + $0x50] sm:$0xff]
      %v1417 = vld [vmem:[%s330 + $0x68] sm:$0xff]
      %v1418 = vld [vmem:[%s330 + $0x70] sm:$0xff]
      %v1419 = vld [vmem:[%s330 + $0x88] sm:$0xff]
      %v1420 = vld [vmem:[%s330 + $0x90] sm:$0xff]
      %v1421 = vld [vmem:[%s330 + $0xa8] sm:$0xff]
      %v1422 = vld [vmem:[%s330 + $0xb0] sm:$0xff]
      %v1423 = vld [vmem:[%s330 + $0xc8] sm:$0xff]
      %v1424 = vld [vmem:[%s330 + $0xd0] sm:$0xff]
      %v1425 = vld [vmem:[%s330 + $0xe8] sm:$0xff]
      %v1426 = vld [vmem:[%s330 + $0xf0] sm:$0xff]
      %v1427 = vld [vmem:[%s330 + $0x108] sm:$0xff]
      %v1428 = vld [vmem:[%s330 + $0x110] sm:$0xff]
      %v1429 = vld [vmem:[%s330 + $0x128] sm:$0xff]
      %v1430 = vld [vmem:[%s330 + $0x130] sm:$0xff]
      %v1431 = vld [vmem:[%s330 + $0x148] sm:$0xff]
      %v1432 = vld [vmem:[%s330 + $0x150] sm:$0xff]
      %v1433 = vld [vmem:[%s330 + $0x168] sm:$0xff]
      %v1434 = vld [vmem:[%s330 + $0x170] sm:$0xff]
      %v1435 = vld [vmem:[%s330 + $0x188] sm:$0xff]
      %v1436 = vld [vmem:[%s330 + $0x190] sm:$0xff]
      %v1437 = vld [vmem:[%s330 + $0x1a8] sm:$0xff]
      %v1438 = vld [vmem:[%s330 + $0x1b0] sm:$0xff]
      %v1439 = vld [vmem:[%s330 + $0x1c8] sm:$0xff]
      %v1440 = vld [vmem:[%s330 + $0x1d0] sm:$0xff]
      %v1441 = vld [vmem:[%s330 + $0x1e8] sm:$0xff]
      %v1442 = vld [vmem:[%s330 + $0x1f0] sm:$0xff]
      %s1443 = scalar_lea.vmem %s1, 16
      %v1444 = vld [vmem:[%s1443] sm:$0xf]
      %v1446 = vsel %vm225, %v1411, 0
      %v1449 = vsel %vm225, %v1412, 0
      %v1452 = vsel %vm225, %v1413, 0
      %v1455 = vsel %vm225, %v1414, 0
      %v1458 = vsel %vm225, %v1415, 0
      %v1461 = vsel %vm225, %v1416, 0
      %v1464 = vsel %vm225, %v1417, 0
      %v1467 = vsel %vm225, %v1418, 0
      %v1470 = vsel %vm225, %v1419, 0
      %v1473 = vsel %vm225, %v1420, 0
      %v1476 = vsel %vm225, %v1421, 0
      %v1479 = vsel %vm225, %v1422, 0
      %v1482 = vsel %vm225, %v1423, 0
      %v1485 = vsel %vm225, %v1424, 0
      %v1488 = vsel %vm225, %v1425, 0
      %v1491 = vsel %vm225, %v1426, 0
      %v1494 = vsel %vm225, %v1427, 0
      %v1497 = vsel %vm225, %v1428, 0
      %v1500 = vsel %vm225, %v1429, 0
      %v1503 = vsel %vm225, %v1430, 0
      %v1506 = vsel %vm225, %v1431, 0
      %v1509 = vsel %vm225, %v1432, 0
      %v1512 = vsel %vm225, %v1433, 0
      %v1515 = vsel %vm225, %v1434, 0
      %v1518 = vsel %vm225, %v1435, 0
      %v1521 = vsel %vm225, %v1436, 0
      %v1524 = vsel %vm225, %v1437, 0
      %v1527 = vsel %vm225, %v1438, 0
      %v1530 = vsel %vm225, %v1439, 0
      %v1533 = vsel %vm225, %v1440, 0
      %v1536 = vsel %vm225, %v1441, 0
      %v1539 = vsel %vm225, %v1442, 0
      %v1542 = vsel %vm526, %v1444, 0
      %1544 = vmatpush.msra.mxu0 0.0
      %1545 = vmatpush.msra.mxu0 0.0
      %1546 = vmatpush.msra.mxu0 0.0
      %1547 = vmatpush.msra.mxu0 0.0
      %1548 = vmatpush.msra.mxu0 0.0
      %1549 = vmatpush.msra.mxu0 0.0
      %1550 = vmatpush.msra.mxu0 0.0
      %1551 = vmatpush.msra.mxu0 0.0
      %1552 = vmatpush.msra.mxu0 0.0
      %1553 = vmatpush.msra.mxu0 0.0
      %1554 = vmatpush.msra.mxu0 0.0
      %1555 = vmatpush.msra.mxu0 0.0
      %1556 = vmatpush.msra.mxu0 0.0
      %1557 = vmatpush.msra.mxu0 0.0
      %1558 = vmatpush.msra.mxu0 0.0
      %1559 = vmatpush.msra.mxu0 %v1542
      %1560 = vmatmul.f32.gmra.mxu0 %v1446
      %v1561 = vpop.f32.mrf.mxu0
      %v1562 = vadd.f32 0.0, %v1561
      %1563 = vmatmul.f32.gmra.mxu0 %v1449
      %v1564 = vpop.f32.mrf.mxu0
      %v1565 = vadd.f32 0.0, %v1564
      %1566 = vmatmul.f32.gmra.mxu0 %v1452
      %v1567 = vpop.f32.mrf.mxu0
      %v1568 = vadd.f32 0.0, %v1567
      %1569 = vmatmul.f32.gmra.mxu0 %v1455
      %v1570 = vpop.f32.mrf.mxu0
      %v1571 = vadd.f32 0.0, %v1570
      %1572 = vmatmul.f32.gmra.mxu0 %v1458
      %v1573 = vpop.f32.mrf.mxu0
      %v1574 = vadd.f32 0.0, %v1573
      %1575 = vmatmul.f32.gmra.mxu0 %v1461
      %v1576 = vpop.f32.mrf.mxu0
      %v1577 = vadd.f32 0.0, %v1576
      %1578 = vmatmul.f32.gmra.mxu0 %v1464
      %v1579 = vpop.f32.mrf.mxu0
      %v1580 = vadd.f32 0.0, %v1579
      %1581 = vmatmul.f32.gmra.mxu0 %v1467
      %v1582 = vpop.f32.mrf.mxu0
      %v1583 = vadd.f32 0.0, %v1582
      %1584 = vmatmul.f32.gmra.mxu0 %v1470
      %v1585 = vpop.f32.mrf.mxu0
      %v1586 = vadd.f32 0.0, %v1585
      %1587 = vmatmul.f32.gmra.mxu0 %v1473
      %v1588 = vpop.f32.mrf.mxu0
      %v1589 = vadd.f32 0.0, %v1588
      %1590 = vmatmul.f32.gmra.mxu0 %v1476
      %v1591 = vpop.f32.mrf.mxu0
      %v1592 = vadd.f32 0.0, %v1591
      %1593 = vmatmul.f32.gmra.mxu0 %v1479
      %v1594 = vpop.f32.mrf.mxu0
      %v1595 = vadd.f32 0.0, %v1594
      %1596 = vmatmul.f32.gmra.mxu0 %v1482
      %v1597 = vpop.f32.mrf.mxu0
      %v1598 = vadd.f32 0.0, %v1597
      %1599 = vmatmul.f32.gmra.mxu0 %v1485
      %v1600 = vpop.f32.mrf.mxu0
      %v1601 = vadd.f32 0.0, %v1600
      %1602 = vmatmul.f32.gmra.mxu0 %v1488
      %v1603 = vpop.f32.mrf.mxu0
      %v1604 = vadd.f32 0.0, %v1603
      %1605 = vmatmul.f32.gmra.mxu0 %v1491
      %v1606 = vpop.f32.mrf.mxu0
      %v1607 = vadd.f32 0.0, %v1606
      %1608 = vmatmul.f32.gmra.mxu0 %v1494
      %v1609 = vpop.f32.mrf.mxu0
      %v1610 = vadd.f32 0.0, %v1609
      %1611 = vmatmul.f32.gmra.mxu0 %v1497
      %v1612 = vpop.f32.mrf.mxu0
      %v1613 = vadd.f32 0.0, %v1612
      %1614 = vmatmul.f32.gmra.mxu0 %v1500
      %v1615 = vpop.f32.mrf.mxu0
      %v1616 = vadd.f32 0.0, %v1615
      %1617 = vmatmul.f32.gmra.mxu0 %v1503
      %v1618 = vpop.f32.mrf.mxu0
      %v1619 = vadd.f32 0.0, %v1618
      %1620 = vmatmul.f32.gmra.mxu0 %v1506
      %v1621 = vpop.f32.mrf.mxu0
      %v1622 = vadd.f32 0.0, %v1621
      %1623 = vmatmul.f32.gmra.mxu0 %v1509
      %v1624 = vpop.f32.mrf.mxu0
      %v1625 = vadd.f32 0.0, %v1624
      %1626 = vmatmul.f32.gmra.mxu0 %v1512
      %v1627 = vpop.f32.mrf.mxu0
      %v1628 = vadd.f32 0.0, %v1627
      %1629 = vmatmul.f32.gmra.mxu0 %v1515
      %v1630 = vpop.f32.mrf.mxu0
      %v1631 = vadd.f32 0.0, %v1630
      %1632 = vmatmul.f32.gmra.mxu0 %v1518
      %v1633 = vpop.f32.mrf.mxu0
      %v1634 = vadd.f32 0.0, %v1633
      %1635 = vmatmul.f32.gmra.mxu0 %v1521
      %v1636 = vpop.f32.mrf.mxu0
      %v1637 = vadd.f32 0.0, %v1636
      %1638 = vmatmul.f32.gmra.mxu0 %v1524
      %v1639 = vpop.f32.mrf.mxu0
      %v1640 = vadd.f32 0.0, %v1639
      %1641 = vmatmul.f32.gmra.mxu0 %v1527
      %v1642 = vpop.f32.mrf.mxu0
      %v1643 = vadd.f32 0.0, %v1642
      %1644 = vmatmul.f32.gmra.mxu0 %v1530
      %v1645 = vpop.f32.mrf.mxu0
      %v1646 = vadd.f32 0.0, %v1645
      %1647 = vmatmul.f32.gmra.mxu0 %v1533
      %v1648 = vpop.f32.mrf.mxu0
      %v1649 = vadd.f32 0.0, %v1648
      %1650 = vmatmul.f32.gmra.mxu0 %v1536
      %v1651 = vpop.f32.mrf.mxu0
      %v1652 = vadd.f32 0.0, %v1651
      %1653 = vmatmul.f32.gmra.mxu0 %v1539
      %v1654 = vpop.f32.mrf.mxu0
      %v1655 = vadd.f32 0.0, %v1654
      %1656 = vdwg.mxu0
      %v1657 = vadd.f32 %v1379, %v1562
      %v1658 = vadd.f32 %v1380, %v1565
      %v1659 = vadd.f32 %v1381, %v1568
      %v1660 = vadd.f32 %v1382, %v1571
      %v1661 = vadd.f32 %v1383, %v1574
      %v1662 = vadd.f32 %v1384, %v1577
      %v1663 = vadd.f32 %v1385, %v1580
      %v1664 = vadd.f32 %v1386, %v1583
      %v1665 = vadd.f32 %v1387, %v1586
      %v1666 = vadd.f32 %v1388, %v1589
      %v1667 = vadd.f32 %v1389, %v1592
      %v1668 = vadd.f32 %v1390, %v1595
      %v1669 = vadd.f32 %v1391, %v1598
      %v1670 = vadd.f32 %v1392, %v1601
      %v1671 = vadd.f32 %v1393, %v1604
      %v1672 = vadd.f32 %v1394, %v1607
      %v1673 = vadd.f32 %v1395, %v1610
      %v1674 = vadd.f32 %v1396, %v1613
      %v1675 = vadd.f32 %v1397, %v1616
      %v1676 = vadd.f32 %v1398, %v1619
      %v1677 = vadd.f32 %v1399, %v1622
      %v1678 = vadd.f32 %v1400, %v1625
      %v1679 = vadd.f32 %v1401, %v1628
      %v1680 = vadd.f32 %v1402, %v1631
      %v1681 = vadd.f32 %v1403, %v1634
      %v1682 = vadd.f32 %v1404, %v1637
      %v1683 = vadd.f32 %v1405, %v1640
      %v1684 = vadd.f32 %v1406, %v1643
      %v1685 = vadd.f32 %v1407, %v1646
      %v1686 = vadd.f32 %v1408, %v1649
      %v1687 = vadd.f32 %v1409, %v1652
      %v1688 = vadd.f32 %v1410, %v1655
      %v1689 = vld [vmem:[%s330 + $0x9] sm:$0xff]
      %v1690 = vld [vmem:[%s330 + $0x11] sm:$0xff]
      %v1691 = vld [vmem:[%s330 + $0x29] sm:$0xff]
      %v1692 = vld [vmem:[%s330 + $0x31] sm:$0xff]
      %v1693 = vld [vmem:[%s330 + $0x49] sm:$0xff]
      %v1694 = vld [vmem:[%s330 + $0x51] sm:$0xff]
      %v1695 = vld [vmem:[%s330 + $0x69] sm:$0xff]
      %v1696 = vld [vmem:[%s330 + $0x71] sm:$0xff]
      %v1697 = vld [vmem:[%s330 + $0x89] sm:$0xff]
      %v1698 = vld [vmem:[%s330 + $0x91] sm:$0xff]
      %v1699 = vld [vmem:[%s330 + $0xa9] sm:$0xff]
      %v1700 = vld [vmem:[%s330 + $0xb1] sm:$0xff]
      %v1701 = vld [vmem:[%s330 + $0xc9] sm:$0xff]
      %v1702 = vld [vmem:[%s330 + $0xd1] sm:$0xff]
      %v1703 = vld [vmem:[%s330 + $0xe9] sm:$0xff]
      %v1704 = vld [vmem:[%s330 + $0xf1] sm:$0xff]
      %v1705 = vld [vmem:[%s330 + $0x109] sm:$0xff]
      %v1706 = vld [vmem:[%s330 + $0x111] sm:$0xff]
      %v1707 = vld [vmem:[%s330 + $0x129] sm:$0xff]
      %v1708 = vld [vmem:[%s330 + $0x131] sm:$0xff]
      %v1709 = vld [vmem:[%s330 + $0x149] sm:$0xff]
      %v1710 = vld [vmem:[%s330 + $0x151] sm:$0xff]
      %v1711 = vld [vmem:[%s330 + $0x169] sm:$0xff]
      %v1712 = vld [vmem:[%s330 + $0x171] sm:$0xff]
      %v1713 = vld [vmem:[%s330 + $0x189] sm:$0xff]
      %v1714 = vld [vmem:[%s330 + $0x191] sm:$0xff]
      %v1715 = vld [vmem:[%s330 + $0x1a9] sm:$0xff]
      %v1716 = vld [vmem:[%s330 + $0x1b1] sm:$0xff]
      %v1717 = vld [vmem:[%s330 + $0x1c9] sm:$0xff]
      %v1718 = vld [vmem:[%s330 + $0x1d1] sm:$0xff]
      %v1719 = vld [vmem:[%s330 + $0x1e9] sm:$0xff]
      %v1720 = vld [vmem:[%s330 + $0x1f1] sm:$0xff]
      %s1721 = scalar_lea.vmem %s1, 20
      %v1722 = vld [vmem:[%s1721] sm:$0xf]
      %v1724 = vsel %vm225, %v1689, 0
      %v1727 = vsel %vm225, %v1690, 0
      %v1730 = vsel %vm225, %v1691, 0
      %v1733 = vsel %vm225, %v1692, 0
      %v1736 = vsel %vm225, %v1693, 0
      %v1739 = vsel %vm225, %v1694, 0
      %v1742 = vsel %vm225, %v1695, 0
      %v1745 = vsel %vm225, %v1696, 0
      %v1748 = vsel %vm225, %v1697, 0
      %v1751 = vsel %vm225, %v1698, 0
      %v1754 = vsel %vm225, %v1699, 0
      %v1757 = vsel %vm225, %v1700, 0
      %v1760 = vsel %vm225, %v1701, 0
      %v1763 = vsel %vm225, %v1702, 0
      %v1766 = vsel %vm225, %v1703, 0
      %v1769 = vsel %vm225, %v1704, 0
      %v1772 = vsel %vm225, %v1705, 0
      %v1775 = vsel %vm225, %v1706, 0
      %v1778 = vsel %vm225, %v1707, 0
      %v1781 = vsel %vm225, %v1708, 0
      %v1784 = vsel %vm225, %v1709, 0
      %v1787 = vsel %vm225, %v1710, 0
      %v1790 = vsel %vm225, %v1711, 0
      %v1793 = vsel %vm225, %v1712, 0
      %v1796 = vsel %vm225, %v1713, 0
      %v1799 = vsel %vm225, %v1714, 0
      %v1802 = vsel %vm225, %v1715, 0
      %v1805 = vsel %vm225, %v1716, 0
      %v1808 = vsel %vm225, %v1717, 0
      %v1811 = vsel %vm225, %v1718, 0
      %v1814 = vsel %vm225, %v1719, 0
      %v1817 = vsel %vm225, %v1720, 0
      %v1820 = vsel %vm526, %v1722, 0
      %1822 = vmatpush.msra.mxu0 0.0
      %1823 = vmatpush.msra.mxu0 0.0
      %1824 = vmatpush.msra.mxu0 0.0
      %1825 = vmatpush.msra.mxu0 0.0
      %1826 = vmatpush.msra.mxu0 0.0
      %1827 = vmatpush.msra.mxu0 0.0
      %1828 = vmatpush.msra.mxu0 0.0
      %1829 = vmatpush.msra.mxu0 0.0
      %1830 = vmatpush.msra.mxu0 0.0
      %1831 = vmatpush.msra.mxu0 0.0
      %1832 = vmatpush.msra.mxu0 0.0
      %1833 = vmatpush.msra.mxu0 0.0
      %1834 = vmatpush.msra.mxu0 0.0
      %1835 = vmatpush.msra.mxu0 0.0
      %1836 = vmatpush.msra.mxu0 0.0
      %1837 = vmatpush.msra.mxu0 %v1820
      %1838 = vmatmul.f32.gmra.mxu0 %v1724
      %v1839 = vpop.f32.mrf.mxu0
      %v1840 = vadd.f32 0.0, %v1839
      %1841 = vmatmul.f32.gmra.mxu0 %v1727
      %v1842 = vpop.f32.mrf.mxu0
      %v1843 = vadd.f32 0.0, %v1842
      %1844 = vmatmul.f32.gmra.mxu0 %v1730
      %v1845 = vpop.f32.mrf.mxu0
      %v1846 = vadd.f32 0.0, %v1845
      %1847 = vmatmul.f32.gmra.mxu0 %v1733
      %v1848 = vpop.f32.mrf.mxu0
      %v1849 = vadd.f32 0.0, %v1848
      %1850 = vmatmul.f32.gmra.mxu0 %v1736
      %v1851 = vpop.f32.mrf.mxu0
      %v1852 = vadd.f32 0.0, %v1851
      %1853 = vmatmul.f32.gmra.mxu0 %v1739
      %v1854 = vpop.f32.mrf.mxu0
      %v1855 = vadd.f32 0.0, %v1854
      %1856 = vmatmul.f32.gmra.mxu0 %v1742
      %v1857 = vpop.f32.mrf.mxu0
      %v1858 = vadd.f32 0.0, %v1857
      %1859 = vmatmul.f32.gmra.mxu0 %v1745
      %v1860 = vpop.f32.mrf.mxu0
      %v1861 = vadd.f32 0.0, %v1860
      %1862 = vmatmul.f32.gmra.mxu0 %v1748
      %v1863 = vpop.f32.mrf.mxu0
      %v1864 = vadd.f32 0.0, %v1863
      %1865 = vmatmul.f32.gmra.mxu0 %v1751
      %v1866 = vpop.f32.mrf.mxu0
      %v1867 = vadd.f32 0.0, %v1866
      %1868 = vmatmul.f32.gmra.mxu0 %v1754
      %v1869 = vpop.f32.mrf.mxu0
      %v1870 = vadd.f32 0.0, %v1869
      %1871 = vmatmul.f32.gmra.mxu0 %v1757
      %v1872 = vpop.f32.mrf.mxu0
      %v1873 = vadd.f32 0.0, %v1872
      %1874 = vmatmul.f32.gmra.mxu0 %v1760
      %v1875 = vpop.f32.mrf.mxu0
      %v1876 = vadd.f32 0.0, %v1875
      %1877 = vmatmul.f32.gmra.mxu0 %v1763
      %v1878 = vpop.f32.mrf.mxu0
      %v1879 = vadd.f32 0.0, %v1878
      %1880 = vmatmul.f32.gmra.mxu0 %v1766
      %v1881 = vpop.f32.mrf.mxu0
      %v1882 = vadd.f32 0.0, %v1881
      %1883 = vmatmul.f32.gmra.mxu0 %v1769
      %v1884 = vpop.f32.mrf.mxu0
      %v1885 = vadd.f32 0.0, %v1884
      %1886 = vmatmul.f32.gmra.mxu0 %v1772
      %v1887 = vpop.f32.mrf.mxu0
      %v1888 = vadd.f32 0.0, %v1887
      %1889 = vmatmul.f32.gmra.mxu0 %v1775
      %v1890 = vpop.f32.mrf.mxu0
      %v1891 = vadd.f32 0.0, %v1890
      %1892 = vmatmul.f32.gmra.mxu0 %v1778
      %v1893 = vpop.f32.mrf.mxu0
      %v1894 = vadd.f32 0.0, %v1893
      %1895 = vmatmul.f32.gmra.mxu0 %v1781
      %v1896 = vpop.f32.mrf.mxu0
      %v1897 = vadd.f32 0.0, %v1896
      %1898 = vmatmul.f32.gmra.mxu0 %v1784
      %v1899 = vpop.f32.mrf.mxu0
      %v1900 = vadd.f32 0.0, %v1899
      %1901 = vmatmul.f32.gmra.mxu0 %v1787
      %v1902 = vpop.f32.mrf.mxu0
      %v1903 = vadd.f32 0.0, %v1902
      %1904 = vmatmul.f32.gmra.mxu0 %v1790
      %v1905 = vpop.f32.mrf.mxu0
      %v1906 = vadd.f32 0.0, %v1905
      %1907 = vmatmul.f32.gmra.mxu0 %v1793
      %v1908 = vpop.f32.mrf.mxu0
      %v1909 = vadd.f32 0.0, %v1908
      %1910 = vmatmul.f32.gmra.mxu0 %v1796
      %v1911 = vpop.f32.mrf.mxu0
      %v1912 = vadd.f32 0.0, %v1911
      %1913 = vmatmul.f32.gmra.mxu0 %v1799
      %v1914 = vpop.f32.mrf.mxu0
      %v1915 = vadd.f32 0.0, %v1914
      %1916 = vmatmul.f32.gmra.mxu0 %v1802
      %v1917 = vpop.f32.mrf.mxu0
      %v1918 = vadd.f32 0.0, %v1917
      %1919 = vmatmul.f32.gmra.mxu0 %v1805
      %v1920 = vpop.f32.mrf.mxu0
      %v1921 = vadd.f32 0.0, %v1920
      %1922 = vmatmul.f32.gmra.mxu0 %v1808
      %v1923 = vpop.f32.mrf.mxu0
      %v1924 = vadd.f32 0.0, %v1923
      %1925 = vmatmul.f32.gmra.mxu0 %v1811
      %v1926 = vpop.f32.mrf.mxu0
      %v1927 = vadd.f32 0.0, %v1926
      %1928 = vmatmul.f32.gmra.mxu0 %v1814
      %v1929 = vpop.f32.mrf.mxu0
      %v1930 = vadd.f32 0.0, %v1929
      %1931 = vmatmul.f32.gmra.mxu0 %v1817
      %v1932 = vpop.f32.mrf.mxu0
      %v1933 = vadd.f32 0.0, %v1932
      %1934 = vdwg.mxu0
      %v1935 = vadd.f32 %v1657, %v1840
      %v1936 = vadd.f32 %v1658, %v1843
      %v1937 = vadd.f32 %v1659, %v1846
      %v1938 = vadd.f32 %v1660, %v1849
      %v1939 = vadd.f32 %v1661, %v1852
      %v1940 = vadd.f32 %v1662, %v1855
      %v1941 = vadd.f32 %v1663, %v1858
      %v1942 = vadd.f32 %v1664, %v1861
      %v1943 = vadd.f32 %v1665, %v1864
      %v1944 = vadd.f32 %v1666, %v1867
      %v1945 = vadd.f32 %v1667, %v1870
      %v1946 = vadd.f32 %v1668, %v1873
      %v1947 = vadd.f32 %v1669, %v1876
      %v1948 = vadd.f32 %v1670, %v1879
      %v1949 = vadd.f32 %v1671, %v1882
      %v1950 = vadd.f32 %v1672, %v1885
      %v1951 = vadd.f32 %v1673, %v1888
      %v1952 = vadd.f32 %v1674, %v1891
      %v1953 = vadd.f32 %v1675, %v1894
      %v1954 = vadd.f32 %v1676, %v1897
      %v1955 = vadd.f32 %v1677, %v1900
      %v1956 = vadd.f32 %v1678, %v1903
      %v1957 = vadd.f32 %v1679, %v1906
      %v1958 = vadd.f32 %v1680, %v1909
      %v1959 = vadd.f32 %v1681, %v1912
      %v1960 = vadd.f32 %v1682, %v1915
      %v1961 = vadd.f32 %v1683, %v1918
      %v1962 = vadd.f32 %v1684, %v1921
      %v1963 = vadd.f32 %v1685, %v1924
      %v1964 = vadd.f32 %v1686, %v1927
      %v1965 = vadd.f32 %v1687, %v1930
      %v1966 = vadd.f32 %v1688, %v1933
      %s1967 = scalar_lea.vmem [#allocation2], 64
      %v1968 = vld [vmem:[%s1967 + $0x7] sm:$0xff]
      %v1969 = vld [vmem:[%s1967 + $0xf] sm:$0xff]
      %v1970 = vld [vmem:[%s1967 + $0x27] sm:$0xff]
      %v1971 = vld [vmem:[%s1967 + $0x2f] sm:$0xff]
      %v1972 = vld [vmem:[%s1967 + $0x47] sm:$0xff]
      %v1973 = vld [vmem:[%s1967 + $0x4f] sm:$0xff]
      %v1974 = vld [vmem:[%s1967 + $0x67] sm:$0xff]
      %v1975 = vld [vmem:[%s1967 + $0x6f] sm:$0xff]
      %v1976 = vld [vmem:[%s1967 + $0x87] sm:$0xff]
      %v1977 = vld [vmem:[%s1967 + $0x8f] sm:$0xff]
      %v1978 = vld [vmem:[%s1967 + $0xa7] sm:$0xff]
      %v1979 = vld [vmem:[%s1967 + $0xaf] sm:$0xff]
      %v1980 = vld [vmem:[%s1967 + $0xc7] sm:$0xff]
      %v1981 = vld [vmem:[%s1967 + $0xcf] sm:$0xff]
      %v1982 = vld [vmem:[%s1967 + $0xe7] sm:$0xff]
      %v1983 = vld [vmem:[%s1967 + $0xef] sm:$0xff]
      %v1984 = vld [vmem:[%s1967 + $0x107] sm:$0xff]
      %v1985 = vld [vmem:[%s1967 + $0x10f] sm:$0xff]
      %v1986 = vld [vmem:[%s1967 + $0x127] sm:$0xff]
      %v1987 = vld [vmem:[%s1967 + $0x12f] sm:$0xff]
      %v1988 = vld [vmem:[%s1967 + $0x147] sm:$0xff]
      %v1989 = vld [vmem:[%s1967 + $0x14f] sm:$0xff]
      %v1990 = vld [vmem:[%s1967 + $0x167] sm:$0xff]
      %v1991 = vld [vmem:[%s1967 + $0x16f] sm:$0xff]
      %v1992 = vld [vmem:[%s1967 + $0x187] sm:$0xff]
      %v1993 = vld [vmem:[%s1967 + $0x18f] sm:$0xff]
      %v1994 = vld [vmem:[%s1967 + $0x1a7] sm:$0xff]
      %v1995 = vld [vmem:[%s1967 + $0x1af] sm:$0xff]
      %v1996 = vld [vmem:[%s1967 + $0x1c7] sm:$0xff]
      %v1997 = vld [vmem:[%s1967 + $0x1cf] sm:$0xff]
      %v1998 = vld [vmem:[%s1967 + $0x1e7] sm:$0xff]
      %v1999 = vld [vmem:[%s1967 + $0x1ef] sm:$0xff]
      %s2000 = scalar_lea.vmem %s1, 24
      %v2001 = vld [vmem:[%s2000] sm:$0xf]
      %v2003 = vsel %vm225, %v1968, 0
      %v2006 = vsel %vm225, %v1969, 0
      %v2009 = vsel %vm225, %v1970, 0
      %v2012 = vsel %vm225, %v1971, 0
      %v2015 = vsel %vm225, %v1972, 0
      %v2018 = vsel %vm225, %v1973, 0
      %v2021 = vsel %vm225, %v1974, 0
      %v2024 = vsel %vm225, %v1975, 0
      %v2027 = vsel %vm225, %v1976, 0
      %v2030 = vsel %vm225, %v1977, 0
      %v2033 = vsel %vm225, %v1978, 0
      %v2036 = vsel %vm225, %v1979, 0
      %v2039 = vsel %vm225, %v1980, 0
      %v2042 = vsel %vm225, %v1981, 0
      %v2045 = vsel %vm225, %v1982, 0
      %v2048 = vsel %vm225, %v1983, 0
      %v2051 = vsel %vm225, %v1984, 0
      %v2054 = vsel %vm225, %v1985, 0
      %v2057 = vsel %vm225, %v1986, 0
      %v2060 = vsel %vm225, %v1987, 0
      %v2063 = vsel %vm225, %v1988, 0
      %v2066 = vsel %vm225, %v1989, 0
      %v2069 = vsel %vm225, %v1990, 0
      %v2072 = vsel %vm225, %v1991, 0
      %v2075 = vsel %vm225, %v1992, 0
      %v2078 = vsel %vm225, %v1993, 0
      %v2081 = vsel %vm225, %v1994, 0
      %v2084 = vsel %vm225, %v1995, 0
      %v2087 = vsel %vm225, %v1996, 0
      %v2090 = vsel %vm225, %v1997, 0
      %v2093 = vsel %vm225, %v1998, 0
      %v2096 = vsel %vm225, %v1999, 0
      %v2099 = vsel %vm526, %v2001, 0
      %2101 = vmatpush.msra.mxu0 0.0
      %2102 = vmatpush.msra.mxu0 0.0
      %2103 = vmatpush.msra.mxu0 0.0
      %2104 = vmatpush.msra.mxu0 0.0
      %2105 = vmatpush.msra.mxu0 0.0
      %2106 = vmatpush.msra.mxu0 0.0
      %2107 = vmatpush.msra.mxu0 0.0
      %2108 = vmatpush.msra.mxu0 0.0
      %2109 = vmatpush.msra.mxu0 0.0
      %2110 = vmatpush.msra.mxu0 0.0
      %2111 = vmatpush.msra.mxu0 0.0
      %2112 = vmatpush.msra.mxu0 0.0
      %2113 = vmatpush.msra.mxu0 0.0
      %2114 = vmatpush.msra.mxu0 0.0
      %2115 = vmatpush.msra.mxu0 0.0
      %2116 = vmatpush.msra.mxu0 %v2099
      %2117 = vmatmul.f32.gmra.mxu0 %v2003
      %v2118 = vpop.f32.mrf.mxu0
      %v2119 = vadd.f32 0.0, %v2118
      %2120 = vmatmul.f32.gmra.mxu0 %v2006
      %v2121 = vpop.f32.mrf.mxu0
      %v2122 = vadd.f32 0.0, %v2121
      %2123 = vmatmul.f32.gmra.mxu0 %v2009
      %v2124 = vpop.f32.mrf.mxu0
      %v2125 = vadd.f32 0.0, %v2124
      %2126 = vmatmul.f32.gmra.mxu0 %v2012
      %v2127 = vpop.f32.mrf.mxu0
      %v2128 = vadd.f32 0.0, %v2127
      %2129 = vmatmul.f32.gmra.mxu0 %v2015
      %v2130 = vpop.f32.mrf.mxu0
      %v2131 = vadd.f32 0.0, %v2130
      %2132 = vmatmul.f32.gmra.mxu0 %v2018
      %v2133 = vpop.f32.mrf.mxu0
      %v2134 = vadd.f32 0.0, %v2133
      %2135 = vmatmul.f32.gmra.mxu0 %v2021
      %v2136 = vpop.f32.mrf.mxu0
      %v2137 = vadd.f32 0.0, %v2136
      %2138 = vmatmul.f32.gmra.mxu0 %v2024
      %v2139 = vpop.f32.mrf.mxu0
      %v2140 = vadd.f32 0.0, %v2139
      %2141 = vmatmul.f32.gmra.mxu0 %v2027
      %v2142 = vpop.f32.mrf.mxu0
      %v2143 = vadd.f32 0.0, %v2142
      %2144 = vmatmul.f32.gmra.mxu0 %v2030
      %v2145 = vpop.f32.mrf.mxu0
      %v2146 = vadd.f32 0.0, %v2145
      %2147 = vmatmul.f32.gmra.mxu0 %v2033
      %v2148 = vpop.f32.mrf.mxu0
      %v2149 = vadd.f32 0.0, %v2148
      %2150 = vmatmul.f32.gmra.mxu0 %v2036
      %v2151 = vpop.f32.mrf.mxu0
      %v2152 = vadd.f32 0.0, %v2151
      %2153 = vmatmul.f32.gmra.mxu0 %v2039
      %v2154 = vpop.f32.mrf.mxu0
      %v2155 = vadd.f32 0.0, %v2154
      %2156 = vmatmul.f32.gmra.mxu0 %v2042
      %v2157 = vpop.f32.mrf.mxu0
      %v2158 = vadd.f32 0.0, %v2157
      %2159 = vmatmul.f32.gmra.mxu0 %v2045
      %v2160 = vpop.f32.mrf.mxu0
      %v2161 = vadd.f32 0.0, %v2160
      %2162 = vmatmul.f32.gmra.mxu0 %v2048
      %v2163 = vpop.f32.mrf.mxu0
      %v2164 = vadd.f32 0.0, %v2163
      %2165 = vmatmul.f32.gmra.mxu0 %v2051
      %v2166 = vpop.f32.mrf.mxu0
      %v2167 = vadd.f32 0.0, %v2166
      %2168 = vmatmul.f32.gmra.mxu0 %v2054
      %v2169 = vpop.f32.mrf.mxu0
      %v2170 = vadd.f32 0.0, %v2169
      %2171 = vmatmul.f32.gmra.mxu0 %v2057
      %v2172 = vpop.f32.mrf.mxu0
      %v2173 = vadd.f32 0.0, %v2172
      %2174 = vmatmul.f32.gmra.mxu0 %v2060
      %v2175 = vpop.f32.mrf.mxu0
      %v2176 = vadd.f32 0.0, %v2175
      %2177 = vmatmul.f32.gmra.mxu0 %v2063
      %v2178 = vpop.f32.mrf.mxu0
      %v2179 = vadd.f32 0.0, %v2178
      %2180 = vmatmul.f32.gmra.mxu0 %v2066
      %v2181 = vpop.f32.mrf.mxu0
      %v2182 = vadd.f32 0.0, %v2181
      %2183 = vmatmul.f32.gmra.mxu0 %v2069
      %v2184 = vpop.f32.mrf.mxu0
      %v2185 = vadd.f32 0.0, %v2184
      %2186 = vmatmul.f32.gmra.mxu0 %v2072
      %v2187 = vpop.f32.mrf.mxu0
      %v2188 = vadd.f32 0.0, %v2187
      %2189 = vmatmul.f32.gmra.mxu0 %v2075
      %v2190 = vpop.f32.mrf.mxu0
      %v2191 = vadd.f32 0.0, %v2190
      %2192 = vmatmul.f32.gmra.mxu0 %v2078
      %v2193 = vpop.f32.mrf.mxu0
      %v2194 = vadd.f32 0.0, %v2193
      %2195 = vmatmul.f32.gmra.mxu0 %v2081
      %v2196 = vpop.f32.mrf.mxu0
      %v2197 = vadd.f32 0.0, %v2196
      %2198 = vmatmul.f32.gmra.mxu0 %v2084
      %v2199 = vpop.f32.mrf.mxu0
      %v2200 = vadd.f32 0.0, %v2199
      %2201 = vmatmul.f32.gmra.mxu0 %v2087
      %v2202 = vpop.f32.mrf.mxu0
      %v2203 = vadd.f32 0.0, %v2202
      %2204 = vmatmul.f32.gmra.mxu0 %v2090
      %v2205 = vpop.f32.mrf.mxu0
      %v2206 = vadd.f32 0.0, %v2205
      %2207 = vmatmul.f32.gmra.mxu0 %v2093
      %v2208 = vpop.f32.mrf.mxu0
      %v2209 = vadd.f32 0.0, %v2208
      %2210 = vmatmul.f32.gmra.mxu0 %v2096
      %v2211 = vpop.f32.mrf.mxu0
      %v2212 = vadd.f32 0.0, %v2211
      %2213 = vdwg.mxu0
      %v2214 = vadd.f32 %v1935, %v2119
      %v2215 = vadd.f32 %v1936, %v2122
      %v2216 = vadd.f32 %v1937, %v2125
      %v2217 = vadd.f32 %v1938, %v2128
      %v2218 = vadd.f32 %v1939, %v2131
      %v2219 = vadd.f32 %v1940, %v2134
      %v2220 = vadd.f32 %v1941, %v2137
      %v2221 = vadd.f32 %v1942, %v2140
      %v2222 = vadd.f32 %v1943, %v2143
      %v2223 = vadd.f32 %v1944, %v2146
      %v2224 = vadd.f32 %v1945, %v2149
      %v2225 = vadd.f32 %v1946, %v2152
      %v2226 = vadd.f32 %v1947, %v2155
      %v2227 = vadd.f32 %v1948, %v2158
      %v2228 = vadd.f32 %v1949, %v2161
      %v2229 = vadd.f32 %v1950, %v2164
      %v2230 = vadd.f32 %v1951, %v2167
      %v2231 = vadd.f32 %v1952, %v2170
      %v2232 = vadd.f32 %v1953, %v2173
      %v2233 = vadd.f32 %v1954, %v2176
      %v2234 = vadd.f32 %v1955, %v2179
      %v2235 = vadd.f32 %v1956, %v2182
      %v2236 = vadd.f32 %v1957, %v2185
      %v2237 = vadd.f32 %v1958, %v2188
      %v2238 = vadd.f32 %v1959, %v2191
      %v2239 = vadd.f32 %v1960, %v2194
      %v2240 = vadd.f32 %v1961, %v2197
      %v2241 = vadd.f32 %v1962, %v2200
      %v2242 = vadd.f32 %v1963, %v2203
      %v2243 = vadd.f32 %v1964, %v2206
      %v2244 = vadd.f32 %v1965, %v2209
      %v2245 = vadd.f32 %v1966, %v2212
      %v2246 = vld [vmem:[%s1967 + $0x8] sm:$0xff]
      %v2247 = vld [vmem:[%s1967 + $0x10] sm:$0xff]
      %v2248 = vld [vmem:[%s1967 + $0x28] sm:$0xff]
      %v2249 = vld [vmem:[%s1967 + $0x30] sm:$0xff]
      %v2250 = vld [vmem:[%s1967 + $0x48] sm:$0xff]
      %v2251 = vld [vmem:[%s1967 + $0x50] sm:$0xff]
      %v2252 = vld [vmem:[%s1967 + $0x68] sm:$0xff]
      %v2253 = vld [vmem:[%s1967 + $0x70] sm:$0xff]
      %v2254 = vld [vmem:[%s1967 + $0x88] sm:$0xff]
      %v2255 = vld [vmem:[%s1967 + $0x90] sm:$0xff]
      %v2256 = vld [vmem:[%s1967 + $0xa8] sm:$0xff]
      %v2257 = vld [vmem:[%s1967 + $0xb0] sm:$0xff]
      %v2258 = vld [vmem:[%s1967 + $0xc8] sm:$0xff]
      %v2259 = vld [vmem:[%s1967 + $0xd0] sm:$0xff]
      %v2260 = vld [vmem:[%s1967 + $0xe8] sm:$0xff]
      %v2261 = vld [vmem:[%s1967 + $0xf0] sm:$0xff]
      %v2262 = vld [vmem:[%s1967 + $0x108] sm:$0xff]
      %v2263 = vld [vmem:[%s1967 + $0x110] sm:$0xff]
      %v2264 = vld [vmem:[%s1967 + $0x128] sm:$0xff]
      %v2265 = vld [vmem:[%s1967 + $0x130] sm:$0xff]
      %v2266 = vld [vmem:[%s1967 + $0x148] sm:$0xff]
      %v2267 = vld [vmem:[%s1967 + $0x150] sm:$0xff]
      %v2268 = vld [vmem:[%s1967 + $0x168] sm:$0xff]
      %v2269 = vld [vmem:[%s1967 + $0x170] sm:$0xff]
      %v2270 = vld [vmem:[%s1967 + $0x188] sm:$0xff]
      %v2271 = vld [vmem:[%s1967 + $0x190] sm:$0xff]
      %v2272 = vld [vmem:[%s1967 + $0x1a8] sm:$0xff]
      %v2273 = vld [vmem:[%s1967 + $0x1b0] sm:$0xff]
      %v2274 = vld [vmem:[%s1967 + $0x1c8] sm:$0xff]
      %v2275 = vld [vmem:[%s1967 + $0x1d0] sm:$0xff]
      %v2276 = vld [vmem:[%s1967 + $0x1e8] sm:$0xff]
      %v2277 = vld [vmem:[%s1967 + $0x1f0] sm:$0xff]
      %s2278 = scalar_lea.vmem %s1, 28
      %v2279 = vld [vmem:[%s2278] sm:$0xf]
      %v2281 = vsel %vm225, %v2246, 0
      %v2284 = vsel %vm225, %v2247, 0
      %v2287 = vsel %vm225, %v2248, 0
      %v2290 = vsel %vm225, %v2249, 0
      %v2293 = vsel %vm225, %v2250, 0
      %v2296 = vsel %vm225, %v2251, 0
      %v2299 = vsel %vm225, %v2252, 0
      %v2302 = vsel %vm225, %v2253, 0
      %v2305 = vsel %vm225, %v2254, 0
      %v2308 = vsel %vm225, %v2255, 0
      %v2311 = vsel %vm225, %v2256, 0
      %v2314 = vsel %vm225, %v2257, 0
      %v2317 = vsel %vm225, %v2258, 0
      %v2320 = vsel %vm225, %v2259, 0
      %v2323 = vsel %vm225, %v2260, 0
      %v2326 = vsel %vm225, %v2261, 0
      %v2329 = vsel %vm225, %v2262, 0
      %v2332 = vsel %vm225, %v2263, 0
      %v2335 = vsel %vm225, %v2264, 0
      %v2338 = vsel %vm225, %v2265, 0
      %v2341 = vsel %vm225, %v2266, 0
      %v2344 = vsel %vm225, %v2267, 0
      %v2347 = vsel %vm225, %v2268, 0
      %v2350 = vsel %vm225, %v2269, 0
      %v2353 = vsel %vm225, %v2270, 0
      %v2356 = vsel %vm225, %v2271, 0
      %v2359 = vsel %vm225, %v2272, 0
      %v2362 = vsel %vm225, %v2273, 0
      %v2365 = vsel %vm225, %v2274, 0
      %v2368 = vsel %vm225, %v2275, 0
      %v2371 = vsel %vm225, %v2276, 0
      %v2374 = vsel %vm225, %v2277, 0
      %v2377 = vsel %vm526, %v2279, 0
      %2379 = vmatpush.msra.mxu0 0.0
      %2380 = vmatpush.msra.mxu0 0.0
      %2381 = vmatpush.msra.mxu0 0.0
      %2382 = vmatpush.msra.mxu0 0.0
      %2383 = vmatpush.msra.mxu0 0.0
      %2384 = vmatpush.msra.mxu0 0.0
      %2385 = vmatpush.msra.mxu0 0.0
      %2386 = vmatpush.msra.mxu0 0.0
      %2387 = vmatpush.msra.mxu0 0.0
      %2388 = vmatpush.msra.mxu0 0.0
      %2389 = vmatpush.msra.mxu0 0.0
      %2390 = vmatpush.msra.mxu0 0.0
      %2391 = vmatpush.msra.mxu0 0.0
      %2392 = vmatpush.msra.mxu0 0.0
      %2393 = vmatpush.msra.mxu0 0.0
      %2394 = vmatpush.msra.mxu0 %v2377
      %2395 = vmatmul.f32.gmra.mxu0 %v2281
      %v2396 = vpop.f32.mrf.mxu0
      %v2397 = vadd.f32 0.0, %v2396
      %2398 = vmatmul.f32.gmra.mxu0 %v2284
      %v2399 = vpop.f32.mrf.mxu0
      %v2400 = vadd.f32 0.0, %v2399
      %2401 = vmatmul.f32.gmra.mxu0 %v2287
      %v2402 = vpop.f32.mrf.mxu0
      %v2403 = vadd.f32 0.0, %v2402
      %2404 = vmatmul.f32.gmra.mxu0 %v2290
      %v2405 = vpop.f32.mrf.mxu0
      %v2406 = vadd.f32 0.0, %v2405
      %2407 = vmatmul.f32.gmra.mxu0 %v2293
      %v2408 = vpop.f32.mrf.mxu0
      %v2409 = vadd.f32 0.0, %v2408
      %2410 = vmatmul.f32.gmra.mxu0 %v2296
      %v2411 = vpop.f32.mrf.mxu0
      %v2412 = vadd.f32 0.0, %v2411
      %2413 = vmatmul.f32.gmra.mxu0 %v2299
      %v2414 = vpop.f32.mrf.mxu0
      %v2415 = vadd.f32 0.0, %v2414
      %2416 = vmatmul.f32.gmra.mxu0 %v2302
      %v2417 = vpop.f32.mrf.mxu0
      %v2418 = vadd.f32 0.0, %v2417
      %2419 = vmatmul.f32.gmra.mxu0 %v2305
      %v2420 = vpop.f32.mrf.mxu0
      %v2421 = vadd.f32 0.0, %v2420
      %2422 = vmatmul.f32.gmra.mxu0 %v2308
      %v2423 = vpop.f32.mrf.mxu0
      %v2424 = vadd.f32 0.0, %v2423
      %2425 = vmatmul.f32.gmra.mxu0 %v2311
      %v2426 = vpop.f32.mrf.mxu0
      %v2427 = vadd.f32 0.0, %v2426
      %2428 = vmatmul.f32.gmra.mxu0 %v2314
      %v2429 = vpop.f32.mrf.mxu0
      %v2430 = vadd.f32 0.0, %v2429
      %2431 = vmatmul.f32.gmra.mxu0 %v2317
      %v2432 = vpop.f32.mrf.mxu0
      %v2433 = vadd.f32 0.0, %v2432
      %2434 = vmatmul.f32.gmra.mxu0 %v2320
      %v2435 = vpop.f32.mrf.mxu0
      %v2436 = vadd.f32 0.0, %v2435
      %2437 = vmatmul.f32.gmra.mxu0 %v2323
      %v2438 = vpop.f32.mrf.mxu0
      %v2439 = vadd.f32 0.0, %v2438
      %2440 = vmatmul.f32.gmra.mxu0 %v2326
      %v2441 = vpop.f32.mrf.mxu0
      %v2442 = vadd.f32 0.0, %v2441
      %2443 = vmatmul.f32.gmra.mxu0 %v2329
      %v2444 = vpop.f32.mrf.mxu0
      %v2445 = vadd.f32 0.0, %v2444
      %2446 = vmatmul.f32.gmra.mxu0 %v2332
      %v2447 = vpop.f32.mrf.mxu0
      %v2448 = vadd.f32 0.0, %v2447
      %2449 = vmatmul.f32.gmra.mxu0 %v2335
      %v2450 = vpop.f32.mrf.mxu0
      %v2451 = vadd.f32 0.0, %v2450
      %2452 = vmatmul.f32.gmra.mxu0 %v2338
      %v2453 = vpop.f32.mrf.mxu0
      %v2454 = vadd.f32 0.0, %v2453
      %2455 = vmatmul.f32.gmra.mxu0 %v2341
      %v2456 = vpop.f32.mrf.mxu0
      %v2457 = vadd.f32 0.0, %v2456
      %2458 = vmatmul.f32.gmra.mxu0 %v2344
      %v2459 = vpop.f32.mrf.mxu0
      %v2460 = vadd.f32 0.0, %v2459
      %2461 = vmatmul.f32.gmra.mxu0 %v2347
      %v2462 = vpop.f32.mrf.mxu0
      %v2463 = vadd.f32 0.0, %v2462
      %2464 = vmatmul.f32.gmra.mxu0 %v2350
      %v2465 = vpop.f32.mrf.mxu0
      %v2466 = vadd.f32 0.0, %v2465
      %2467 = vmatmul.f32.gmra.mxu0 %v2353
      %v2468 = vpop.f32.mrf.mxu0
      %v2469 = vadd.f32 0.0, %v2468
      %2470 = vmatmul.f32.gmra.mxu0 %v2356
      %v2471 = vpop.f32.mrf.mxu0
      %v2472 = vadd.f32 0.0, %v2471
      %2473 = vmatmul.f32.gmra.mxu0 %v2359
      %v2474 = vpop.f32.mrf.mxu0
      %v2475 = vadd.f32 0.0, %v2474
      %2476 = vmatmul.f32.gmra.mxu0 %v2362
      %v2477 = vpop.f32.mrf.mxu0
      %v2478 = vadd.f32 0.0, %v2477
      %2479 = vmatmul.f32.gmra.mxu0 %v2365
      %v2480 = vpop.f32.mrf.mxu0
      %v2481 = vadd.f32 0.0, %v2480
      %2482 = vmatmul.f32.gmra.mxu0 %v2368
      %v2483 = vpop.f32.mrf.mxu0
      %v2484 = vadd.f32 0.0, %v2483
      %2485 = vmatmul.f32.gmra.mxu0 %v2371
      %v2486 = vpop.f32.mrf.mxu0
      %v2487 = vadd.f32 0.0, %v2486
      %2488 = vmatmul.f32.gmra.mxu0 %v2374
      %v2489 = vpop.f32.mrf.mxu0
      %v2490 = vadd.f32 0.0, %v2489
      %2491 = vdwg.mxu0
      %v2492 = vadd.f32 %v2214, %v2397
      %v2493 = vadd.f32 %v2215, %v2400
      %v2494 = vadd.f32 %v2216, %v2403
      %v2495 = vadd.f32 %v2217, %v2406
      %v2496 = vadd.f32 %v2218, %v2409
      %v2497 = vadd.f32 %v2219, %v2412
      %v2498 = vadd.f32 %v2220, %v2415
      %v2499 = vadd.f32 %v2221, %v2418
      %v2500 = vadd.f32 %v2222, %v2421
      %v2501 = vadd.f32 %v2223, %v2424
      %v2502 = vadd.f32 %v2224, %v2427
      %v2503 = vadd.f32 %v2225, %v2430
      %v2504 = vadd.f32 %v2226, %v2433
      %v2505 = vadd.f32 %v2227, %v2436
      %v2506 = vadd.f32 %v2228, %v2439
      %v2507 = vadd.f32 %v2229, %v2442
      %v2508 = vadd.f32 %v2230, %v2445
      %v2509 = vadd.f32 %v2231, %v2448
      %v2510 = vadd.f32 %v2232, %v2451
      %v2511 = vadd.f32 %v2233, %v2454
      %v2512 = vadd.f32 %v2234, %v2457
      %v2513 = vadd.f32 %v2235, %v2460
      %v2514 = vadd.f32 %v2236, %v2463
      %v2515 = vadd.f32 %v2237, %v2466
      %v2516 = vadd.f32 %v2238, %v2469
      %v2517 = vadd.f32 %v2239, %v2472
      %v2518 = vadd.f32 %v2240, %v2475
      %v2519 = vadd.f32 %v2241, %v2478
      %v2520 = vadd.f32 %v2242, %v2481
      %v2521 = vadd.f32 %v2243, %v2484
      %v2522 = vadd.f32 %v2244, %v2487
      %v2523 = vadd.f32 %v2245, %v2490
      %v2524 = vld [vmem:[%s1967 + $0x9] sm:$0xff]
      %v2525 = vld [vmem:[%s1967 + $0x11] sm:$0xff]
      %v2526 = vld [vmem:[%s1967 + $0x29] sm:$0xff]
      %v2527 = vld [vmem:[%s1967 + $0x31] sm:$0xff]
      %v2528 = vld [vmem:[%s1967 + $0x49] sm:$0xff]
      %v2529 = vld [vmem:[%s1967 + $0x51] sm:$0xff]
      %v2530 = vld [vmem:[%s1967 + $0x69] sm:$0xff]
      %v2531 = vld [vmem:[%s1967 + $0x71] sm:$0xff]
      %v2532 = vld [vmem:[%s1967 + $0x89] sm:$0xff]
      %v2533 = vld [vmem:[%s1967 + $0x91] sm:$0xff]
      %v2534 = vld [vmem:[%s1967 + $0xa9] sm:$0xff]
      %v2535 = vld [vmem:[%s1967 + $0xb1] sm:$0xff]
      %v2536 = vld [vmem:[%s1967 + $0xc9] sm:$0xff]
      %v2537 = vld [vmem:[%s1967 + $0xd1] sm:$0xff]
      %v2538 = vld [vmem:[%s1967 + $0xe9] sm:$0xff]
      %v2539 = vld [vmem:[%s1967 + $0xf1] sm:$0xff]
      %v2540 = vld [vmem:[%s1967 + $0x109] sm:$0xff]
      %v2541 = vld [vmem:[%s1967 + $0x111] sm:$0xff]
      %v2542 = vld [vmem:[%s1967 + $0x129] sm:$0xff]
      %v2543 = vld [vmem:[%s1967 + $0x131] sm:$0xff]
      %v2544 = vld [vmem:[%s1967 + $0x149] sm:$0xff]
      %v2545 = vld [vmem:[%s1967 + $0x151] sm:$0xff]
      %v2546 = vld [vmem:[%s1967 + $0x169] sm:$0xff]
      %v2547 = vld [vmem:[%s1967 + $0x171] sm:$0xff]
      %v2548 = vld [vmem:[%s1967 + $0x189] sm:$0xff]
      %v2549 = vld [vmem:[%s1967 + $0x191] sm:$0xff]
      %v2550 = vld [vmem:[%s1967 + $0x1a9] sm:$0xff]
      %v2551 = vld [vmem:[%s1967 + $0x1b1] sm:$0xff]
      %v2552 = vld [vmem:[%s1967 + $0x1c9] sm:$0xff]
      %v2553 = vld [vmem:[%s1967 + $0x1d1] sm:$0xff]
      %v2554 = vld [vmem:[%s1967 + $0x1e9] sm:$0xff]
      %v2555 = vld [vmem:[%s1967 + $0x1f1] sm:$0xff]
      %s2556 = scalar_lea.vmem %s1, 32
      %v2557 = vld [vmem:[%s2556] sm:$0xf]
      %v2559 = vsel %vm225, %v2524, 0
      %v2562 = vsel %vm225, %v2525, 0
      %v2565 = vsel %vm225, %v2526, 0
      %v2568 = vsel %vm225, %v2527, 0
      %v2571 = vsel %vm225, %v2528, 0
      %v2574 = vsel %vm225, %v2529, 0
      %v2577 = vsel %vm225, %v2530, 0
      %v2580 = vsel %vm225, %v2531, 0
      %v2583 = vsel %vm225, %v2532, 0
      %v2586 = vsel %vm225, %v2533, 0
      %v2589 = vsel %vm225, %v2534, 0
      %v2592 = vsel %vm225, %v2535, 0
      %v2595 = vsel %vm225, %v2536, 0
      %v2598 = vsel %vm225, %v2537, 0
      %v2601 = vsel %vm225, %v2538, 0
      %v2604 = vsel %vm225, %v2539, 0
      %v2607 = vsel %vm225, %v2540, 0
      %v2610 = vsel %vm225, %v2541, 0
      %v2613 = vsel %vm225, %v2542, 0
      %v2616 = vsel %vm225, %v2543, 0
      %v2619 = vsel %vm225, %v2544, 0
      %v2622 = vsel %vm225, %v2545, 0
      %v2625 = vsel %vm225, %v2546, 0
      %v2628 = vsel %vm225, %v2547, 0
      %v2631 = vsel %vm225, %v2548, 0
      %v2634 = vsel %vm225, %v2549, 0
      %v2637 = vsel %vm225, %v2550, 0
      %v2640 = vsel %vm225, %v2551, 0
      %v2643 = vsel %vm225, %v2552, 0
      %v2646 = vsel %vm225, %v2553, 0
      %v2649 = vsel %vm225, %v2554, 0
      %v2652 = vsel %vm225, %v2555, 0
      %v2655 = vsel %vm526, %v2557, 0
      %2657 = vmatpush.msra.mxu0 0.0
      %2658 = vmatpush.msra.mxu0 0.0
      %2659 = vmatpush.msra.mxu0 0.0
      %2660 = vmatpush.msra.mxu0 0.0
      %2661 = vmatpush.msra.mxu0 0.0
      %2662 = vmatpush.msra.mxu0 0.0
      %2663 = vmatpush.msra.mxu0 0.0
      %2664 = vmatpush.msra.mxu0 0.0
      %2665 = vmatpush.msra.mxu0 0.0
      %2666 = vmatpush.msra.mxu0 0.0
      %2667 = vmatpush.msra.mxu0 0.0
      %2668 = vmatpush.msra.mxu0 0.0
      %2669 = vmatpush.msra.mxu0 0.0
      %2670 = vmatpush.msra.mxu0 0.0
      %2671 = vmatpush.msra.mxu0 0.0
      %2672 = vmatpush.msra.mxu0 %v2655
      %2673 = vmatmul.f32.gmra.mxu0 %v2559
      %v2674 = vpop.f32.mrf.mxu0
      %v2675 = vadd.f32 0.0, %v2674
      %2676 = vmatmul.f32.gmra.mxu0 %v2562
      %v2677 = vpop.f32.mrf.mxu0
      %v2678 = vadd.f32 0.0, %v2677
      %2679 = vmatmul.f32.gmra.mxu0 %v2565
      %v2680 = vpop.f32.mrf.mxu0
      %v2681 = vadd.f32 0.0, %v2680
      %2682 = vmatmul.f32.gmra.mxu0 %v2568
      %v2683 = vpop.f32.mrf.mxu0
      %v2684 = vadd.f32 0.0, %v2683
      %2685 = vmatmul.f32.gmra.mxu0 %v2571
      %v2686 = vpop.f32.mrf.mxu0
      %v2687 = vadd.f32 0.0, %v2686
      %2688 = vmatmul.f32.gmra.mxu0 %v2574
      %v2689 = vpop.f32.mrf.mxu0
      %v2690 = vadd.f32 0.0, %v2689
      %2691 = vmatmul.f32.gmra.mxu0 %v2577
      %v2692 = vpop.f32.mrf.mxu0
      %v2693 = vadd.f32 0.0, %v2692
      %2694 = vmatmul.f32.gmra.mxu0 %v2580
      %v2695 = vpop.f32.mrf.mxu0
      %v2696 = vadd.f32 0.0, %v2695
      %2697 = vmatmul.f32.gmra.mxu0 %v2583
      %v2698 = vpop.f32.mrf.mxu0
      %v2699 = vadd.f32 0.0, %v2698
      %2700 = vmatmul.f32.gmra.mxu0 %v2586
      %v2701 = vpop.f32.mrf.mxu0
      %v2702 = vadd.f32 0.0, %v2701
      %2703 = vmatmul.f32.gmra.mxu0 %v2589
      %v2704 = vpop.f32.mrf.mxu0
      %v2705 = vadd.f32 0.0, %v2704
      %2706 = vmatmul.f32.gmra.mxu0 %v2592
      %v2707 = vpop.f32.mrf.mxu0
      %v2708 = vadd.f32 0.0, %v2707
      %2709 = vmatmul.f32.gmra.mxu0 %v2595
      %v2710 = vpop.f32.mrf.mxu0
      %v2711 = vadd.f32 0.0, %v2710
      %2712 = vmatmul.f32.gmra.mxu0 %v2598
      %v2713 = vpop.f32.mrf.mxu0
      %v2714 = vadd.f32 0.0, %v2713
      %2715 = vmatmul.f32.gmra.mxu0 %v2601
      %v2716 = vpop.f32.mrf.mxu0
      %v2717 = vadd.f32 0.0, %v2716
      %2718 = vmatmul.f32.gmra.mxu0 %v2604
      %v2719 = vpop.f32.mrf.mxu0
      %v2720 = vadd.f32 0.0, %v2719
      %2721 = vmatmul.f32.gmra.mxu0 %v2607
      %v2722 = vpop.f32.mrf.mxu0
      %v2723 = vadd.f32 0.0, %v2722
      %2724 = vmatmul.f32.gmra.mxu0 %v2610
      %v2725 = vpop.f32.mrf.mxu0
      %v2726 = vadd.f32 0.0, %v2725
      %2727 = vmatmul.f32.gmra.mxu0 %v2613
      %v2728 = vpop.f32.mrf.mxu0
      %v2729 = vadd.f32 0.0, %v2728
      %2730 = vmatmul.f32.gmra.mxu0 %v2616
      %v2731 = vpop.f32.mrf.mxu0
      %v2732 = vadd.f32 0.0, %v2731
      %2733 = vmatmul.f32.gmra.mxu0 %v2619
      %v2734 = vpop.f32.mrf.mxu0
      %v2735 = vadd.f32 0.0, %v2734
      %2736 = vmatmul.f32.gmra.mxu0 %v2622
      %v2737 = vpop.f32.mrf.mxu0
      %v2738 = vadd.f32 0.0, %v2737
      %2739 = vmatmul.f32.gmra.mxu0 %v2625
      %v2740 = vpop.f32.mrf.mxu0
      %v2741 = vadd.f32 0.0, %v2740
      %2742 = vmatmul.f32.gmra.mxu0 %v2628
      %v2743 = vpop.f32.mrf.mxu0
      %v2744 = vadd.f32 0.0, %v2743
      %2745 = vmatmul.f32.gmra.mxu0 %v2631
      %v2746 = vpop.f32.mrf.mxu0
      %v2747 = vadd.f32 0.0, %v2746
      %2748 = vmatmul.f32.gmra.mxu0 %v2634
      %v2749 = vpop.f32.mrf.mxu0
      %v2750 = vadd.f32 0.0, %v2749
      %2751 = vmatmul.f32.gmra.mxu0 %v2637
      %v2752 = vpop.f32.mrf.mxu0
      %v2753 = vadd.f32 0.0, %v2752
      %2754 = vmatmul.f32.gmra.mxu0 %v2640
      %v2755 = vpop.f32.mrf.mxu0
      %v2756 = vadd.f32 0.0, %v2755
      %2757 = vmatmul.f32.gmra.mxu0 %v2643
      %v2758 = vpop.f32.mrf.mxu0
      %v2759 = vadd.f32 0.0, %v2758
      %2760 = vmatmul.f32.gmra.mxu0 %v2646
      %v2761 = vpop.f32.mrf.mxu0
      %v2762 = vadd.f32 0.0, %v2761
      %2763 = vmatmul.f32.gmra.mxu0 %v2649
      %v2764 = vpop.f32.mrf.mxu0
      %v2765 = vadd.f32 0.0, %v2764
      %2766 = vmatmul.f32.gmra.mxu0 %v2652
      %v2767 = vpop.f32.mrf.mxu0
      %v2768 = vadd.f32 0.0, %v2767
      %2769 = vdwg.mxu0
      %v2770 = vadd.f32 %v2492, %v2675
      %v2771 = vadd.f32 %v2493, %v2678
      %v2772 = vadd.f32 %v2494, %v2681
      %v2773 = vadd.f32 %v2495, %v2684
      %v2774 = vadd.f32 %v2496, %v2687
      %v2775 = vadd.f32 %v2497, %v2690
      %v2776 = vadd.f32 %v2498, %v2693
      %v2777 = vadd.f32 %v2499, %v2696
      %v2778 = vadd.f32 %v2500, %v2699
      %v2779 = vadd.f32 %v2501, %v2702
      %v2780 = vadd.f32 %v2502, %v2705
      %v2781 = vadd.f32 %v2503, %v2708
      %v2782 = vadd.f32 %v2504, %v2711
      %v2783 = vadd.f32 %v2505, %v2714
      %v2784 = vadd.f32 %v2506, %v2717
      %v2785 = vadd.f32 %v2507, %v2720
      %v2786 = vadd.f32 %v2508, %v2723
      %v2787 = vadd.f32 %v2509, %v2726
      %v2788 = vadd.f32 %v2510, %v2729
      %v2789 = vadd.f32 %v2511, %v2732
      %v2790 = vadd.f32 %v2512, %v2735
      %v2791 = vadd.f32 %v2513, %v2738
      %v2792 = vadd.f32 %v2514, %v2741
      %v2793 = vadd.f32 %v2515, %v2744
      %v2794 = vadd.f32 %v2516, %v2747
      %v2795 = vadd.f32 %v2517, %v2750
      %v2796 = vadd.f32 %v2518, %v2753
      %v2797 = vadd.f32 %v2519, %v2756
      %v2798 = vadd.f32 %v2520, %v2759
      %v2799 = vadd.f32 %v2521, %v2762
      %v2800 = vadd.f32 %v2522, %v2765
      %v2801 = vadd.f32 %v2523, %v2768
      %v2802 = vld [vmem:[%s2] sm:$0x1]
      %v2804 = vperm.slane %v2802, 0
      %v2806 = vadd.f32 %v2770, %v2804
      %v2807 = vadd.f32 %v2771, %v2804
      %v2808 = vadd.f32 %v2772, %v2804
      %v2809 = vadd.f32 %v2773, %v2804
      %v2810 = vadd.f32 %v2774, %v2804
      %v2811 = vadd.f32 %v2775, %v2804
      %v2812 = vadd.f32 %v2776, %v2804
      %v2813 = vadd.f32 %v2777, %v2804
      %v2814 = vadd.f32 %v2778, %v2804
      %v2815 = vadd.f32 %v2779, %v2804
      %v2816 = vadd.f32 %v2780, %v2804
      %v2817 = vadd.f32 %v2781, %v2804
      %v2818 = vadd.f32 %v2782, %v2804
      %v2819 = vadd.f32 %v2783, %v2804
      %v2820 = vadd.f32 %v2784, %v2804
      %v2821 = vadd.f32 %v2785, %v2804
      %v2822 = vadd.f32 %v2786, %v2804
      %v2823 = vadd.f32 %v2787, %v2804
      %v2824 = vadd.f32 %v2788, %v2804
      %v2825 = vadd.f32 %v2789, %v2804
      %v2826 = vadd.f32 %v2790, %v2804
      %v2827 = vadd.f32 %v2791, %v2804
      %v2828 = vadd.f32 %v2792, %v2804
      %v2829 = vadd.f32 %v2793, %v2804
      %v2830 = vadd.f32 %v2794, %v2804
      %v2831 = vadd.f32 %v2795, %v2804
      %v2832 = vadd.f32 %v2796, %v2804
      %v2833 = vadd.f32 %v2797, %v2804
      %v2834 = vadd.f32 %v2798, %v2804
      %v2835 = vadd.f32 %v2799, %v2804
      %v2836 = vadd.f32 %v2800, %v2804
      %v2837 = vadd.f32 %v2801, %v2804
      %v2838 = vmax.f32 %v2806, 0.0
      %v2839 = vmax.f32 %v2807, 0.0
      %v2840 = vmax.f32 %v2808, 0.0
      %v2841 = vmax.f32 %v2809, 0.0
      %v2842 = vmax.f32 %v2810, 0.0
      %v2843 = vmax.f32 %v2811, 0.0
      %v2844 = vmax.f32 %v2812, 0.0
      %v2845 = vmax.f32 %v2813, 0.0
      %v2846 = vmax.f32 %v2814, 0.0
      %v2847 = vmax.f32 %v2815, 0.0
      %v2848 = vmax.f32 %v2816, 0.0
      %v2849 = vmax.f32 %v2817, 0.0
      %v2850 = vmax.f32 %v2818, 0.0
      %v2851 = vmax.f32 %v2819, 0.0
      %v2852 = vmax.f32 %v2820, 0.0
      %v2853 = vmax.f32 %v2821, 0.0
      %v2854 = vmax.f32 %v2822, 0.0
      %v2855 = vmax.f32 %v2823, 0.0
      %v2856 = vmax.f32 %v2824, 0.0
      %v2857 = vmax.f32 %v2825, 0.0
      %v2858 = vmax.f32 %v2826, 0.0
      %v2859 = vmax.f32 %v2827, 0.0
      %v2860 = vmax.f32 %v2828, 0.0
      %v2861 = vmax.f32 %v2829, 0.0
      %v2862 = vmax.f32 %v2830, 0.0
      %v2863 = vmax.f32 %v2831, 0.0
      %v2864 = vmax.f32 %v2832, 0.0
      %v2865 = vmax.f32 %v2833, 0.0
      %v2866 = vmax.f32 %v2834, 0.0
      %v2867 = vmax.f32 %v2835, 0.0
      %v2868 = vmax.f32 %v2836, 0.0
      %v2869 = vmax.f32 %v2837, 0.0
      %vm2870 = vcmask 64512
      %2871 = vst.msk [vmem:[#allocation3] sm:$0xff] %vm2870, 0.0
      %2872 = vst.msk [vmem:[#allocation3 + $0x8] sm:$0xff] %vm2870, 0.0
      %2873 = vst.msk [vmem:[#allocation3 + $0x10] sm:$0xff] %vm2870, 0.0
      %2874 = vst.msk [vmem:[#allocation3 + $0x18] sm:$0xff] %vm2870, 0.0
      %2875 = vst.msk [vmem:[#allocation3 + $0x20] sm:$0xff] %vm2870, 0.0
      %2876 = vst.msk [vmem:[#allocation3 + $0x28] sm:$0xff] %vm2870, 0.0
      %2877 = vst.msk [vmem:[#allocation3 + $0x30] sm:$0xff] %vm2870, 0.0
      %2878 = vst.msk [vmem:[#allocation3 + $0x38] sm:$0xff] %vm2870, 0.0
      %2879 = vst.msk [vmem:[#allocation3 + $0x40] sm:$0xff] %vm2870, 0.0
      %2880 = vst.msk [vmem:[#allocation3 + $0x48] sm:$0xff] %vm2870, 0.0
      %2881 = vst.msk [vmem:[#allocation3 + $0x50] sm:$0xff] %vm2870, 0.0
      %2882 = vst.msk [vmem:[#allocation3 + $0x58] sm:$0xff] %vm2870, 0.0
      %2883 = vst.msk [vmem:[#allocation3 + $0x60] sm:$0xff] %vm2870, 0.0
      %2884 = vst.msk [vmem:[#allocation3 + $0x68] sm:$0xff] %vm2870, 0.0
      %2885 = vst.msk [vmem:[#allocation3 + $0x70] sm:$0xff] %vm2870, 0.0
      %2886 = vst.msk [vmem:[#allocation3 + $0x78] sm:$0xff] %vm2870, 0.0
      %2887 = vst.msk [vmem:[#allocation3 + $0x80] sm:$0xff] %vm2870, 0.0
      %2888 = vst.msk [vmem:[#allocation3 + $0x88] sm:$0xff] %vm2870, 0.0
      %2889 = vst.msk [vmem:[#allocation3 + $0x90] sm:$0xff] %vm2870, 0.0
      %2890 = vst.msk [vmem:[#allocation3 + $0x98] sm:$0xff] %vm2870, 0.0
      %2891 = vst.msk [vmem:[#allocation3 + $0xa0] sm:$0xff] %vm2870, 0.0
      %2892 = vst.msk [vmem:[#allocation3 + $0xa8] sm:$0xff] %vm2870, 0.0
      %2893 = vst.msk [vmem:[#allocation3 + $0xb0] sm:$0xff] %vm2870, 0.0
      %2894 = vst.msk [vmem:[#allocation3 + $0xb8] sm:$0xff] %vm2870, 0.0
      %2895 = vst.msk [vmem:[#allocation3 + $0xc0] sm:$0xff] %vm2870, 0.0
      %2896 = vst.msk [vmem:[#allocation3 + $0xc8] sm:$0xff] %vm2870, 0.0
      %2897 = vst.msk [vmem:[#allocation3 + $0xd0] sm:$0xff] %vm2870, 0.0
      %2898 = vst.msk [vmem:[#allocation3 + $0xd8] sm:$0xff] %vm2870, 0.0
      %2899 = vst.msk [vmem:[#allocation3 + $0xe0] sm:$0xff] %vm2870, 0.0
      %2900 = vst.msk [vmem:[#allocation3 + $0xe8] sm:$0xff] %vm2870, 0.0
      %2901 = vst.msk [vmem:[#allocation3 + $0xf0] sm:$0xff] %vm2870, 0.0
      %2902 = vst.msk [vmem:[#allocation3 + $0xf8] sm:$0xff] %vm2870, 0.0
      %2903 = vst.msk [vmem:[#allocation3 + $0x100] sm:$0xff] %vm2870, 0.0
      %2904 = vst.msk [vmem:[#allocation3 + $0x108] sm:$0xff] %vm2870, 0.0
      %2905 = vst.msk [vmem:[#allocation3 + $0x110] sm:$0xff] %vm2870, 0.0
      %2906 = vst.msk [vmem:[#allocation3 + $0x118] sm:$0xff] %vm2870, 0.0
      %2907 = vst.msk [vmem:[#allocation3 + $0x120] sm:$0xff] %vm2870, 0.0
      %2908 = vst.msk [vmem:[#allocation3 + $0x128] sm:$0xff] %vm2870, 0.0
      %2909 = vst.msk [vmem:[#allocation3 + $0x130] sm:$0xff] %vm2870, 0.0
      %2910 = vst.msk [vmem:[#allocation3 + $0x138] sm:$0xff] %vm2870, 0.0
      %2911 = vst.msk [vmem:[#allocation3 + $0x140] sm:$0xff] %vm2870, 0.0
      %2912 = vst.msk [vmem:[#allocation3 + $0x148] sm:$0xff] %vm2870, 0.0
      %2913 = vst.msk [vmem:[#allocation3 + $0x150] sm:$0xff] %vm2870, 0.0
      %2914 = vst.msk [vmem:[#allocation3 + $0x158] sm:$0xff] %vm2870, 0.0
      %2915 = vst.msk [vmem:[#allocation3 + $0x160] sm:$0xff] %vm2870, 0.0
      %2916 = vst.msk [vmem:[#allocation3 + $0x168] sm:$0xff] %vm2870, 0.0
      %2917 = vst.msk [vmem:[#allocation3 + $0x170] sm:$0xff] %vm2870, 0.0
      %2918 = vst.msk [vmem:[#allocation3 + $0x178] sm:$0xff] %vm2870, 0.0
      %2919 = vst.msk [vmem:[#allocation3 + $0x180] sm:$0xff] %vm2870, 0.0
      %2920 = vst.msk [vmem:[#allocation3 + $0x188] sm:$0xff] %vm2870, 0.0
      %2921 = vst.msk [vmem:[#allocation3 + $0x190] sm:$0xff] %vm2870, 0.0
      %2922 = vst.msk [vmem:[#allocation3 + $0x198] sm:$0xff] %vm2870, 0.0
      %2923 = vst.msk [vmem:[#allocation3 + $0x1a0] sm:$0xff] %vm2870, 0.0
      %2924 = vst.msk [vmem:[#allocation3 + $0x1a8] sm:$0xff] %vm2870, 0.0
      %2925 = vst.msk [vmem:[#allocation3 + $0x1b0] sm:$0xff] %vm2870, 0.0
      %2926 = vst.msk [vmem:[#allocation3 + $0x1b8] sm:$0xff] %vm2870, 0.0
      %2927 = vst.msk [vmem:[#allocation3 + $0x1c0] sm:$0xff] %vm2870, 0.0
      %2928 = vst.msk [vmem:[#allocation3 + $0x1c8] sm:$0xff] %vm2870, 0.0
      %2929 = vst.msk [vmem:[#allocation3 + $0x1d0] sm:$0xff] %vm2870, 0.0
      %2930 = vst.msk [vmem:[#allocation3 + $0x1d8] sm:$0xff] %vm2870, 0.0
      %2931 = vst.msk [vmem:[#allocation3 + $0x1e0] sm:$0xff] %vm2870, 0.0
      %2932 = vst.msk [vmem:[#allocation3 + $0x1e8] sm:$0xff] %vm2870, 0.0
      %2933 = vst.msk [vmem:[#allocation3 + $0x1f0] sm:$0xff] %vm2870, 0.0
      %2934 = vst.msk [vmem:[#allocation3 + $0x1f8] sm:$0xff] %vm2870, 0.0
      %2935 = vst.msk [vmem:[#allocation3 + $0x200] sm:$0xff] %vm2870, 0.0
      %2936 = vst.msk [vmem:[#allocation3 + $0x208] sm:$0xff] %vm2870, 0.0
      %2937 = vst.msk [vmem:[#allocation3 + $0x210] sm:$0xff] %vm2870, 0.0
      %2938 = vst.msk [vmem:[#allocation3 + $0x218] sm:$0xff] %vm2870, 0.0
      %2939 = vst.msk [vmem:[#allocation3 + $0x220] sm:$0xff] %vm2870, 0.0
      %2940 = vst.msk [vmem:[#allocation3 + $0x228] sm:$0xff] %vm2870, 0.0
      %2941 = vst.msk [vmem:[#allocation3 + $0x230] sm:$0xff] %vm2870, 0.0
      %2942 = vst.msk [vmem:[#allocation3 + $0x238] sm:$0xff] %vm2870, 0.0
      %s2943 = scalar_lea.vmem [#allocation3], 32
      %2944 = vst.msk [vmem:[%s2943 + $0x8] sm:$0xff] %vm2870, %v2838
      %2945 = vst.msk [vmem:[%s2943 + $0x10] sm:$0xff] %vm2870, %v2839
      %2946 = vst.msk [vmem:[%s2943 + $0x28] sm:$0xff] %vm2870, %v2840
      %2947 = vst.msk [vmem:[%s2943 + $0x30] sm:$0xff] %vm2870, %v2841
      %2948 = vst.msk [vmem:[%s2943 + $0x48] sm:$0xff] %vm2870, %v2842
      %2949 = vst.msk [vmem:[%s2943 + $0x50] sm:$0xff] %vm2870, %v2843
      %2950 = vst.msk [vmem:[%s2943 + $0x68] sm:$0xff] %vm2870, %v2844
      %2951 = vst.msk [vmem:[%s2943 + $0x70] sm:$0xff] %vm2870, %v2845
      %2952 = vst.msk [vmem:[%s2943 + $0x88] sm:$0xff] %vm2870, %v2846
      %2953 = vst.msk [vmem:[%s2943 + $0x90] sm:$0xff] %vm2870, %v2847
      %2954 = vst.msk [vmem:[%s2943 + $0xa8] sm:$0xff] %vm2870, %v2848
      %2955 = vst.msk [vmem:[%s2943 + $0xb0] sm:$0xff] %vm2870, %v2849
      %2956 = vst.msk [vmem:[%s2943 + $0xc8] sm:$0xff] %vm2870, %v2850
      %2957 = vst.msk [vmem:[%s2943 + $0xd0] sm:$0xff] %vm2870, %v2851
      %2958 = vst.msk [vmem:[%s2943 + $0xe8] sm:$0xff] %vm2870, %v2852
      %2959 = vst.msk [vmem:[%s2943 + $0xf0] sm:$0xff] %vm2870, %v2853
      %2960 = vst.msk [vmem:[%s2943 + $0x108] sm:$0xff] %vm2870, %v2854
      %2961 = vst.msk [vmem:[%s2943 + $0x110] sm:$0xff] %vm2870, %v2855
      %2962 = vst.msk [vmem:[%s2943 + $0x128] sm:$0xff] %vm2870, %v2856
      %2963 = vst.msk [vmem:[%s2943 + $0x130] sm:$0xff] %vm2870, %v2857
      %2964 = vst.msk [vmem:[%s2943 + $0x148] sm:$0xff] %vm2870, %v2858
      %2965 = vst.msk [vmem:[%s2943 + $0x150] sm:$0xff] %vm2870, %v2859
      %2966 = vst.msk [vmem:[%s2943 + $0x168] sm:$0xff] %vm2870, %v2860
      %2967 = vst.msk [vmem:[%s2943 + $0x170] sm:$0xff] %vm2870, %v2861
      %2968 = vst.msk [vmem:[%s2943 + $0x188] sm:$0xff] %vm2870, %v2862
      %2969 = vst.msk [vmem:[%s2943 + $0x190] sm:$0xff] %vm2870, %v2863
      %2970 = vst.msk [vmem:[%s2943 + $0x1a8] sm:$0xff] %vm2870, %v2864
      %2971 = vst.msk [vmem:[%s2943 + $0x1b0] sm:$0xff] %vm2870, %v2865
      %2972 = vst.msk [vmem:[%s2943 + $0x1c8] sm:$0xff] %vm2870, %v2866
      %2973 = vst.msk [vmem:[%s2943 + $0x1d0] sm:$0xff] %vm2870, %v2867
      %2974 = vst.msk [vmem:[%s2943 + $0x1e8] sm:$0xff] %vm2870, %v2868
      %2975 = vst.msk [vmem:[%s2943 + $0x1f0] sm:$0xff] %vm2870, %v2869
      %v2976 = vld [vmem:[#allocation3 + $0x7] sm:$0xff]
      %v2977 = vld [vmem:[#allocation3 + $0xf] sm:$0xff]
      %v2978 = vld [vmem:[#allocation3 + $0x27] sm:$0xff]
      %v2979 = vld [vmem:[#allocation3 + $0x2f] sm:$0xff]
      %v2980 = vld [vmem:[#allocation3 + $0x47] sm:$0xff]
      %v2981 = vld [vmem:[#allocation3 + $0x4f] sm:$0xff]
      %v2982 = vld [vmem:[#allocation3 + $0x67] sm:$0xff]
      %v2983 = vld [vmem:[#allocation3 + $0x6f] sm:$0xff]
      %v2984 = vld [vmem:[#allocation3 + $0x87] sm:$0xff]
      %v2985 = vld [vmem:[#allocation3 + $0x8f] sm:$0xff]
      %v2986 = vld [vmem:[#allocation3 + $0xa7] sm:$0xff]
      %v2987 = vld [vmem:[#allocation3 + $0xaf] sm:$0xff]
      %v2988 = vld [vmem:[#allocation3 + $0xc7] sm:$0xff]
      %v2989 = vld [vmem:[#allocation3 + $0xcf] sm:$0xff]
      %v2990 = vld [vmem:[#allocation3 + $0xe7] sm:$0xff]
      %v2991 = vld [vmem:[#allocation3 + $0xef] sm:$0xff]
      %v2992 = vld [vmem:[#allocation3 + $0x107] sm:$0xff]
      %v2993 = vld [vmem:[#allocation3 + $0x10f] sm:$0xff]
      %v2994 = vld [vmem:[#allocation3 + $0x127] sm:$0xff]
      %v2995 = vld [vmem:[#allocation3 + $0x12f] sm:$0xff]
      %v2996 = vld [vmem:[#allocation3 + $0x147] sm:$0xff]
      %v2997 = vld [vmem:[#allocation3 + $0x14f] sm:$0xff]
      %v2998 = vld [vmem:[#allocation3 + $0x167] sm:$0xff]
      %v2999 = vld [vmem:[#allocation3 + $0x16f] sm:$0xff]
      %v3000 = vld [vmem:[#allocation3 + $0x187] sm:$0xff]
      %v3001 = vld [vmem:[#allocation3 + $0x18f] sm:$0xff]
      %v3002 = vld [vmem:[#allocation3 + $0x1a7] sm:$0xff]
      %v3003 = vld [vmem:[#allocation3 + $0x1af] sm:$0xff]
      %v3004 = vld [vmem:[#allocation3 + $0x1c7] sm:$0xff]
      %v3005 = vld [vmem:[#allocation3 + $0x1cf] sm:$0xff]
      %v3006 = vld [vmem:[#allocation3 + $0x1e7] sm:$0xff]
      %v3007 = vld [vmem:[#allocation3 + $0x1ef] sm:$0xff]
      %v3008 = vld [vmem:[%s3] sm:$0xff]
      %v3009 = vld [vmem:[#allocation3 + $0x8] sm:$0xff]
      %v3010 = vld [vmem:[#allocation3 + $0x10] sm:$0xff]
      %v3011 = vld [vmem:[#allocation3 + $0x28] sm:$0xff]
      %v3012 = vld [vmem:[#allocation3 + $0x30] sm:$0xff]
      %v3013 = vld [vmem:[#allocation3 + $0x48] sm:$0xff]
      %v3014 = vld [vmem:[#allocation3 + $0x50] sm:$0xff]
      %v3015 = vld [vmem:[#allocation3 + $0x68] sm:$0xff]
      %v3016 = vld [vmem:[#allocation3 + $0x70] sm:$0xff]
      %v3017 = vld [vmem:[#allocation3 + $0x88] sm:$0xff]
      %v3018 = vld [vmem:[#allocation3 + $0x90] sm:$0xff]
      %v3019 = vld [vmem:[#allocation3 + $0xa8] sm:$0xff]
      %v3020 = vld [vmem:[#allocation3 + $0xb0] sm:$0xff]
      %v3021 = vld [vmem:[#allocation3 + $0xc8] sm:$0xff]
      %v3022 = vld [vmem:[#allocation3 + $0xd0] sm:$0xff]
      %v3023 = vld [vmem:[#allocation3 + $0xe8] sm:$0xff]
      %v3024 = vld [vmem:[#allocation3 + $0xf0] sm:$0xff]
      %v3025 = vld [vmem:[#allocation3 + $0x108] sm:$0xff]
      %v3026 = vld [vmem:[#allocation3 + $0x110] sm:$0xff]
      %v3027 = vld [vmem:[#allocation3 + $0x128] sm:$0xff]
      %v3028 = vld [vmem:[#allocation3 + $0x130] sm:$0xff]
      %v3029 = vld [vmem:[#allocation3 + $0x148] sm:$0xff]
      %v3030 = vld [vmem:[#allocation3 + $0x150] sm:$0xff]
      %v3031 = vld [vmem:[#allocation3 + $0x168] sm:$0xff]
      %v3032 = vld [vmem:[#allocation3 + $0x170] sm:$0xff]
      %v3033 = vld [vmem:[#allocation3 + $0x188] sm:$0xff]
      %v3034 = vld [vmem:[#allocation3 + $0x190] sm:$0xff]
      %v3035 = vld [vmem:[#allocation3 + $0x1a8] sm:$0xff]
      %v3036 = vld [vmem:[#allocation3 + $0x1b0] sm:$0xff]
      %v3037 = vld [vmem:[#allocation3 + $0x1c8] sm:$0xff]
      %v3038 = vld [vmem:[#allocation3 + $0x1d0] sm:$0xff]
      %v3039 = vld [vmem:[#allocation3 + $0x1e8] sm:$0xff]
      %v3040 = vld [vmem:[#allocation3 + $0x1f0] sm:$0xff]
      %s3041 = scalar_lea.vmem %s3, 8
      %v3042 = vld [vmem:[%s3041] sm:$0xff]
      %v3044 = vsel %vm2870, %v3009, 0
      %v3047 = vsel %vm2870, %v3010, 0
      %v3050 = vsel %vm2870, %v3011, 0
      %v3053 = vsel %vm2870, %v3012, 0
      %v3056 = vsel %vm2870, %v3013, 0
      %v3059 = vsel %vm2870, %v3014, 0
      %v3062 = vsel %vm2870, %v3015, 0
      %v3065 = vsel %vm2870, %v3016, 0
      %v3068 = vsel %vm2870, %v3017, 0
      %v3071 = vsel %vm2870, %v3018, 0
      %v3074 = vsel %vm2870, %v3019, 0
      %v3077 = vsel %vm2870, %v3020, 0
      %v3080 = vsel %vm2870, %v3021, 0
      %v3083 = vsel %vm2870, %v3022, 0
      %v3086 = vsel %vm2870, %v3023, 0
      %v3089 = vsel %vm2870, %v3024, 0
      %v3092 = vsel %vm2870, %v3025, 0
      %v3095 = vsel %vm2870, %v3026, 0
      %v3098 = vsel %vm2870, %v3027, 0
      %v3101 = vsel %vm2870, %v3028, 0
      %v3104 = vsel %vm2870, %v3029, 0
      %v3107 = vsel %vm2870, %v3030, 0
      %v3110 = vsel %vm2870, %v3031, 0
      %v3113 = vsel %vm2870, %v3032, 0
      %v3116 = vsel %vm2870, %v3033, 0
      %v3119 = vsel %vm2870, %v3034, 0
      %v3122 = vsel %vm2870, %v3035, 0
      %v3125 = vsel %vm2870, %v3036, 0
      %v3128 = vsel %vm2870, %v3037, 0
      %v3131 = vsel %vm2870, %v3038, 0
      %v3134 = vsel %vm2870, %v3039, 0
      %v3137 = vsel %vm2870, %v3040, 0
      %3139 = vmatpush.msra.mxu0 0.0
      %3140 = vmatpush.msra.mxu0 0.0
      %3141 = vmatpush.msra.mxu0 0.0
      %3142 = vmatpush.msra.mxu0 0.0
      %3143 = vmatpush.msra.mxu0 0.0
      %3144 = vmatpush.msra.mxu0 0.0
      %3145 = vmatpush.msra.mxu0 0.0
      %3146 = vmatpush.msra.mxu0 0.0
      %3147 = vmatpush.msra.mxu0 0.0
      %3148 = vmatpush.msra.mxu0 0.0
      %3149 = vmatpush.msra.mxu0 0.0
      %3150 = vmatpush.msra.mxu0 0.0
      %3151 = vmatpush.msra.mxu0 0.0
      %3152 = vmatpush.msra.mxu0 0.0
      %3153 = vmatpush.msra.mxu0 0.0
      %3154 = vmatpush.msra.mxu0 %v3042
      %3155 = vmatmul.f32.gmra.mxu0 %v3044
      %v3156 = vpop.f32.mrf.mxu0
      %v3157 = vadd.f32 0.0, %v3156
      %3158 = vmatmul.f32.gmra.mxu0 %v3047
      %v3159 = vpop.f32.mrf.mxu0
      %v3160 = vadd.f32 0.0, %v3159
      %3161 = vmatmul.f32.gmra.mxu0 %v3050
      %v3162 = vpop.f32.mrf.mxu0
      %v3163 = vadd.f32 0.0, %v3162
      %3164 = vmatmul.f32.gmra.mxu0 %v3053
      %v3165 = vpop.f32.mrf.mxu0
      %v3166 = vadd.f32 0.0, %v3165
      %3167 = vmatmul.f32.gmra.mxu0 %v3056
      %v3168 = vpop.f32.mrf.mxu0
      %v3169 = vadd.f32 0.0, %v3168
      %3170 = vmatmul.f32.gmra.mxu0 %v3059
      %v3171 = vpop.f32.mrf.mxu0
      %v3172 = vadd.f32 0.0, %v3171
      %3173 = vmatmul.f32.gmra.mxu0 %v3062
      %v3174 = vpop.f32.mrf.mxu0
      %v3175 = vadd.f32 0.0, %v3174
      %3176 = vmatmul.f32.gmra.mxu0 %v3065
      %v3177 = vpop.f32.mrf.mxu0
      %v3178 = vadd.f32 0.0, %v3177
      %3179 = vmatmul.f32.gmra.mxu0 %v3068
      %v3180 = vpop.f32.mrf.mxu0
      %v3181 = vadd.f32 0.0, %v3180
      %3182 = vmatmul.f32.gmra.mxu0 %v3071
      %v3183 = vpop.f32.mrf.mxu0
      %v3184 = vadd.f32 0.0, %v3183
      %3185 = vmatmul.f32.gmra.mxu0 %v3074
      %v3186 = vpop.f32.mrf.mxu0
      %v3187 = vadd.f32 0.0, %v3186
      %3188 = vmatmul.f32.gmra.mxu0 %v3077
      %v3189 = vpop.f32.mrf.mxu0
      %v3190 = vadd.f32 0.0, %v3189
      %3191 = vmatmul.f32.gmra.mxu0 %v3080
      %v3192 = vpop.f32.mrf.mxu0
      %v3193 = vadd.f32 0.0, %v3192
      %3194 = vmatmul.f32.gmra.mxu0 %v3083
      %v3195 = vpop.f32.mrf.mxu0
      %v3196 = vadd.f32 0.0, %v3195
      %3197 = vmatmul.f32.gmra.mxu0 %v3086
      %v3198 = vpop.f32.mrf.mxu0
      %v3199 = vadd.f32 0.0, %v3198
      %3200 = vmatmul.f32.gmra.mxu0 %v3089
      %v3201 = vpop.f32.mrf.mxu0
      %v3202 = vadd.f32 0.0, %v3201
      %3203 = vmatmul.f32.gmra.mxu0 %v3092
      %v3204 = vpop.f32.mrf.mxu0
      %v3205 = vadd.f32 0.0, %v3204
      %3206 = vmatmul.f32.gmra.mxu0 %v3095
      %v3207 = vpop.f32.mrf.mxu0
      %v3208 = vadd.f32 0.0, %v3207
      %3209 = vmatmul.f32.gmra.mxu0 %v3098
      %v3210 = vpop.f32.mrf.mxu0
      %v3211 = vadd.f32 0.0, %v3210
      %3212 = vmatmul.f32.gmra.mxu0 %v3101
      %v3213 = vpop.f32.mrf.mxu0
      %v3214 = vadd.f32 0.0, %v3213
      %3215 = vmatmul.f32.gmra.mxu0 %v3104
      %v3216 = vpop.f32.mrf.mxu0
      %v3217 = vadd.f32 0.0, %v3216
      %3218 = vmatmul.f32.gmra.mxu0 %v3107
      %v3219 = vpop.f32.mrf.mxu0
      %v3220 = vadd.f32 0.0, %v3219
      %3221 = vmatmul.f32.gmra.mxu0 %v3110
      %v3222 = vpop.f32.mrf.mxu0
      %v3223 = vadd.f32 0.0, %v3222
      %3224 = vmatmul.f32.gmra.mxu0 %v3113
      %v3225 = vpop.f32.mrf.mxu0
      %v3226 = vadd.f32 0.0, %v3225
      %3227 = vmatmul.f32.gmra.mxu0 %v3116
      %v3228 = vpop.f32.mrf.mxu0
      %v3229 = vadd.f32 0.0, %v3228
      %3230 = vmatmul.f32.gmra.mxu0 %v3119
      %v3231 = vpop.f32.mrf.mxu0
      %v3232 = vadd.f32 0.0, %v3231
      %3233 = vmatmul.f32.gmra.mxu0 %v3122
      %v3234 = vpop.f32.mrf.mxu0
      %v3235 = vadd.f32 0.0, %v3234
      %3236 = vmatmul.f32.gmra.mxu0 %v3125
      %v3237 = vpop.f32.mrf.mxu0
      %v3238 = vadd.f32 0.0, %v3237
      %3239 = vmatmul.f32.gmra.mxu0 %v3128
      %v3240 = vpop.f32.mrf.mxu0
      %v3241 = vadd.f32 0.0, %v3240
      %3242 = vmatmul.f32.gmra.mxu0 %v3131
      %v3243 = vpop.f32.mrf.mxu0
      %v3244 = vadd.f32 0.0, %v3243
      %3245 = vmatmul.f32.gmra.mxu0 %v3134
      %v3246 = vpop.f32.mrf.mxu0
      %v3247 = vadd.f32 0.0, %v3246
      %3248 = vmatmul.f32.gmra.mxu0 %v3137
      %v3249 = vpop.f32.mrf.mxu0
      %v3250 = vadd.f32 0.0, %v3249
      %3251 = vdwg.mxu0
      %v3253 = vsel %vm2870, %v2976, 0
      %v3256 = vsel %vm2870, %v2977, 0
      %v3259 = vsel %vm2870, %v2978, 0
      %v3262 = vsel %vm2870, %v2979, 0
      %v3265 = vsel %vm2870, %v2980, 0
      %v3268 = vsel %vm2870, %v2981, 0
      %v3271 = vsel %vm2870, %v2982, 0
      %v3274 = vsel %vm2870, %v2983, 0
      %v3277 = vsel %vm2870, %v2984, 0
      %v3280 = vsel %vm2870, %v2985, 0
      %v3283 = vsel %vm2870, %v2986, 0
      %v3286 = vsel %vm2870, %v2987, 0
      %v3289 = vsel %vm2870, %v2988, 0
      %v3292 = vsel %vm2870, %v2989, 0
      %v3295 = vsel %vm2870, %v2990, 0
      %v3298 = vsel %vm2870, %v2991, 0
      %v3301 = vsel %vm2870, %v2992, 0
      %v3304 = vsel %vm2870, %v2993, 0
      %v3307 = vsel %vm2870, %v2994, 0
      %v3310 = vsel %vm2870, %v2995, 0
      %v3313 = vsel %vm2870, %v2996, 0
      %v3316 = vsel %vm2870, %v2997, 0
      %v3319 = vsel %vm2870, %v2998, 0
      %v3322 = vsel %vm2870, %v2999, 0
      %v3325 = vsel %vm2870, %v3000, 0
      %v3328 = vsel %vm2870, %v3001, 0
      %v3331 = vsel %vm2870, %v3002, 0
      %v3334 = vsel %vm2870, %v3003, 0
      %v3337 = vsel %vm2870, %v3004, 0
      %v3340 = vsel %vm2870, %v3005, 0
      %v3343 = vsel %vm2870, %v3006, 0
      %v3346 = vsel %vm2870, %v3007, 0
      %3348 = vmatpush.msra.mxu0 0.0
      %3349 = vmatpush.msra.mxu0 0.0
      %3350 = vmatpush.msra.mxu0 0.0
      %3351 = vmatpush.msra.mxu0 0.0
      %3352 = vmatpush.msra.mxu0 0.0
      %3353 = vmatpush.msra.mxu0 0.0
      %3354 = vmatpush.msra.mxu0 0.0
      %3355 = vmatpush.msra.mxu0 0.0
      %3356 = vmatpush.msra.mxu0 0.0
      %3357 = vmatpush.msra.mxu0 0.0
      %3358 = vmatpush.msra.mxu0 0.0
      %3359 = vmatpush.msra.mxu0 0.0
      %3360 = vmatpush.msra.mxu0 0.0
      %3361 = vmatpush.msra.mxu0 0.0
      %3362 = vmatpush.msra.mxu0 0.0
      %3363 = vmatpush.msra.mxu0 %v3008
      %3364 = vmatmul.f32.gmra.mxu0 %v3253
      %v3365 = vpop.f32.mrf.mxu0
      %v3366 = vadd.f32 %v3157, %v3365
      %3367 = vmatmul.f32.gmra.mxu0 %v3256
      %v3368 = vpop.f32.mrf.mxu0
      %v3369 = vadd.f32 %v3160, %v3368
      %3370 = vmatmul.f32.gmra.mxu0 %v3259
      %v3371 = vpop.f32.mrf.mxu0
      %v3372 = vadd.f32 %v3163, %v3371
      %3373 = vmatmul.f32.gmra.mxu0 %v3262
      %v3374 = vpop.f32.mrf.mxu0
      %v3375 = vadd.f32 %v3166, %v3374
      %3376 = vmatmul.f32.gmra.mxu0 %v3265
      %v3377 = vpop.f32.mrf.mxu0
      %v3378 = vadd.f32 %v3169, %v3377
      %3379 = vmatmul.f32.gmra.mxu0 %v3268
      %v3380 = vpop.f32.mrf.mxu0
      %v3381 = vadd.f32 %v3172, %v3380
      %3382 = vmatmul.f32.gmra.mxu0 %v3271
      %v3383 = vpop.f32.mrf.mxu0
      %v3384 = vadd.f32 %v3175, %v3383
      %3385 = vmatmul.f32.gmra.mxu0 %v3274
      %v3386 = vpop.f32.mrf.mxu0
      %v3387 = vadd.f32 %v3178, %v3386
      %3388 = vmatmul.f32.gmra.mxu0 %v3277
      %v3389 = vpop.f32.mrf.mxu0
      %v3390 = vadd.f32 %v3181, %v3389
      %3391 = vmatmul.f32.gmra.mxu0 %v3280
      %v3392 = vpop.f32.mrf.mxu0
      %v3393 = vadd.f32 %v3184, %v3392
      %3394 = vmatmul.f32.gmra.mxu0 %v3283
      %v3395 = vpop.f32.mrf.mxu0
      %v3396 = vadd.f32 %v3187, %v3395
      %3397 = vmatmul.f32.gmra.mxu0 %v3286
      %v3398 = vpop.f32.mrf.mxu0
      %v3399 = vadd.f32 %v3190, %v3398
      %3400 = vmatmul.f32.gmra.mxu0 %v3289
      %v3401 = vpop.f32.mrf.mxu0
      %v3402 = vadd.f32 %v3193, %v3401
      %3403 = vmatmul.f32.gmra.mxu0 %v3292
      %v3404 = vpop.f32.mrf.mxu0
      %v3405 = vadd.f32 %v3196, %v3404
      %3406 = vmatmul.f32.gmra.mxu0 %v3295
      %v3407 = vpop.f32.mrf.mxu0
      %v3408 = vadd.f32 %v3199, %v3407
      %3409 = vmatmul.f32.gmra.mxu0 %v3298
      %v3410 = vpop.f32.mrf.mxu0
      %v3411 = vadd.f32 %v3202, %v3410
      %3412 = vmatmul.f32.gmra.mxu0 %v3301
      %v3413 = vpop.f32.mrf.mxu0
      %v3414 = vadd.f32 %v3205, %v3413
      %3415 = vmatmul.f32.gmra.mxu0 %v3304
      %v3416 = vpop.f32.mrf.mxu0
      %v3417 = vadd.f32 %v3208, %v3416
      %3418 = vmatmul.f32.gmra.mxu0 %v3307
      %v3419 = vpop.f32.mrf.mxu0
      %v3420 = vadd.f32 %v3211, %v3419
      %3421 = vmatmul.f32.gmra.mxu0 %v3310
      %v3422 = vpop.f32.mrf.mxu0
      %v3423 = vadd.f32 %v3214, %v3422
      %3424 = vmatmul.f32.gmra.mxu0 %v3313
      %v3425 = vpop.f32.mrf.mxu0
      %v3426 = vadd.f32 %v3217, %v3425
      %3427 = vmatmul.f32.gmra.mxu0 %v3316
      %v3428 = vpop.f32.mrf.mxu0
      %v3429 = vadd.f32 %v3220, %v3428
      %3430 = vmatmul.f32.gmra.mxu0 %v3319
      %v3431 = vpop.f32.mrf.mxu0
      %v3432 = vadd.f32 %v3223, %v3431
      %3433 = vmatmul.f32.gmra.mxu0 %v3322
      %v3434 = vpop.f32.mrf.mxu0
      %v3435 = vadd.f32 %v3226, %v3434
      %3436 = vmatmul.f32.gmra.mxu0 %v3325
      %v3437 = vpop.f32.mrf.mxu0
      %v3438 = vadd.f32 %v3229, %v3437
      %3439 = vmatmul.f32.gmra.mxu0 %v3328
      %v3440 = vpop.f32.mrf.mxu0
      %v3441 = vadd.f32 %v3232, %v3440
      %3442 = vmatmul.f32.gmra.mxu0 %v3331
      %v3443 = vpop.f32.mrf.mxu0
      %v3444 = vadd.f32 %v3235, %v3443
      %3445 = vmatmul.f32.gmra.mxu0 %v3334
      %v3446 = vpop.f32.mrf.mxu0
      %v3447 = vadd.f32 %v3238, %v3446
      %3448 = vmatmul.f32.gmra.mxu0 %v3337
      %v3449 = vpop.f32.mrf.mxu0
      %v3450 = vadd.f32 %v3241, %v3449
      %3451 = vmatmul.f32.gmra.mxu0 %v3340
      %v3452 = vpop.f32.mrf.mxu0
      %v3453 = vadd.f32 %v3244, %v3452
      %3454 = vmatmul.f32.gmra.mxu0 %v3343
      %v3455 = vpop.f32.mrf.mxu0
      %v3456 = vadd.f32 %v3247, %v3455
      %3457 = vmatmul.f32.gmra.mxu0 %v3346
      %v3458 = vpop.f32.mrf.mxu0
      %v3459 = vadd.f32 %v3250, %v3458
      %3460 = vdwg.mxu0
      %v3461 = vld [vmem:[#allocation3 + $0x9] sm:$0xff]
      %v3462 = vld [vmem:[#allocation3 + $0x11] sm:$0xff]
      %v3463 = vld [vmem:[#allocation3 + $0x29] sm:$0xff]
      %v3464 = vld [vmem:[#allocation3 + $0x31] sm:$0xff]
      %v3465 = vld [vmem:[#allocation3 + $0x49] sm:$0xff]
      %v3466 = vld [vmem:[#allocation3 + $0x51] sm:$0xff]
      %v3467 = vld [vmem:[#allocation3 + $0x69] sm:$0xff]
      %v3468 = vld [vmem:[#allocation3 + $0x71] sm:$0xff]
      %v3469 = vld [vmem:[#allocation3 + $0x89] sm:$0xff]
      %v3470 = vld [vmem:[#allocation3 + $0x91] sm:$0xff]
      %v3471 = vld [vmem:[#allocation3 + $0xa9] sm:$0xff]
      %v3472 = vld [vmem:[#allocation3 + $0xb1] sm:$0xff]
      %v3473 = vld [vmem:[#allocation3 + $0xc9] sm:$0xff]
      %v3474 = vld [vmem:[#allocation3 + $0xd1] sm:$0xff]
      %v3475 = vld [vmem:[#allocation3 + $0xe9] sm:$0xff]
      %v3476 = vld [vmem:[#allocation3 + $0xf1] sm:$0xff]
      %v3477 = vld [vmem:[#allocation3 + $0x109] sm:$0xff]
      %v3478 = vld [vmem:[#allocation3 + $0x111] sm:$0xff]
      %v3479 = vld [vmem:[#allocation3 + $0x129] sm:$0xff]
      %v3480 = vld [vmem:[#allocation3 + $0x131] sm:$0xff]
      %v3481 = vld [vmem:[#allocation3 + $0x149] sm:$0xff]
      %v3482 = vld [vmem:[#allocation3 + $0x151] sm:$0xff]
      %v3483 = vld [vmem:[#allocation3 + $0x169] sm:$0xff]
      %v3484 = vld [vmem:[#allocation3 + $0x171] sm:$0xff]
      %v3485 = vld [vmem:[#allocation3 + $0x189] sm:$0xff]
      %v3486 = vld [vmem:[#allocation3 + $0x191] sm:$0xff]
      %v3487 = vld [vmem:[#allocation3 + $0x1a9] sm:$0xff]
      %v3488 = vld [vmem:[#allocation3 + $0x1b1] sm:$0xff]
      %v3489 = vld [vmem:[#allocation3 + $0x1c9] sm:$0xff]
      %v3490 = vld [vmem:[#allocation3 + $0x1d1] sm:$0xff]
      %v3491 = vld [vmem:[#allocation3 + $0x1e9] sm:$0xff]
      %v3492 = vld [vmem:[#allocation3 + $0x1f1] sm:$0xff]
      %s3493 = scalar_lea.vmem %s3, 16
      %v3494 = vld [vmem:[%s3493] sm:$0xff]
      %v3496 = vsel %vm2870, %v3461, 0
      %v3499 = vsel %vm2870, %v3462, 0
      %v3502 = vsel %vm2870, %v3463, 0
      %v3505 = vsel %vm2870, %v3464, 0
      %v3508 = vsel %vm2870, %v3465, 0
      %v3511 = vsel %vm2870, %v3466, 0
      %v3514 = vsel %vm2870, %v3467, 0
      %v3517 = vsel %vm2870, %v3468, 0
      %v3520 = vsel %vm2870, %v3469, 0
      %v3523 = vsel %vm2870, %v3470, 0
      %v3526 = vsel %vm2870, %v3471, 0
      %v3529 = vsel %vm2870, %v3472, 0
      %v3532 = vsel %vm2870, %v3473, 0
      %v3535 = vsel %vm2870, %v3474, 0
      %v3538 = vsel %vm2870, %v3475, 0
      %v3541 = vsel %vm2870, %v3476, 0
      %v3544 = vsel %vm2870, %v3477, 0
      %v3547 = vsel %vm2870, %v3478, 0
      %v3550 = vsel %vm2870, %v3479, 0
      %v3553 = vsel %vm2870, %v3480, 0
      %v3556 = vsel %vm2870, %v3481, 0
      %v3559 = vsel %vm2870, %v3482, 0
      %v3562 = vsel %vm2870, %v3483, 0
      %v3565 = vsel %vm2870, %v3484, 0
      %v3568 = vsel %vm2870, %v3485, 0
      %v3571 = vsel %vm2870, %v3486, 0
      %v3574 = vsel %vm2870, %v3487, 0
      %v3577 = vsel %vm2870, %v3488, 0
      %v3580 = vsel %vm2870, %v3489, 0
      %v3583 = vsel %vm2870, %v3490, 0
      %v3586 = vsel %vm2870, %v3491, 0
      %v3589 = vsel %vm2870, %v3492, 0
      %3591 = vmatpush.msra.mxu0 0.0
      %3592 = vmatpush.msra.mxu0 0.0
      %3593 = vmatpush.msra.mxu0 0.0
      %3594 = vmatpush.msra.mxu0 0.0
      %3595 = vmatpush.msra.mxu0 0.0
      %3596 = vmatpush.msra.mxu0 0.0
      %3597 = vmatpush.msra.mxu0 0.0
      %3598 = vmatpush.msra.mxu0 0.0
      %3599 = vmatpush.msra.mxu0 0.0
      %3600 = vmatpush.msra.mxu0 0.0
      %3601 = vmatpush.msra.mxu0 0.0
      %3602 = vmatpush.msra.mxu0 0.0
      %3603 = vmatpush.msra.mxu0 0.0
      %3604 = vmatpush.msra.mxu0 0.0
      %3605 = vmatpush.msra.mxu0 0.0
      %3606 = vmatpush.msra.mxu0 %v3494
      %3607 = vmatmul.f32.gmra.mxu0 %v3496
      %v3608 = vpop.f32.mrf.mxu0
      %v3609 = vadd.f32 0.0, %v3608
      %3610 = vmatmul.f32.gmra.mxu0 %v3499
      %v3611 = vpop.f32.mrf.mxu0
      %v3612 = vadd.f32 0.0, %v3611
      %3613 = vmatmul.f32.gmra.mxu0 %v3502
      %v3614 = vpop.f32.mrf.mxu0
      %v3615 = vadd.f32 0.0, %v3614
      %3616 = vmatmul.f32.gmra.mxu0 %v3505
      %v3617 = vpop.f32.mrf.mxu0
      %v3618 = vadd.f32 0.0, %v3617
      %3619 = vmatmul.f32.gmra.mxu0 %v3508
      %v3620 = vpop.f32.mrf.mxu0
      %v3621 = vadd.f32 0.0, %v3620
      %3622 = vmatmul.f32.gmra.mxu0 %v3511
      %v3623 = vpop.f32.mrf.mxu0
      %v3624 = vadd.f32 0.0, %v3623
      %3625 = vmatmul.f32.gmra.mxu0 %v3514
      %v3626 = vpop.f32.mrf.mxu0
      %v3627 = vadd.f32 0.0, %v3626
      %3628 = vmatmul.f32.gmra.mxu0 %v3517
      %v3629 = vpop.f32.mrf.mxu0
      %v3630 = vadd.f32 0.0, %v3629
      %3631 = vmatmul.f32.gmra.mxu0 %v3520
      %v3632 = vpop.f32.mrf.mxu0
      %v3633 = vadd.f32 0.0, %v3632
      %3634 = vmatmul.f32.gmra.mxu0 %v3523
      %v3635 = vpop.f32.mrf.mxu0
      %v3636 = vadd.f32 0.0, %v3635
      %3637 = vmatmul.f32.gmra.mxu0 %v3526
      %v3638 = vpop.f32.mrf.mxu0
      %v3639 = vadd.f32 0.0, %v3638
      %3640 = vmatmul.f32.gmra.mxu0 %v3529
      %v3641 = vpop.f32.mrf.mxu0
      %v3642 = vadd.f32 0.0, %v3641
      %3643 = vmatmul.f32.gmra.mxu0 %v3532
      %v3644 = vpop.f32.mrf.mxu0
      %v3645 = vadd.f32 0.0, %v3644
      %3646 = vmatmul.f32.gmra.mxu0 %v3535
      %v3647 = vpop.f32.mrf.mxu0
      %v3648 = vadd.f32 0.0, %v3647
      %3649 = vmatmul.f32.gmra.mxu0 %v3538
      %v3650 = vpop.f32.mrf.mxu0
      %v3651 = vadd.f32 0.0, %v3650
      %3652 = vmatmul.f32.gmra.mxu0 %v3541
      %v3653 = vpop.f32.mrf.mxu0
      %v3654 = vadd.f32 0.0, %v3653
      %3655 = vmatmul.f32.gmra.mxu0 %v3544
      %v3656 = vpop.f32.mrf.mxu0
      %v3657 = vadd.f32 0.0, %v3656
      %3658 = vmatmul.f32.gmra.mxu0 %v3547
      %v3659 = vpop.f32.mrf.mxu0
      %v3660 = vadd.f32 0.0, %v3659
      %3661 = vmatmul.f32.gmra.mxu0 %v3550
      %v3662 = vpop.f32.mrf.mxu0
      %v3663 = vadd.f32 0.0, %v3662
      %3664 = vmatmul.f32.gmra.mxu0 %v3553
      %v3665 = vpop.f32.mrf.mxu0
      %v3666 = vadd.f32 0.0, %v3665
      %3667 = vmatmul.f32.gmra.mxu0 %v3556
      %v3668 = vpop.f32.mrf.mxu0
      %v3669 = vadd.f32 0.0, %v3668
      %3670 = vmatmul.f32.gmra.mxu0 %v3559
      %v3671 = vpop.f32.mrf.mxu0
      %v3672 = vadd.f32 0.0, %v3671
      %3673 = vmatmul.f32.gmra.mxu0 %v3562
      %v3674 = vpop.f32.mrf.mxu0
      %v3675 = vadd.f32 0.0, %v3674
      %3676 = vmatmul.f32.gmra.mxu0 %v3565
      %v3677 = vpop.f32.mrf.mxu0
      %v3678 = vadd.f32 0.0, %v3677
      %3679 = vmatmul.f32.gmra.mxu0 %v3568
      %v3680 = vpop.f32.mrf.mxu0
      %v3681 = vadd.f32 0.0, %v3680
      %3682 = vmatmul.f32.gmra.mxu0 %v3571
      %v3683 = vpop.f32.mrf.mxu0
      %v3684 = vadd.f32 0.0, %v3683
      %3685 = vmatmul.f32.gmra.mxu0 %v3574
      %v3686 = vpop.f32.mrf.mxu0
      %v3687 = vadd.f32 0.0, %v3686
      %3688 = vmatmul.f32.gmra.mxu0 %v3577
      %v3689 = vpop.f32.mrf.mxu0
      %v3690 = vadd.f32 0.0, %v3689
      %3691 = vmatmul.f32.gmra.mxu0 %v3580
      %v3692 = vpop.f32.mrf.mxu0
      %v3693 = vadd.f32 0.0, %v3692
      %3694 = vmatmul.f32.gmra.mxu0 %v3583
      %v3695 = vpop.f32.mrf.mxu0
      %v3696 = vadd.f32 0.0, %v3695
      %3697 = vmatmul.f32.gmra.mxu0 %v3586
      %v3698 = vpop.f32.mrf.mxu0
      %v3699 = vadd.f32 0.0, %v3698
      %3700 = vmatmul.f32.gmra.mxu0 %v3589
      %v3701 = vpop.f32.mrf.mxu0
      %v3702 = vadd.f32 0.0, %v3701
      %3703 = vdwg.mxu0
      %v3704 = vadd.f32 %v3366, %v3609
      %v3705 = vadd.f32 %v3369, %v3612
      %v3706 = vadd.f32 %v3372, %v3615
      %v3707 = vadd.f32 %v3375, %v3618
      %v3708 = vadd.f32 %v3378, %v3621
      %v3709 = vadd.f32 %v3381, %v3624
      %v3710 = vadd.f32 %v3384, %v3627
      %v3711 = vadd.f32 %v3387, %v3630
      %v3712 = vadd.f32 %v3390, %v3633
      %v3713 = vadd.f32 %v3393, %v3636
      %v3714 = vadd.f32 %v3396, %v3639
      %v3715 = vadd.f32 %v3399, %v3642
      %v3716 = vadd.f32 %v3402, %v3645
      %v3717 = vadd.f32 %v3405, %v3648
      %v3718 = vadd.f32 %v3408, %v3651
      %v3719 = vadd.f32 %v3411, %v3654
      %v3720 = vadd.f32 %v3414, %v3657
      %v3721 = vadd.f32 %v3417, %v3660
      %v3722 = vadd.f32 %v3420, %v3663
      %v3723 = vadd.f32 %v3423, %v3666
      %v3724 = vadd.f32 %v3426, %v3669
      %v3725 = vadd.f32 %v3429, %v3672
      %v3726 = vadd.f32 %v3432, %v3675
      %v3727 = vadd.f32 %v3435, %v3678
      %v3728 = vadd.f32 %v3438, %v3681
      %v3729 = vadd.f32 %v3441, %v3684
      %v3730 = vadd.f32 %v3444, %v3687
      %v3731 = vadd.f32 %v3447, %v3690
      %v3732 = vadd.f32 %v3450, %v3693
      %v3733 = vadd.f32 %v3453, %v3696
      %v3734 = vadd.f32 %v3456, %v3699
      %v3735 = vadd.f32 %v3459, %v3702
      %v3736 = vld [vmem:[%s2943 + $0x7] sm:$0xff]
      %v3737 = vld [vmem:[%s2943 + $0xf] sm:$0xff]
      %v3738 = vld [vmem:[%s2943 + $0x27] sm:$0xff]
      %v3739 = vld [vmem:[%s2943 + $0x2f] sm:$0xff]
      %v3740 = vld [vmem:[%s2943 + $0x47] sm:$0xff]
      %v3741 = vld [vmem:[%s2943 + $0x4f] sm:$0xff]
      %v3742 = vld [vmem:[%s2943 + $0x67] sm:$0xff]
      %v3743 = vld [vmem:[%s2943 + $0x6f] sm:$0xff]
      %v3744 = vld [vmem:[%s2943 + $0x87] sm:$0xff]
      %v3745 = vld [vmem:[%s2943 + $0x8f] sm:$0xff]
      %v3746 = vld [vmem:[%s2943 + $0xa7] sm:$0xff]
      %v3747 = vld [vmem:[%s2943 + $0xaf] sm:$0xff]
      %v3748 = vld [vmem:[%s2943 + $0xc7] sm:$0xff]
      %v3749 = vld [vmem:[%s2943 + $0xcf] sm:$0xff]
      %v3750 = vld [vmem:[%s2943 + $0xe7] sm:$0xff]
      %v3751 = vld [vmem:[%s2943 + $0xef] sm:$0xff]
      %v3752 = vld [vmem:[%s2943 + $0x107] sm:$0xff]
      %v3753 = vld [vmem:[%s2943 + $0x10f] sm:$0xff]
      %v3754 = vld [vmem:[%s2943 + $0x127] sm:$0xff]
      %v3755 = vld [vmem:[%s2943 + $0x12f] sm:$0xff]
      %v3756 = vld [vmem:[%s2943 + $0x147] sm:$0xff]
      %v3757 = vld [vmem:[%s2943 + $0x14f] sm:$0xff]
      %v3758 = vld [vmem:[%s2943 + $0x167] sm:$0xff]
      %v3759 = vld [vmem:[%s2943 + $0x16f] sm:$0xff]
      %v3760 = vld [vmem:[%s2943 + $0x187] sm:$0xff]
      %v3761 = vld [vmem:[%s2943 + $0x18f] sm:$0xff]
      %v3762 = vld [vmem:[%s2943 + $0x1a7] sm:$0xff]
      %v3763 = vld [vmem:[%s2943 + $0x1af] sm:$0xff]
      %v3764 = vld [vmem:[%s2943 + $0x1c7] sm:$0xff]
      %v3765 = vld [vmem:[%s2943 + $0x1cf] sm:$0xff]
      %v3766 = vld [vmem:[%s2943 + $0x1e7] sm:$0xff]
      %v3767 = vld [vmem:[%s2943 + $0x1ef] sm:$0xff]
      %s3768 = scalar_lea.vmem %s3, 24
      %v3769 = vld [vmem:[%s3768] sm:$0xff]
      %v3771 = vsel %vm2870, %v3736, 0
      %v3774 = vsel %vm2870, %v3737, 0
      %v3777 = vsel %vm2870, %v3738, 0
      %v3780 = vsel %vm2870, %v3739, 0
      %v3783 = vsel %vm2870, %v3740, 0
      %v3786 = vsel %vm2870, %v3741, 0
      %v3789 = vsel %vm2870, %v3742, 0
      %v3792 = vsel %vm2870, %v3743, 0
      %v3795 = vsel %vm2870, %v3744, 0
      %v3798 = vsel %vm2870, %v3745, 0
      %v3801 = vsel %vm2870, %v3746, 0
      %v3804 = vsel %vm2870, %v3747, 0
      %v3807 = vsel %vm2870, %v3748, 0
      %v3810 = vsel %vm2870, %v3749, 0
      %v3813 = vsel %vm2870, %v3750, 0
      %v3816 = vsel %vm2870, %v3751, 0
      %v3819 = vsel %vm2870, %v3752, 0
      %v3822 = vsel %vm2870, %v3753, 0
      %v3825 = vsel %vm2870, %v3754, 0
      %v3828 = vsel %vm2870, %v3755, 0
      %v3831 = vsel %vm2870, %v3756, 0
      %v3834 = vsel %vm2870, %v3757, 0
      %v3837 = vsel %vm2870, %v3758, 0
      %v3840 = vsel %vm2870, %v3759, 0
      %v3843 = vsel %vm2870, %v3760, 0
      %v3846 = vsel %vm2870, %v3761, 0
      %v3849 = vsel %vm2870, %v3762, 0
      %v3852 = vsel %vm2870, %v3763, 0
      %v3855 = vsel %vm2870, %v3764, 0
      %v3858 = vsel %vm2870, %v3765, 0
      %v3861 = vsel %vm2870, %v3766, 0
      %v3864 = vsel %vm2870, %v3767, 0
      %3866 = vmatpush.msra.mxu0 0.0
      %3867 = vmatpush.msra.mxu0 0.0
      %3868 = vmatpush.msra.mxu0 0.0
      %3869 = vmatpush.msra.mxu0 0.0
      %3870 = vmatpush.msra.mxu0 0.0
      %3871 = vmatpush.msra.mxu0 0.0
      %3872 = vmatpush.msra.mxu0 0.0
      %3873 = vmatpush.msra.mxu0 0.0
      %3874 = vmatpush.msra.mxu0 0.0
      %3875 = vmatpush.msra.mxu0 0.0
      %3876 = vmatpush.msra.mxu0 0.0
      %3877 = vmatpush.msra.mxu0 0.0
      %3878 = vmatpush.msra.mxu0 0.0
      %3879 = vmatpush.msra.mxu0 0.0
      %3880 = vmatpush.msra.mxu0 0.0
      %3881 = vmatpush.msra.mxu0 %v3769
      %3882 = vmatmul.f32.gmra.mxu0 %v3771
      %v3883 = vpop.f32.mrf.mxu0
      %v3884 = vadd.f32 0.0, %v3883
      %3885 = vmatmul.f32.gmra.mxu0 %v3774
      %v3886 = vpop.f32.mrf.mxu0
      %v3887 = vadd.f32 0.0, %v3886
      %3888 = vmatmul.f32.gmra.mxu0 %v3777
      %v3889 = vpop.f32.mrf.mxu0
      %v3890 = vadd.f32 0.0, %v3889
      %3891 = vmatmul.f32.gmra.mxu0 %v3780
      %v3892 = vpop.f32.mrf.mxu0
      %v3893 = vadd.f32 0.0, %v3892
      %3894 = vmatmul.f32.gmra.mxu0 %v3783
      %v3895 = vpop.f32.mrf.mxu0
      %v3896 = vadd.f32 0.0, %v3895
      %3897 = vmatmul.f32.gmra.mxu0 %v3786
      %v3898 = vpop.f32.mrf.mxu0
      %v3899 = vadd.f32 0.0, %v3898
      %3900 = vmatmul.f32.gmra.mxu0 %v3789
      %v3901 = vpop.f32.mrf.mxu0
      %v3902 = vadd.f32 0.0, %v3901
      %3903 = vmatmul.f32.gmra.mxu0 %v3792
      %v3904 = vpop.f32.mrf.mxu0
      %v3905 = vadd.f32 0.0, %v3904
      %3906 = vmatmul.f32.gmra.mxu0 %v3795
      %v3907 = vpop.f32.mrf.mxu0
      %v3908 = vadd.f32 0.0, %v3907
      %3909 = vmatmul.f32.gmra.mxu0 %v3798
      %v3910 = vpop.f32.mrf.mxu0
      %v3911 = vadd.f32 0.0, %v3910
      %3912 = vmatmul.f32.gmra.mxu0 %v3801
      %v3913 = vpop.f32.mrf.mxu0
      %v3914 = vadd.f32 0.0, %v3913
      %3915 = vmatmul.f32.gmra.mxu0 %v3804
      %v3916 = vpop.f32.mrf.mxu0
      %v3917 = vadd.f32 0.0, %v3916
      %3918 = vmatmul.f32.gmra.mxu0 %v3807
      %v3919 = vpop.f32.mrf.mxu0
      %v3920 = vadd.f32 0.0, %v3919
      %3921 = vmatmul.f32.gmra.mxu0 %v3810
      %v3922 = vpop.f32.mrf.mxu0
      %v3923 = vadd.f32 0.0, %v3922
      %3924 = vmatmul.f32.gmra.mxu0 %v3813
      %v3925 = vpop.f32.mrf.mxu0
      %v3926 = vadd.f32 0.0, %v3925
      %3927 = vmatmul.f32.gmra.mxu0 %v3816
      %v3928 = vpop.f32.mrf.mxu0
      %v3929 = vadd.f32 0.0, %v3928
      %3930 = vmatmul.f32.gmra.mxu0 %v3819
      %v3931 = vpop.f32.mrf.mxu0
      %v3932 = vadd.f32 0.0, %v3931
      %3933 = vmatmul.f32.gmra.mxu0 %v3822
      %v3934 = vpop.f32.mrf.mxu0
      %v3935 = vadd.f32 0.0, %v3934
      %3936 = vmatmul.f32.gmra.mxu0 %v3825
      %v3937 = vpop.f32.mrf.mxu0
      %v3938 = vadd.f32 0.0, %v3937
      %3939 = vmatmul.f32.gmra.mxu0 %v3828
      %v3940 = vpop.f32.mrf.mxu0
      %v3941 = vadd.f32 0.0, %v3940
      %3942 = vmatmul.f32.gmra.mxu0 %v3831
      %v3943 = vpop.f32.mrf.mxu0
      %v3944 = vadd.f32 0.0, %v3943
      %3945 = vmatmul.f32.gmra.mxu0 %v3834
      %v3946 = vpop.f32.mrf.mxu0
      %v3947 = vadd.f32 0.0, %v3946
      %3948 = vmatmul.f32.gmra.mxu0 %v3837
      %v3949 = vpop.f32.mrf.mxu0
      %v3950 = vadd.f32 0.0, %v3949
      %3951 = vmatmul.f32.gmra.mxu0 %v3840
      %v3952 = vpop.f32.mrf.mxu0
      %v3953 = vadd.f32 0.0, %v3952
      %3954 = vmatmul.f32.gmra.mxu0 %v3843
      %v3955 = vpop.f32.mrf.mxu0
      %v3956 = vadd.f32 0.0, %v3955
      %3957 = vmatmul.f32.gmra.mxu0 %v3846
      %v3958 = vpop.f32.mrf.mxu0
      %v3959 = vadd.f32 0.0, %v3958
      %3960 = vmatmul.f32.gmra.mxu0 %v3849
      %v3961 = vpop.f32.mrf.mxu0
      %v3962 = vadd.f32 0.0, %v3961
      %3963 = vmatmul.f32.gmra.mxu0 %v3852
      %v3964 = vpop.f32.mrf.mxu0
      %v3965 = vadd.f32 0.0, %v3964
      %3966 = vmatmul.f32.gmra.mxu0 %v3855
      %v3967 = vpop.f32.mrf.mxu0
      %v3968 = vadd.f32 0.0, %v3967
      %3969 = vmatmul.f32.gmra.mxu0 %v3858
      %v3970 = vpop.f32.mrf.mxu0
      %v3971 = vadd.f32 0.0, %v3970
      %3972 = vmatmul.f32.gmra.mxu0 %v3861
      %v3973 = vpop.f32.mrf.mxu0
      %v3974 = vadd.f32 0.0, %v3973
      %3975 = vmatmul.f32.gmra.mxu0 %v3864
      %v3976 = vpop.f32.mrf.mxu0
      %v3977 = vadd.f32 0.0, %v3976
      %3978 = vdwg.mxu0
      %v3979 = vadd.f32 %v3704, %v3884
      %v3980 = vadd.f32 %v3705, %v3887
      %v3981 = vadd.f32 %v3706, %v3890
      %v3982 = vadd.f32 %v3707, %v3893
      %v3983 = vadd.f32 %v3708, %v3896
      %v3984 = vadd.f32 %v3709, %v3899
      %v3985 = vadd.f32 %v3710, %v3902
      %v3986 = vadd.f32 %v3711, %v3905
      %v3987 = vadd.f32 %v3712, %v3908
      %v3988 = vadd.f32 %v3713, %v3911
      %v3989 = vadd.f32 %v3714, %v3914
      %v3990 = vadd.f32 %v3715, %v3917
      %v3991 = vadd.f32 %v3716, %v3920
      %v3992 = vadd.f32 %v3717, %v3923
      %v3993 = vadd.f32 %v3718, %v3926
      %v3994 = vadd.f32 %v3719, %v3929
      %v3995 = vadd.f32 %v3720, %v3932
      %v3996 = vadd.f32 %v3721, %v3935
      %v3997 = vadd.f32 %v3722, %v3938
      %v3998 = vadd.f32 %v3723, %v3941
      %v3999 = vadd.f32 %v3724, %v3944
      %v4000 = vadd.f32 %v3725, %v3947
      %v4001 = vadd.f32 %v3726, %v3950
      %v4002 = vadd.f32 %v3727, %v3953
      %v4003 = vadd.f32 %v3728, %v3956
      %v4004 = vadd.f32 %v3729, %v3959
      %v4005 = vadd.f32 %v3730, %v3962
      %v4006 = vadd.f32 %v3731, %v3965
      %v4007 = vadd.f32 %v3732, %v3968
      %v4008 = vadd.f32 %v3733, %v3971
      %v4009 = vadd.f32 %v3734, %v3974
      %v4010 = vadd.f32 %v3735, %v3977
      %v4011 = vld [vmem:[%s2943 + $0x8] sm:$0xff]
      %v4012 = vld [vmem:[%s2943 + $0x10] sm:$0xff]
      %v4013 = vld [vmem:[%s2943 + $0x28] sm:$0xff]
      %v4014 = vld [vmem:[%s2943 + $0x30] sm:$0xff]
      %v4015 = vld [vmem:[%s2943 + $0x48] sm:$0xff]
      %v4016 = vld [vmem:[%s2943 + $0x50] sm:$0xff]
      %v4017 = vld [vmem:[%s2943 + $0x68] sm:$0xff]
      %v4018 = vld [vmem:[%s2943 + $0x70] sm:$0xff]
      %v4019 = vld [vmem:[%s2943 + $0x88] sm:$0xff]
      %v4020 = vld [vmem:[%s2943 + $0x90] sm:$0xff]
      %v4021 = vld [vmem:[%s2943 + $0xa8] sm:$0xff]
      %v4022 = vld [vmem:[%s2943 + $0xb0] sm:$0xff]
      %v4023 = vld [vmem:[%s2943 + $0xc8] sm:$0xff]
      %v4024 = vld [vmem:[%s2943 + $0xd0] sm:$0xff]
      %v4025 = vld [vmem:[%s2943 + $0xe8] sm:$0xff]
      %v4026 = vld [vmem:[%s2943 + $0xf0] sm:$0xff]
      %v4027 = vld [vmem:[%s2943 + $0x108] sm:$0xff]
      %v4028 = vld [vmem:[%s2943 + $0x110] sm:$0xff]
      %v4029 = vld [vmem:[%s2943 + $0x128] sm:$0xff]
      %v4030 = vld [vmem:[%s2943 + $0x130] sm:$0xff]
      %v4031 = vld [vmem:[%s2943 + $0x148] sm:$0xff]
      %v4032 = vld [vmem:[%s2943 + $0x150] sm:$0xff]
      %v4033 = vld [vmem:[%s2943 + $0x168] sm:$0xff]
      %v4034 = vld [vmem:[%s2943 + $0x170] sm:$0xff]
      %v4035 = vld [vmem:[%s2943 + $0x188] sm:$0xff]
      %v4036 = vld [vmem:[%s2943 + $0x190] sm:$0xff]
      %v4037 = vld [vmem:[%s2943 + $0x1a8] sm:$0xff]
      %v4038 = vld [vmem:[%s2943 + $0x1b0] sm:$0xff]
      %v4039 = vld [vmem:[%s2943 + $0x1c8] sm:$0xff]
      %v4040 = vld [vmem:[%s2943 + $0x1d0] sm:$0xff]
      %v4041 = vld [vmem:[%s2943 + $0x1e8] sm:$0xff]
      %v4042 = vld [vmem:[%s2943 + $0x1f0] sm:$0xff]
      %s4043 = scalar_lea.vmem %s3, 32
      %v4044 = vld [vmem:[%s4043] sm:$0xff]
      %v4046 = vsel %vm2870, %v4011, 0
      %v4049 = vsel %vm2870, %v4012, 0
      %v4052 = vsel %vm2870, %v4013, 0
      %v4055 = vsel %vm2870, %v4014, 0
      %v4058 = vsel %vm2870, %v4015, 0
      %v4061 = vsel %vm2870, %v4016, 0
      %v4064 = vsel %vm2870, %v4017, 0
      %v4067 = vsel %vm2870, %v4018, 0
      %v4070 = vsel %vm2870, %v4019, 0
      %v4073 = vsel %vm2870, %v4020, 0
      %v4076 = vsel %vm2870, %v4021, 0
      %v4079 = vsel %vm2870, %v4022, 0
      %v4082 = vsel %vm2870, %v4023, 0
      %v4085 = vsel %vm2870, %v4024, 0
      %v4088 = vsel %vm2870, %v4025, 0
      %v4091 = vsel %vm2870, %v4026, 0
      %v4094 = vsel %vm2870, %v4027, 0
      %v4097 = vsel %vm2870, %v4028, 0
      %v4100 = vsel %vm2870, %v4029, 0
      %v4103 = vsel %vm2870, %v4030, 0
      %v4106 = vsel %vm2870, %v4031, 0
      %v4109 = vsel %vm2870, %v4032, 0
      %v4112 = vsel %vm2870, %v4033, 0
      %v4115 = vsel %vm2870, %v4034, 0
      %v4118 = vsel %vm2870, %v4035, 0
      %v4121 = vsel %vm2870, %v4036, 0
      %v4124 = vsel %vm2870, %v4037, 0
      %v4127 = vsel %vm2870, %v4038, 0
      %v4130 = vsel %vm2870, %v4039, 0
      %v4133 = vsel %vm2870, %v4040, 0
      %v4136 = vsel %vm2870, %v4041, 0
      %v4139 = vsel %vm2870, %v4042, 0
      %4141 = vmatpush.msra.mxu0 0.0
      %4142 = vmatpush.msra.mxu0 0.0
      %4143 = vmatpush.msra.mxu0 0.0
      %4144 = vmatpush.msra.mxu0 0.0
      %4145 = vmatpush.msra.mxu0 0.0
      %4146 = vmatpush.msra.mxu0 0.0
      %4147 = vmatpush.msra.mxu0 0.0
      %4148 = vmatpush.msra.mxu0 0.0
      %4149 = vmatpush.msra.mxu0 0.0
      %4150 = vmatpush.msra.mxu0 0.0
      %4151 = vmatpush.msra.mxu0 0.0
      %4152 = vmatpush.msra.mxu0 0.0
      %4153 = vmatpush.msra.mxu0 0.0
      %4154 = vmatpush.msra.mxu0 0.0
      %4155 = vmatpush.msra.mxu0 0.0
      %4156 = vmatpush.msra.mxu0 %v4044
      %4157 = vmatmul.f32.gmra.mxu0 %v4046
      %v4158 = vpop.f32.mrf.mxu0
      %v4159 = vadd.f32 0.0, %v4158
      %4160 = vmatmul.f32.gmra.mxu0 %v4049
      %v4161 = vpop.f32.mrf.mxu0
      %v4162 = vadd.f32 0.0, %v4161
      %4163 = vmatmul.f32.gmra.mxu0 %v4052
      %v4164 = vpop.f32.mrf.mxu0
      %v4165 = vadd.f32 0.0, %v4164
      %4166 = vmatmul.f32.gmra.mxu0 %v4055
      %v4167 = vpop.f32.mrf.mxu0
      %v4168 = vadd.f32 0.0, %v4167
      %4169 = vmatmul.f32.gmra.mxu0 %v4058
      %v4170 = vpop.f32.mrf.mxu0
      %v4171 = vadd.f32 0.0, %v4170
      %4172 = vmatmul.f32.gmra.mxu0 %v4061
      %v4173 = vpop.f32.mrf.mxu0
      %v4174 = vadd.f32 0.0, %v4173
      %4175 = vmatmul.f32.gmra.mxu0 %v4064
      %v4176 = vpop.f32.mrf.mxu0
      %v4177 = vadd.f32 0.0, %v4176
      %4178 = vmatmul.f32.gmra.mxu0 %v4067
      %v4179 = vpop.f32.mrf.mxu0
      %v4180 = vadd.f32 0.0, %v4179
      %4181 = vmatmul.f32.gmra.mxu0 %v4070
      %v4182 = vpop.f32.mrf.mxu0
      %v4183 = vadd.f32 0.0, %v4182
      %4184 = vmatmul.f32.gmra.mxu0 %v4073
      %v4185 = vpop.f32.mrf.mxu0
      %v4186 = vadd.f32 0.0, %v4185
      %4187 = vmatmul.f32.gmra.mxu0 %v4076
      %v4188 = vpop.f32.mrf.mxu0
      %v4189 = vadd.f32 0.0, %v4188
      %4190 = vmatmul.f32.gmra.mxu0 %v4079
      %v4191 = vpop.f32.mrf.mxu0
      %v4192 = vadd.f32 0.0, %v4191
      %4193 = vmatmul.f32.gmra.mxu0 %v4082
      %v4194 = vpop.f32.mrf.mxu0
      %v4195 = vadd.f32 0.0, %v4194
      %4196 = vmatmul.f32.gmra.mxu0 %v4085
      %v4197 = vpop.f32.mrf.mxu0
      %v4198 = vadd.f32 0.0, %v4197
      %4199 = vmatmul.f32.gmra.mxu0 %v4088
      %v4200 = vpop.f32.mrf.mxu0
      %v4201 = vadd.f32 0.0, %v4200
      %4202 = vmatmul.f32.gmra.mxu0 %v4091
      %v4203 = vpop.f32.mrf.mxu0
      %v4204 = vadd.f32 0.0, %v4203
      %4205 = vmatmul.f32.gmra.mxu0 %v4094
      %v4206 = vpop.f32.mrf.mxu0
      %v4207 = vadd.f32 0.0, %v4206
      %4208 = vmatmul.f32.gmra.mxu0 %v4097
      %v4209 = vpop.f32.mrf.mxu0
      %v4210 = vadd.f32 0.0, %v4209
      %4211 = vmatmul.f32.gmra.mxu0 %v4100
      %v4212 = vpop.f32.mrf.mxu0
      %v4213 = vadd.f32 0.0, %v4212
      %4214 = vmatmul.f32.gmra.mxu0 %v4103
      %v4215 = vpop.f32.mrf.mxu0
      %v4216 = vadd.f32 0.0, %v4215
      %4217 = vmatmul.f32.gmra.mxu0 %v4106
      %v4218 = vpop.f32.mrf.mxu0
      %v4219 = vadd.f32 0.0, %v4218
      %4220 = vmatmul.f32.gmra.mxu0 %v4109
      %v4221 = vpop.f32.mrf.mxu0
      %v4222 = vadd.f32 0.0, %v4221
      %4223 = vmatmul.f32.gmra.mxu0 %v4112
      %v4224 = vpop.f32.mrf.mxu0
      %v4225 = vadd.f32 0.0, %v4224
      %4226 = vmatmul.f32.gmra.mxu0 %v4115
      %v4227 = vpop.f32.mrf.mxu0
      %v4228 = vadd.f32 0.0, %v4227
      %4229 = vmatmul.f32.gmra.mxu0 %v4118
      %v4230 = vpop.f32.mrf.mxu0
      %v4231 = vadd.f32 0.0, %v4230
      %4232 = vmatmul.f32.gmra.mxu0 %v4121
      %v4233 = vpop.f32.mrf.mxu0
      %v4234 = vadd.f32 0.0, %v4233
      %4235 = vmatmul.f32.gmra.mxu0 %v4124
      %v4236 = vpop.f32.mrf.mxu0
      %v4237 = vadd.f32 0.0, %v4236
      %4238 = vmatmul.f32.gmra.mxu0 %v4127
      %v4239 = vpop.f32.mrf.mxu0
      %v4240 = vadd.f32 0.0, %v4239
      %4241 = vmatmul.f32.gmra.mxu0 %v4130
      %v4242 = vpop.f32.mrf.mxu0
      %v4243 = vadd.f32 0.0, %v4242
      %4244 = vmatmul.f32.gmra.mxu0 %v4133
      %v4245 = vpop.f32.mrf.mxu0
      %v4246 = vadd.f32 0.0, %v4245
      %4247 = vmatmul.f32.gmra.mxu0 %v4136
      %v4248 = vpop.f32.mrf.mxu0
      %v4249 = vadd.f32 0.0, %v4248
      %4250 = vmatmul.f32.gmra.mxu0 %v4139
      %v4251 = vpop.f32.mrf.mxu0
      %v4252 = vadd.f32 0.0, %v4251
      %4253 = vdwg.mxu0
      %v4254 = vadd.f32 %v3979, %v4159
      %v4255 = vadd.f32 %v3980, %v4162
      %v4256 = vadd.f32 %v3981, %v4165
      %v4257 = vadd.f32 %v3982, %v4168
      %v4258 = vadd.f32 %v3983, %v4171
      %v4259 = vadd.f32 %v3984, %v4174
      %v4260 = vadd.f32 %v3985, %v4177
      %v4261 = vadd.f32 %v3986, %v4180
      %v4262 = vadd.f32 %v3987, %v4183
      %v4263 = vadd.f32 %v3988, %v4186
      %v4264 = vadd.f32 %v3989, %v4189
      %v4265 = vadd.f32 %v3990, %v4192
      %v4266 = vadd.f32 %v3991, %v4195
      %v4267 = vadd.f32 %v3992, %v4198
      %v4268 = vadd.f32 %v3993, %v4201
      %v4269 = vadd.f32 %v3994, %v4204
      %v4270 = vadd.f32 %v3995, %v4207
      %v4271 = vadd.f32 %v3996, %v4210
      %v4272 = vadd.f32 %v3997, %v4213
      %v4273 = vadd.f32 %v3998, %v4216
      %v4274 = vadd.f32 %v3999, %v4219
      %v4275 = vadd.f32 %v4000, %v4222
      %v4276 = vadd.f32 %v4001, %v4225
      %v4277 = vadd.f32 %v4002, %v4228
      %v4278 = vadd.f32 %v4003, %v4231
      %v4279 = vadd.f32 %v4004, %v4234
      %v4280 = vadd.f32 %v4005, %v4237
      %v4281 = vadd.f32 %v4006, %v4240
      %v4282 = vadd.f32 %v4007, %v4243
      %v4283 = vadd.f32 %v4008, %v4246
      %v4284 = vadd.f32 %v4009, %v4249
      %v4285 = vadd.f32 %v4010, %v4252
      %v4286 = vld [vmem:[%s2943 + $0x9] sm:$0xff]
      %v4287 = vld [vmem:[%s2943 + $0x11] sm:$0xff]
      %v4288 = vld [vmem:[%s2943 + $0x29] sm:$0xff]
      %v4289 = vld [vmem:[%s2943 + $0x31] sm:$0xff]
      %v4290 = vld [vmem:[%s2943 + $0x49] sm:$0xff]
      %v4291 = vld [vmem:[%s2943 + $0x51] sm:$0xff]
      %v4292 = vld [vmem:[%s2943 + $0x69] sm:$0xff]
      %v4293 = vld [vmem:[%s2943 + $0x71] sm:$0xff]
      %v4294 = vld [vmem:[%s2943 + $0x89] sm:$0xff]
      %v4295 = vld [vmem:[%s2943 + $0x91] sm:$0xff]
      %v4296 = vld [vmem:[%s2943 + $0xa9] sm:$0xff]
      %v4297 = vld [vmem:[%s2943 + $0xb1] sm:$0xff]
      %v4298 = vld [vmem:[%s2943 + $0xc9] sm:$0xff]
      %v4299 = vld [vmem:[%s2943 + $0xd1] sm:$0xff]
      %v4300 = vld [vmem:[%s2943 + $0xe9] sm:$0xff]
      %v4301 = vld [vmem:[%s2943 + $0xf1] sm:$0xff]
      %v4302 = vld [vmem:[%s2943 + $0x109] sm:$0xff]
      %v4303 = vld [vmem:[%s2943 + $0x111] sm:$0xff]
      %v4304 = vld [vmem:[%s2943 + $0x129] sm:$0xff]
      %v4305 = vld [vmem:[%s2943 + $0x131] sm:$0xff]
      %v4306 = vld [vmem:[%s2943 + $0x149] sm:$0xff]
      %v4307 = vld [vmem:[%s2943 + $0x151] sm:$0xff]
      %v4308 = vld [vmem:[%s2943 + $0x169] sm:$0xff]
      %v4309 = vld [vmem:[%s2943 + $0x171] sm:$0xff]
      %v4310 = vld [vmem:[%s2943 + $0x189] sm:$0xff]
      %v4311 = vld [vmem:[%s2943 + $0x191] sm:$0xff]
      %v4312 = vld [vmem:[%s2943 + $0x1a9] sm:$0xff]
      %v4313 = vld [vmem:[%s2943 + $0x1b1] sm:$0xff]
      %v4314 = vld [vmem:[%s2943 + $0x1c9] sm:$0xff]
      %v4315 = vld [vmem:[%s2943 + $0x1d1] sm:$0xff]
      %v4316 = vld [vmem:[%s2943 + $0x1e9] sm:$0xff]
      %v4317 = vld [vmem:[%s2943 + $0x1f1] sm:$0xff]
      %s4318 = scalar_lea.vmem %s3, 40
      %v4319 = vld [vmem:[%s4318] sm:$0xff]
      %v4321 = vsel %vm2870, %v4286, 0
      %v4324 = vsel %vm2870, %v4287, 0
      %v4327 = vsel %vm2870, %v4288, 0
      %v4330 = vsel %vm2870, %v4289, 0
      %v4333 = vsel %vm2870, %v4290, 0
      %v4336 = vsel %vm2870, %v4291, 0
      %v4339 = vsel %vm2870, %v4292, 0
      %v4342 = vsel %vm2870, %v4293, 0
      %v4345 = vsel %vm2870, %v4294, 0
      %v4348 = vsel %vm2870, %v4295, 0
      %v4351 = vsel %vm2870, %v4296, 0
      %v4354 = vsel %vm2870, %v4297, 0
      %v4357 = vsel %vm2870, %v4298, 0
      %v4360 = vsel %vm2870, %v4299, 0
      %v4363 = vsel %vm2870, %v4300, 0
      %v4366 = vsel %vm2870, %v4301, 0
      %v4369 = vsel %vm2870, %v4302, 0
      %v4372 = vsel %vm2870, %v4303, 0
      %v4375 = vsel %vm2870, %v4304, 0
      %v4378 = vsel %vm2870, %v4305, 0
      %v4381 = vsel %vm2870, %v4306, 0
      %v4384 = vsel %vm2870, %v4307, 0
      %v4387 = vsel %vm2870, %v4308, 0
      %v4390 = vsel %vm2870, %v4309, 0
      %v4393 = vsel %vm2870, %v4310, 0
      %v4396 = vsel %vm2870, %v4311, 0
      %v4399 = vsel %vm2870, %v4312, 0
      %v4402 = vsel %vm2870, %v4313, 0
      %v4405 = vsel %vm2870, %v4314, 0
      %v4408 = vsel %vm2870, %v4315, 0
      %v4411 = vsel %vm2870, %v4316, 0
      %v4414 = vsel %vm2870, %v4317, 0
      %4416 = vmatpush.msra.mxu0 0.0
      %4417 = vmatpush.msra.mxu0 0.0
      %4418 = vmatpush.msra.mxu0 0.0
      %4419 = vmatpush.msra.mxu0 0.0
      %4420 = vmatpush.msra.mxu0 0.0
      %4421 = vmatpush.msra.mxu0 0.0
      %4422 = vmatpush.msra.mxu0 0.0
      %4423 = vmatpush.msra.mxu0 0.0
      %4424 = vmatpush.msra.mxu0 0.0
      %4425 = vmatpush.msra.mxu0 0.0
      %4426 = vmatpush.msra.mxu0 0.0
      %4427 = vmatpush.msra.mxu0 0.0
      %4428 = vmatpush.msra.mxu0 0.0
      %4429 = vmatpush.msra.mxu0 0.0
      %4430 = vmatpush.msra.mxu0 0.0
      %4431 = vmatpush.msra.mxu0 %v4319
      %4432 = vmatmul.f32.gmra.mxu0 %v4321
      %v4433 = vpop.f32.mrf.mxu0
      %v4434 = vadd.f32 0.0, %v4433
      %4435 = vmatmul.f32.gmra.mxu0 %v4324
      %v4436 = vpop.f32.mrf.mxu0
      %v4437 = vadd.f32 0.0, %v4436
      %4438 = vmatmul.f32.gmra.mxu0 %v4327
      %v4439 = vpop.f32.mrf.mxu0
      %v4440 = vadd.f32 0.0, %v4439
      %4441 = vmatmul.f32.gmra.mxu0 %v4330
      %v4442 = vpop.f32.mrf.mxu0
      %v4443 = vadd.f32 0.0, %v4442
      %4444 = vmatmul.f32.gmra.mxu0 %v4333
      %v4445 = vpop.f32.mrf.mxu0
      %v4446 = vadd.f32 0.0, %v4445
      %4447 = vmatmul.f32.gmra.mxu0 %v4336
      %v4448 = vpop.f32.mrf.mxu0
      %v4449 = vadd.f32 0.0, %v4448
      %4450 = vmatmul.f32.gmra.mxu0 %v4339
      %v4451 = vpop.f32.mrf.mxu0
      %v4452 = vadd.f32 0.0, %v4451
      %4453 = vmatmul.f32.gmra.mxu0 %v4342
      %v4454 = vpop.f32.mrf.mxu0
      %v4455 = vadd.f32 0.0, %v4454
      %4456 = vmatmul.f32.gmra.mxu0 %v4345
      %v4457 = vpop.f32.mrf.mxu0
      %v4458 = vadd.f32 0.0, %v4457
      %4459 = vmatmul.f32.gmra.mxu0 %v4348
      %v4460 = vpop.f32.mrf.mxu0
      %v4461 = vadd.f32 0.0, %v4460
      %4462 = vmatmul.f32.gmra.mxu0 %v4351
      %v4463 = vpop.f32.mrf.mxu0
      %v4464 = vadd.f32 0.0, %v4463
      %4465 = vmatmul.f32.gmra.mxu0 %v4354
      %v4466 = vpop.f32.mrf.mxu0
      %v4467 = vadd.f32 0.0, %v4466
      %4468 = vmatmul.f32.gmra.mxu0 %v4357
      %v4469 = vpop.f32.mrf.mxu0
      %v4470 = vadd.f32 0.0, %v4469
      %4471 = vmatmul.f32.gmra.mxu0 %v4360
      %v4472 = vpop.f32.mrf.mxu0
      %v4473 = vadd.f32 0.0, %v4472
      %4474 = vmatmul.f32.gmra.mxu0 %v4363
      %v4475 = vpop.f32.mrf.mxu0
      %v4476 = vadd.f32 0.0, %v4475
      %4477 = vmatmul.f32.gmra.mxu0 %v4366
      %v4478 = vpop.f32.mrf.mxu0
      %v4479 = vadd.f32 0.0, %v4478
      %4480 = vmatmul.f32.gmra.mxu0 %v4369
      %v4481 = vpop.f32.mrf.mxu0
      %v4482 = vadd.f32 0.0, %v4481
      %4483 = vmatmul.f32.gmra.mxu0 %v4372
      %v4484 = vpop.f32.mrf.mxu0
      %v4485 = vadd.f32 0.0, %v4484
      %4486 = vmatmul.f32.gmra.mxu0 %v4375
      %v4487 = vpop.f32.mrf.mxu0
      %v4488 = vadd.f32 0.0, %v4487
      %4489 = vmatmul.f32.gmra.mxu0 %v4378
      %v4490 = vpop.f32.mrf.mxu0
      %v4491 = vadd.f32 0.0, %v4490
      %4492 = vmatmul.f32.gmra.mxu0 %v4381
      %v4493 = vpop.f32.mrf.mxu0
      %v4494 = vadd.f32 0.0, %v4493
      %4495 = vmatmul.f32.gmra.mxu0 %v4384
      %v4496 = vpop.f32.mrf.mxu0
      %v4497 = vadd.f32 0.0, %v4496
      %4498 = vmatmul.f32.gmra.mxu0 %v4387
      %v4499 = vpop.f32.mrf.mxu0
      %v4500 = vadd.f32 0.0, %v4499
      %4501 = vmatmul.f32.gmra.mxu0 %v4390
      %v4502 = vpop.f32.mrf.mxu0
      %v4503 = vadd.f32 0.0, %v4502
      %4504 = vmatmul.f32.gmra.mxu0 %v4393
      %v4505 = vpop.f32.mrf.mxu0
      %v4506 = vadd.f32 0.0, %v4505
      %4507 = vmatmul.f32.gmra.mxu0 %v4396
      %v4508 = vpop.f32.mrf.mxu0
      %v4509 = vadd.f32 0.0, %v4508
      %4510 = vmatmul.f32.gmra.mxu0 %v4399
      %v4511 = vpop.f32.mrf.mxu0
      %v4512 = vadd.f32 0.0, %v4511
      %4513 = vmatmul.f32.gmra.mxu0 %v4402
      %v4514 = vpop.f32.mrf.mxu0
      %v4515 = vadd.f32 0.0, %v4514
      %4516 = vmatmul.f32.gmra.mxu0 %v4405
      %v4517 = vpop.f32.mrf.mxu0
      %v4518 = vadd.f32 0.0, %v4517
      %4519 = vmatmul.f32.gmra.mxu0 %v4408
      %v4520 = vpop.f32.mrf.mxu0
      %v4521 = vadd.f32 0.0, %v4520
      %4522 = vmatmul.f32.gmra.mxu0 %v4411
      %v4523 = vpop.f32.mrf.mxu0
      %v4524 = vadd.f32 0.0, %v4523
      %4525 = vmatmul.f32.gmra.mxu0 %v4414
      %v4526 = vpop.f32.mrf.mxu0
      %v4527 = vadd.f32 0.0, %v4526
      %4528 = vdwg.mxu0
      %v4529 = vadd.f32 %v4254, %v4434
      %v4530 = vadd.f32 %v4255, %v4437
      %v4531 = vadd.f32 %v4256, %v4440
      %v4532 = vadd.f32 %v4257, %v4443
      %v4533 = vadd.f32 %v4258, %v4446
      %v4534 = vadd.f32 %v4259, %v4449
      %v4535 = vadd.f32 %v4260, %v4452
      %v4536 = vadd.f32 %v4261, %v4455
      %v4537 = vadd.f32 %v4262, %v4458
      %v4538 = vadd.f32 %v4263, %v4461
      %v4539 = vadd.f32 %v4264, %v4464
      %v4540 = vadd.f32 %v4265, %v4467
      %v4541 = vadd.f32 %v4266, %v4470
      %v4542 = vadd.f32 %v4267, %v4473
      %v4543 = vadd.f32 %v4268, %v4476
      %v4544 = vadd.f32 %v4269, %v4479
      %v4545 = vadd.f32 %v4270, %v4482
      %v4546 = vadd.f32 %v4271, %v4485
      %v4547 = vadd.f32 %v4272, %v4488
      %v4548 = vadd.f32 %v4273, %v4491
      %v4549 = vadd.f32 %v4274, %v4494
      %v4550 = vadd.f32 %v4275, %v4497
      %v4551 = vadd.f32 %v4276, %v4500
      %v4552 = vadd.f32 %v4277, %v4503
      %v4553 = vadd.f32 %v4278, %v4506
      %v4554 = vadd.f32 %v4279, %v4509
      %v4555 = vadd.f32 %v4280, %v4512
      %v4556 = vadd.f32 %v4281, %v4515
      %v4557 = vadd.f32 %v4282, %v4518
      %v4558 = vadd.f32 %v4283, %v4521
      %v4559 = vadd.f32 %v4284, %v4524
      %v4560 = vadd.f32 %v4285, %v4527
      %s4561 = scalar_lea.vmem [#allocation3], 64
      %v4562 = vld [vmem:[%s4561 + $0x7] sm:$0xff]
      %v4563 = vld [vmem:[%s4561 + $0xf] sm:$0xff]
      %v4564 = vld [vmem:[%s4561 + $0x27] sm:$0xff]
      %v4565 = vld [vmem:[%s4561 + $0x2f] sm:$0xff]
      %v4566 = vld [vmem:[%s4561 + $0x47] sm:$0xff]
      %v4567 = vld [vmem:[%s4561 + $0x4f] sm:$0xff]
      %v4568 = vld [vmem:[%s4561 + $0x67] sm:$0xff]
      %v4569 = vld [vmem:[%s4561 + $0x6f] sm:$0xff]
      %v4570 = vld [vmem:[%s4561 + $0x87] sm:$0xff]
      %v4571 = vld [vmem:[%s4561 + $0x8f] sm:$0xff]
      %v4572 = vld [vmem:[%s4561 + $0xa7] sm:$0xff]
      %v4573 = vld [vmem:[%s4561 + $0xaf] sm:$0xff]
      %v4574 = vld [vmem:[%s4561 + $0xc7] sm:$0xff]
      %v4575 = vld [vmem:[%s4561 + $0xcf] sm:$0xff]
      %v4576 = vld [vmem:[%s4561 + $0xe7] sm:$0xff]
      %v4577 = vld [vmem:[%s4561 + $0xef] sm:$0xff]
      %v4578 = vld [vmem:[%s4561 + $0x107] sm:$0xff]
      %v4579 = vld [vmem:[%s4561 + $0x10f] sm:$0xff]
      %v4580 = vld [vmem:[%s4561 + $0x127] sm:$0xff]
      %v4581 = vld [vmem:[%s4561 + $0x12f] sm:$0xff]
      %v4582 = vld [vmem:[%s4561 + $0x147] sm:$0xff]
      %v4583 = vld [vmem:[%s4561 + $0x14f] sm:$0xff]
      %v4584 = vld [vmem:[%s4561 + $0x167] sm:$0xff]
      %v4585 = vld [vmem:[%s4561 + $0x16f] sm:$0xff]
      %v4586 = vld [vmem:[%s4561 + $0x187] sm:$0xff]
      %v4587 = vld [vmem:[%s4561 + $0x18f] sm:$0xff]
      %v4588 = vld [vmem:[%s4561 + $0x1a7] sm:$0xff]
      %v4589 = vld [vmem:[%s4561 + $0x1af] sm:$0xff]
      %v4590 = vld [vmem:[%s4561 + $0x1c7] sm:$0xff]
      %v4591 = vld [vmem:[%s4561 + $0x1cf] sm:$0xff]
      %v4592 = vld [vmem:[%s4561 + $0x1e7] sm:$0xff]
      %v4593 = vld [vmem:[%s4561 + $0x1ef] sm:$0xff]
      %s4594 = scalar_lea.vmem %s3, 48
      %v4595 = vld [vmem:[%s4594] sm:$0xff]
      %v4597 = vsel %vm2870, %v4562, 0
      %v4600 = vsel %vm2870, %v4563, 0
      %v4603 = vsel %vm2870, %v4564, 0
      %v4606 = vsel %vm2870, %v4565, 0
      %v4609 = vsel %vm2870, %v4566, 0
      %v4612 = vsel %vm2870, %v4567, 0
      %v4615 = vsel %vm2870, %v4568, 0
      %v4618 = vsel %vm2870, %v4569, 0
      %v4621 = vsel %vm2870, %v4570, 0
      %v4624 = vsel %vm2870, %v4571, 0
      %v4627 = vsel %vm2870, %v4572, 0
      %v4630 = vsel %vm2870, %v4573, 0
      %v4633 = vsel %vm2870, %v4574, 0
      %v4636 = vsel %vm2870, %v4575, 0
      %v4639 = vsel %vm2870, %v4576, 0
      %v4642 = vsel %vm2870, %v4577, 0
      %v4645 = vsel %vm2870, %v4578, 0
      %v4648 = vsel %vm2870, %v4579, 0
      %v4651 = vsel %vm2870, %v4580, 0
      %v4654 = vsel %vm2870, %v4581, 0
      %v4657 = vsel %vm2870, %v4582, 0
      %v4660 = vsel %vm2870, %v4583, 0
      %v4663 = vsel %vm2870, %v4584, 0
      %v4666 = vsel %vm2870, %v4585, 0
      %v4669 = vsel %vm2870, %v4586, 0
      %v4672 = vsel %vm2870, %v4587, 0
      %v4675 = vsel %vm2870, %v4588, 0
      %v4678 = vsel %vm2870, %v4589, 0
      %v4681 = vsel %vm2870, %v4590, 0
      %v4684 = vsel %vm2870, %v4591, 0
      %v4687 = vsel %vm2870, %v4592, 0
      %v4690 = vsel %vm2870, %v4593, 0
      %4692 = vmatpush.msra.mxu0 0.0
      %4693 = vmatpush.msra.mxu0 0.0
      %4694 = vmatpush.msra.mxu0 0.0
      %4695 = vmatpush.msra.mxu0 0.0
      %4696 = vmatpush.msra.mxu0 0.0
      %4697 = vmatpush.msra.mxu0 0.0
      %4698 = vmatpush.msra.mxu0 0.0
      %4699 = vmatpush.msra.mxu0 0.0
      %4700 = vmatpush.msra.mxu0 0.0
      %4701 = vmatpush.msra.mxu0 0.0
      %4702 = vmatpush.msra.mxu0 0.0
      %4703 = vmatpush.msra.mxu0 0.0
      %4704 = vmatpush.msra.mxu0 0.0
      %4705 = vmatpush.msra.mxu0 0.0
      %4706 = vmatpush.msra.mxu0 0.0
      %4707 = vmatpush.msra.mxu0 %v4595
      %4708 = vmatmul.f32.gmra.mxu0 %v4597
      %v4709 = vpop.f32.mrf.mxu0
      %v4710 = vadd.f32 0.0, %v4709
      %4711 = vmatmul.f32.gmra.mxu0 %v4600
      %v4712 = vpop.f32.mrf.mxu0
      %v4713 = vadd.f32 0.0, %v4712
      %4714 = vmatmul.f32.gmra.mxu0 %v4603
      %v4715 = vpop.f32.mrf.mxu0
      %v4716 = vadd.f32 0.0, %v4715
      %4717 = vmatmul.f32.gmra.mxu0 %v4606
      %v4718 = vpop.f32.mrf.mxu0
      %v4719 = vadd.f32 0.0, %v4718
      %4720 = vmatmul.f32.gmra.mxu0 %v4609
      %v4721 = vpop.f32.mrf.mxu0
      %v4722 = vadd.f32 0.0, %v4721
      %4723 = vmatmul.f32.gmra.mxu0 %v4612
      %v4724 = vpop.f32.mrf.mxu0
      %v4725 = vadd.f32 0.0, %v4724
      %4726 = vmatmul.f32.gmra.mxu0 %v4615
      %v4727 = vpop.f32.mrf.mxu0
      %v4728 = vadd.f32 0.0, %v4727
      %4729 = vmatmul.f32.gmra.mxu0 %v4618
      %v4730 = vpop.f32.mrf.mxu0
      %v4731 = vadd.f32 0.0, %v4730
      %4732 = vmatmul.f32.gmra.mxu0 %v4621
      %v4733 = vpop.f32.mrf.mxu0
      %v4734 = vadd.f32 0.0, %v4733
      %4735 = vmatmul.f32.gmra.mxu0 %v4624
      %v4736 = vpop.f32.mrf.mxu0
      %v4737 = vadd.f32 0.0, %v4736
      %4738 = vmatmul.f32.gmra.mxu0 %v4627
      %v4739 = vpop.f32.mrf.mxu0
      %v4740 = vadd.f32 0.0, %v4739
      %4741 = vmatmul.f32.gmra.mxu0 %v4630
      %v4742 = vpop.f32.mrf.mxu0
      %v4743 = vadd.f32 0.0, %v4742
      %4744 = vmatmul.f32.gmra.mxu0 %v4633
      %v4745 = vpop.f32.mrf.mxu0
      %v4746 = vadd.f32 0.0, %v4745
      %4747 = vmatmul.f32.gmra.mxu0 %v4636
      %v4748 = vpop.f32.mrf.mxu0
      %v4749 = vadd.f32 0.0, %v4748
      %4750 = vmatmul.f32.gmra.mxu0 %v4639
      %v4751 = vpop.f32.mrf.mxu0
      %v4752 = vadd.f32 0.0, %v4751
      %4753 = vmatmul.f32.gmra.mxu0 %v4642
      %v4754 = vpop.f32.mrf.mxu0
      %v4755 = vadd.f32 0.0, %v4754
      %4756 = vmatmul.f32.gmra.mxu0 %v4645
      %v4757 = vpop.f32.mrf.mxu0
      %v4758 = vadd.f32 0.0, %v4757
      %4759 = vmatmul.f32.gmra.mxu0 %v4648
      %v4760 = vpop.f32.mrf.mxu0
      %v4761 = vadd.f32 0.0, %v4760
      %4762 = vmatmul.f32.gmra.mxu0 %v4651
      %v4763 = vpop.f32.mrf.mxu0
      %v4764 = vadd.f32 0.0, %v4763
      %4765 = vmatmul.f32.gmra.mxu0 %v4654
      %v4766 = vpop.f32.mrf.mxu0
      %v4767 = vadd.f32 0.0, %v4766
      %4768 = vmatmul.f32.gmra.mxu0 %v4657
      %v4769 = vpop.f32.mrf.mxu0
      %v4770 = vadd.f32 0.0, %v4769
      %4771 = vmatmul.f32.gmra.mxu0 %v4660
      %v4772 = vpop.f32.mrf.mxu0
      %v4773 = vadd.f32 0.0, %v4772
      %4774 = vmatmul.f32.gmra.mxu0 %v4663
      %v4775 = vpop.f32.mrf.mxu0
      %v4776 = vadd.f32 0.0, %v4775
      %4777 = vmatmul.f32.gmra.mxu0 %v4666
      %v4778 = vpop.f32.mrf.mxu0
      %v4779 = vadd.f32 0.0, %v4778
      %4780 = vmatmul.f32.gmra.mxu0 %v4669
      %v4781 = vpop.f32.mrf.mxu0
      %v4782 = vadd.f32 0.0, %v4781
      %4783 = vmatmul.f32.gmra.mxu0 %v4672
      %v4784 = vpop.f32.mrf.mxu0
      %v4785 = vadd.f32 0.0, %v4784
      %4786 = vmatmul.f32.gmra.mxu0 %v4675
      %v4787 = vpop.f32.mrf.mxu0
      %v4788 = vadd.f32 0.0, %v4787
      %4789 = vmatmul.f32.gmra.mxu0 %v4678
      %v4790 = vpop.f32.mrf.mxu0
      %v4791 = vadd.f32 0.0, %v4790
      %4792 = vmatmul.f32.gmra.mxu0 %v4681
      %v4793 = vpop.f32.mrf.mxu0
      %v4794 = vadd.f32 0.0, %v4793
      %4795 = vmatmul.f32.gmra.mxu0 %v4684
      %v4796 = vpop.f32.mrf.mxu0
      %v4797 = vadd.f32 0.0, %v4796
      %4798 = vmatmul.f32.gmra.mxu0 %v4687
      %v4799 = vpop.f32.mrf.mxu0
      %v4800 = vadd.f32 0.0, %v4799
      %4801 = vmatmul.f32.gmra.mxu0 %v4690
      %v4802 = vpop.f32.mrf.mxu0
      %v4803 = vadd.f32 0.0, %v4802
      %4804 = vdwg.mxu0
      %v4805 = vadd.f32 %v4529, %v4710
      %v4806 = vadd.f32 %v4530, %v4713
      %v4807 = vadd.f32 %v4531, %v4716
      %v4808 = vadd.f32 %v4532, %v4719
      %v4809 = vadd.f32 %v4533, %v4722
      %v4810 = vadd.f32 %v4534, %v4725
      %v4811 = vadd.f32 %v4535, %v4728
      %v4812 = vadd.f32 %v4536, %v4731
      %v4813 = vadd.f32 %v4537, %v4734
      %v4814 = vadd.f32 %v4538, %v4737
      %v4815 = vadd.f32 %v4539, %v4740
      %v4816 = vadd.f32 %v4540, %v4743
      %v4817 = vadd.f32 %v4541, %v4746
      %v4818 = vadd.f32 %v4542, %v4749
      %v4819 = vadd.f32 %v4543, %v4752
      %v4820 = vadd.f32 %v4544, %v4755
      %v4821 = vadd.f32 %v4545, %v4758
      %v4822 = vadd.f32 %v4546, %v4761
      %v4823 = vadd.f32 %v4547, %v4764
      %v4824 = vadd.f32 %v4548, %v4767
      %v4825 = vadd.f32 %v4549, %v4770
      %v4826 = vadd.f32 %v4550, %v4773
      %v4827 = vadd.f32 %v4551, %v4776
      %v4828 = vadd.f32 %v4552, %v4779
      %v4829 = vadd.f32 %v4553, %v4782
      %v4830 = vadd.f32 %v4554, %v4785
      %v4831 = vadd.f32 %v4555, %v4788
      %v4832 = vadd.f32 %v4556, %v4791
      %v4833 = vadd.f32 %v4557, %v4794
      %v4834 = vadd.f32 %v4558, %v4797
      %v4835 = vadd.f32 %v4559, %v4800
      %v4836 = vadd.f32 %v4560, %v4803
      %v4837 = vld [vmem:[%s4561 + $0x8] sm:$0xff]
      %v4838 = vld [vmem:[%s4561 + $0x10] sm:$0xff]
      %v4839 = vld [vmem:[%s4561 + $0x28] sm:$0xff]
      %v4840 = vld [vmem:[%s4561 + $0x30] sm:$0xff]
      %v4841 = vld [vmem:[%s4561 + $0x48] sm:$0xff]
      %v4842 = vld [vmem:[%s4561 + $0x50] sm:$0xff]
      %v4843 = vld [vmem:[%s4561 + $0x68] sm:$0xff]
      %v4844 = vld [vmem:[%s4561 + $0x70] sm:$0xff]
      %v4845 = vld [vmem:[%s4561 + $0x88] sm:$0xff]
      %v4846 = vld [vmem:[%s4561 + $0x90] sm:$0xff]
      %v4847 = vld [vmem:[%s4561 + $0xa8] sm:$0xff]
      %v4848 = vld [vmem:[%s4561 + $0xb0] sm:$0xff]
      %v4849 = vld [vmem:[%s4561 + $0xc8] sm:$0xff]
      %v4850 = vld [vmem:[%s4561 + $0xd0] sm:$0xff]
      %v4851 = vld [vmem:[%s4561 + $0xe8] sm:$0xff]
      %v4852 = vld [vmem:[%s4561 + $0xf0] sm:$0xff]
      %v4853 = vld [vmem:[%s4561 + $0x108] sm:$0xff]
      %v4854 = vld [vmem:[%s4561 + $0x110] sm:$0xff]
      %v4855 = vld [vmem:[%s4561 + $0x128] sm:$0xff]
      %v4856 = vld [vmem:[%s4561 + $0x130] sm:$0xff]
      %v4857 = vld [vmem:[%s4561 + $0x148] sm:$0xff]
      %v4858 = vld [vmem:[%s4561 + $0x150] sm:$0xff]
      %v4859 = vld [vmem:[%s4561 + $0x168] sm:$0xff]
      %v4860 = vld [vmem:[%s4561 + $0x170] sm:$0xff]
      %v4861 = vld [vmem:[%s4561 + $0x188] sm:$0xff]
      %v4862 = vld [vmem:[%s4561 + $0x190] sm:$0xff]
      %v4863 = vld [vmem:[%s4561 + $0x1a8] sm:$0xff]
      %v4864 = vld [vmem:[%s4561 + $0x1b0] sm:$0xff]
      %v4865 = vld [vmem:[%s4561 + $0x1c8] sm:$0xff]
      %v4866 = vld [vmem:[%s4561 + $0x1d0] sm:$0xff]
      %v4867 = vld [vmem:[%s4561 + $0x1e8] sm:$0xff]
      %v4868 = vld [vmem:[%s4561 + $0x1f0] sm:$0xff]
      %s4869 = scalar_lea.vmem %s3, 56
      %v4870 = vld [vmem:[%s4869] sm:$0xff]
      %v4872 = vsel %vm2870, %v4837, 0
      %v4875 = vsel %vm2870, %v4838, 0
      %v4878 = vsel %vm2870, %v4839, 0
      %v4881 = vsel %vm2870, %v4840, 0
      %v4884 = vsel %vm2870, %v4841, 0
      %v4887 = vsel %vm2870, %v4842, 0
      %v4890 = vsel %vm2870, %v4843, 0
      %v4893 = vsel %vm2870, %v4844, 0
      %v4896 = vsel %vm2870, %v4845, 0
      %v4899 = vsel %vm2870, %v4846, 0
      %v4902 = vsel %vm2870, %v4847, 0
      %v4905 = vsel %vm2870, %v4848, 0
      %v4908 = vsel %vm2870, %v4849, 0
      %v4911 = vsel %vm2870, %v4850, 0
      %v4914 = vsel %vm2870, %v4851, 0
      %v4917 = vsel %vm2870, %v4852, 0
      %v4920 = vsel %vm2870, %v4853, 0
      %v4923 = vsel %vm2870, %v4854, 0
      %v4926 = vsel %vm2870, %v4855, 0
      %v4929 = vsel %vm2870, %v4856, 0
      %v4932 = vsel %vm2870, %v4857, 0
      %v4935 = vsel %vm2870, %v4858, 0
      %v4938 = vsel %vm2870, %v4859, 0
      %v4941 = vsel %vm2870, %v4860, 0
      %v4944 = vsel %vm2870, %v4861, 0
      %v4947 = vsel %vm2870, %v4862, 0
      %v4950 = vsel %vm2870, %v4863, 0
      %v4953 = vsel %vm2870, %v4864, 0
      %v4956 = vsel %vm2870, %v4865, 0
      %v4959 = vsel %vm2870, %v4866, 0
      %v4962 = vsel %vm2870, %v4867, 0
      %v4965 = vsel %vm2870, %v4868, 0
      %4967 = vmatpush.msra.mxu0 0.0
      %4968 = vmatpush.msra.mxu0 0.0
      %4969 = vmatpush.msra.mxu0 0.0
      %4970 = vmatpush.msra.mxu0 0.0
      %4971 = vmatpush.msra.mxu0 0.0
      %4972 = vmatpush.msra.mxu0 0.0
      %4973 = vmatpush.msra.mxu0 0.0
      %4974 = vmatpush.msra.mxu0 0.0
      %4975 = vmatpush.msra.mxu0 0.0
      %4976 = vmatpush.msra.mxu0 0.0
      %4977 = vmatpush.msra.mxu0 0.0
      %4978 = vmatpush.msra.mxu0 0.0
      %4979 = vmatpush.msra.mxu0 0.0
      %4980 = vmatpush.msra.mxu0 0.0
      %4981 = vmatpush.msra.mxu0 0.0
      %4982 = vmatpush.msra.mxu0 %v4870
      %4983 = vmatmul.f32.gmra.mxu0 %v4872
      %v4984 = vpop.f32.mrf.mxu0
      %v4985 = vadd.f32 0.0, %v4984
      %4986 = vmatmul.f32.gmra.mxu0 %v4875
      %v4987 = vpop.f32.mrf.mxu0
      %v4988 = vadd.f32 0.0, %v4987
      %4989 = vmatmul.f32.gmra.mxu0 %v4878
      %v4990 = vpop.f32.mrf.mxu0
      %v4991 = vadd.f32 0.0, %v4990
      %4992 = vmatmul.f32.gmra.mxu0 %v4881
      %v4993 = vpop.f32.mrf.mxu0
      %v4994 = vadd.f32 0.0, %v4993
      %4995 = vmatmul.f32.gmra.mxu0 %v4884
      %v4996 = vpop.f32.mrf.mxu0
      %v4997 = vadd.f32 0.0, %v4996
      %4998 = vmatmul.f32.gmra.mxu0 %v4887
      %v4999 = vpop.f32.mrf.mxu0
      %v5000 = vadd.f32 0.0, %v4999
      %5001 = vmatmul.f32.gmra.mxu0 %v4890
      %v5002 = vpop.f32.mrf.mxu0
      %v5003 = vadd.f32 0.0, %v5002
      %5004 = vmatmul.f32.gmra.mxu0 %v4893
      %v5005 = vpop.f32.mrf.mxu0
      %v5006 = vadd.f32 0.0, %v5005
      %5007 = vmatmul.f32.gmra.mxu0 %v4896
      %v5008 = vpop.f32.mrf.mxu0
      %v5009 = vadd.f32 0.0, %v5008
      %5010 = vmatmul.f32.gmra.mxu0 %v4899
      %v5011 = vpop.f32.mrf.mxu0
      %v5012 = vadd.f32 0.0, %v5011
      %5013 = vmatmul.f32.gmra.mxu0 %v4902
      %v5014 = vpop.f32.mrf.mxu0
      %v5015 = vadd.f32 0.0, %v5014
      %5016 = vmatmul.f32.gmra.mxu0 %v4905
      %v5017 = vpop.f32.mrf.mxu0
      %v5018 = vadd.f32 0.0, %v5017
      %5019 = vmatmul.f32.gmra.mxu0 %v4908
      %v5020 = vpop.f32.mrf.mxu0
      %v5021 = vadd.f32 0.0, %v5020
      %5022 = vmatmul.f32.gmra.mxu0 %v4911
      %v5023 = vpop.f32.mrf.mxu0
      %v5024 = vadd.f32 0.0, %v5023
      %5025 = vmatmul.f32.gmra.mxu0 %v4914
      %v5026 = vpop.f32.mrf.mxu0
      %v5027 = vadd.f32 0.0, %v5026
      %5028 = vmatmul.f32.gmra.mxu0 %v4917
      %v5029 = vpop.f32.mrf.mxu0
      %v5030 = vadd.f32 0.0, %v5029
      %5031 = vmatmul.f32.gmra.mxu0 %v4920
      %v5032 = vpop.f32.mrf.mxu0
      %v5033 = vadd.f32 0.0, %v5032
      %5034 = vmatmul.f32.gmra.mxu0 %v4923
      %v5035 = vpop.f32.mrf.mxu0
      %v5036 = vadd.f32 0.0, %v5035
      %5037 = vmatmul.f32.gmra.mxu0 %v4926
      %v5038 = vpop.f32.mrf.mxu0
      %v5039 = vadd.f32 0.0, %v5038
      %5040 = vmatmul.f32.gmra.mxu0 %v4929
      %v5041 = vpop.f32.mrf.mxu0
      %v5042 = vadd.f32 0.0, %v5041
      %5043 = vmatmul.f32.gmra.mxu0 %v4932
      %v5044 = vpop.f32.mrf.mxu0
      %v5045 = vadd.f32 0.0, %v5044
      %5046 = vmatmul.f32.gmra.mxu0 %v4935
      %v5047 = vpop.f32.mrf.mxu0
      %v5048 = vadd.f32 0.0, %v5047
      %5049 = vmatmul.f32.gmra.mxu0 %v4938
      %v5050 = vpop.f32.mrf.mxu0
      %v5051 = vadd.f32 0.0, %v5050
      %5052 = vmatmul.f32.gmra.mxu0 %v4941
      %v5053 = vpop.f32.mrf.mxu0
      %v5054 = vadd.f32 0.0, %v5053
      %5055 = vmatmul.f32.gmra.mxu0 %v4944
      %v5056 = vpop.f32.mrf.mxu0
      %v5057 = vadd.f32 0.0, %v5056
      %5058 = vmatmul.f32.gmra.mxu0 %v4947
      %v5059 = vpop.f32.mrf.mxu0
      %v5060 = vadd.f32 0.0, %v5059
      %5061 = vmatmul.f32.gmra.mxu0 %v4950
      %v5062 = vpop.f32.mrf.mxu0
      %v5063 = vadd.f32 0.0, %v5062
      %5064 = vmatmul.f32.gmra.mxu0 %v4953
      %v5065 = vpop.f32.mrf.mxu0
      %v5066 = vadd.f32 0.0, %v5065
      %5067 = vmatmul.f32.gmra.mxu0 %v4956
      %v5068 = vpop.f32.mrf.mxu0
      %v5069 = vadd.f32 0.0, %v5068
      %5070 = vmatmul.f32.gmra.mxu0 %v4959
      %v5071 = vpop.f32.mrf.mxu0
      %v5072 = vadd.f32 0.0, %v5071
      %5073 = vmatmul.f32.gmra.mxu0 %v4962
      %v5074 = vpop.f32.mrf.mxu0
      %v5075 = vadd.f32 0.0, %v5074
      %5076 = vmatmul.f32.gmra.mxu0 %v4965
      %v5077 = vpop.f32.mrf.mxu0
      %v5078 = vadd.f32 0.0, %v5077
      %5079 = vdwg.mxu0
      %v5080 = vadd.f32 %v4805, %v4985
      %v5081 = vadd.f32 %v4806, %v4988
      %v5082 = vadd.f32 %v4807, %v4991
      %v5083 = vadd.f32 %v4808, %v4994
      %v5084 = vadd.f32 %v4809, %v4997
      %v5085 = vadd.f32 %v4810, %v5000
      %v5086 = vadd.f32 %v4811, %v5003
      %v5087 = vadd.f32 %v4812, %v5006
      %v5088 = vadd.f32 %v4813, %v5009
      %v5089 = vadd.f32 %v4814, %v5012
      %v5090 = vadd.f32 %v4815, %v5015
      %v5091 = vadd.f32 %v4816, %v5018
      %v5092 = vadd.f32 %v4817, %v5021
      %v5093 = vadd.f32 %v4818, %v5024
      %v5094 = vadd.f32 %v4819, %v5027
      %v5095 = vadd.f32 %v4820, %v5030
      %v5096 = vadd.f32 %v4821, %v5033
      %v5097 = vadd.f32 %v4822, %v5036
      %v5098 = vadd.f32 %v4823, %v5039
      %v5099 = vadd.f32 %v4824, %v5042
      %v5100 = vadd.f32 %v4825, %v5045
      %v5101 = vadd.f32 %v4826, %v5048
      %v5102 = vadd.f32 %v4827, %v5051
      %v5103 = vadd.f32 %v4828, %v5054
      %v5104 = vadd.f32 %v4829, %v5057
      %v5105 = vadd.f32 %v4830, %v5060
      %v5106 = vadd.f32 %v4831, %v5063
      %v5107 = vadd.f32 %v4832, %v5066
      %v5108 = vadd.f32 %v4833, %v5069
      %v5109 = vadd.f32 %v4834, %v5072
      %v5110 = vadd.f32 %v4835, %v5075
      %v5111 = vadd.f32 %v4836, %v5078
      %v5112 = vld [vmem:[%s4561 + $0x9] sm:$0xff]
      %v5113 = vld [vmem:[%s4561 + $0x11] sm:$0xff]
      %v5114 = vld [vmem:[%s4561 + $0x29] sm:$0xff]
      %v5115 = vld [vmem:[%s4561 + $0x31] sm:$0xff]
      %v5116 = vld [vmem:[%s4561 + $0x49] sm:$0xff]
      %v5117 = vld [vmem:[%s4561 + $0x51] sm:$0xff]
      %v5118 = vld [vmem:[%s4561 + $0x69] sm:$0xff]
      %v5119 = vld [vmem:[%s4561 + $0x71] sm:$0xff]
      %v5120 = vld [vmem:[%s4561 + $0x89] sm:$0xff]
      %v5121 = vld [vmem:[%s4561 + $0x91] sm:$0xff]
      %v5122 = vld [vmem:[%s4561 + $0xa9] sm:$0xff]
      %v5123 = vld [vmem:[%s4561 + $0xb1] sm:$0xff]
      %v5124 = vld [vmem:[%s4561 + $0xc9] sm:$0xff]
      %v5125 = vld [vmem:[%s4561 + $0xd1] sm:$0xff]
      %v5126 = vld [vmem:[%s4561 + $0xe9] sm:$0xff]
      %v5127 = vld [vmem:[%s4561 + $0xf1] sm:$0xff]
      %v5128 = vld [vmem:[%s4561 + $0x109] sm:$0xff]
      %v5129 = vld [vmem:[%s4561 + $0x111] sm:$0xff]
      %v5130 = vld [vmem:[%s4561 + $0x129] sm:$0xff]
      %v5131 = vld [vmem:[%s4561 + $0x131] sm:$0xff]
      %v5132 = vld [vmem:[%s4561 + $0x149] sm:$0xff]
      %v5133 = vld [vmem:[%s4561 + $0x151] sm:$0xff]
      %v5134 = vld [vmem:[%s4561 + $0x169] sm:$0xff]
      %v5135 = vld [vmem:[%s4561 + $0x171] sm:$0xff]
      %v5136 = vld [vmem:[%s4561 + $0x189] sm:$0xff]
      %v5137 = vld [vmem:[%s4561 + $0x191] sm:$0xff]
      %v5138 = vld [vmem:[%s4561 + $0x1a9] sm:$0xff]
      %v5139 = vld [vmem:[%s4561 + $0x1b1] sm:$0xff]
      %v5140 = vld [vmem:[%s4561 + $0x1c9] sm:$0xff]
      %v5141 = vld [vmem:[%s4561 + $0x1d1] sm:$0xff]
      %v5142 = vld [vmem:[%s4561 + $0x1e9] sm:$0xff]
      %v5143 = vld [vmem:[%s4561 + $0x1f1] sm:$0xff]
      %s5144 = scalar_lea.vmem %s3, 64
      %v5145 = vld [vmem:[%s5144] sm:$0xff]
      %v5147 = vsel %vm2870, %v5112, 0
      %v5150 = vsel %vm2870, %v5113, 0
      %v5153 = vsel %vm2870, %v5114, 0
      %v5156 = vsel %vm2870, %v5115, 0
      %v5159 = vsel %vm2870, %v5116, 0
      %v5162 = vsel %vm2870, %v5117, 0
      %v5165 = vsel %vm2870, %v5118, 0
      %v5168 = vsel %vm2870, %v5119, 0
      %v5171 = vsel %vm2870, %v5120, 0
      %v5174 = vsel %vm2870, %v5121, 0
      %v5177 = vsel %vm2870, %v5122, 0
      %v5180 = vsel %vm2870, %v5123, 0
      %v5183 = vsel %vm2870, %v5124, 0
      %v5186 = vsel %vm2870, %v5125, 0
      %v5189 = vsel %vm2870, %v5126, 0
      %v5192 = vsel %vm2870, %v5127, 0
      %v5195 = vsel %vm2870, %v5128, 0
      %v5198 = vsel %vm2870, %v5129, 0
      %v5201 = vsel %vm2870, %v5130, 0
      %v5204 = vsel %vm2870, %v5131, 0
      %v5207 = vsel %vm2870, %v5132, 0
      %v5210 = vsel %vm2870, %v5133, 0
      %v5213 = vsel %vm2870, %v5134, 0
      %v5216 = vsel %vm2870, %v5135, 0
      %v5219 = vsel %vm2870, %v5136, 0
      %v5222 = vsel %vm2870, %v5137, 0
      %v5225 = vsel %vm2870, %v5138, 0
      %v5228 = vsel %vm2870, %v5139, 0
      %v5231 = vsel %vm2870, %v5140, 0
      %v5234 = vsel %vm2870, %v5141, 0
      %v5237 = vsel %vm2870, %v5142, 0
      %v5240 = vsel %vm2870, %v5143, 0
      %5242 = vmatpush.msra.mxu0 0.0
      %5243 = vmatpush.msra.mxu0 0.0
      %5244 = vmatpush.msra.mxu0 0.0
      %5245 = vmatpush.msra.mxu0 0.0
      %5246 = vmatpush.msra.mxu0 0.0
      %5247 = vmatpush.msra.mxu0 0.0
      %5248 = vmatpush.msra.mxu0 0.0
      %5249 = vmatpush.msra.mxu0 0.0
      %5250 = vmatpush.msra.mxu0 0.0
      %5251 = vmatpush.msra.mxu0 0.0
      %5252 = vmatpush.msra.mxu0 0.0
      %5253 = vmatpush.msra.mxu0 0.0
      %5254 = vmatpush.msra.mxu0 0.0
      %5255 = vmatpush.msra.mxu0 0.0
      %5256 = vmatpush.msra.mxu0 0.0
      %5257 = vmatpush.msra.mxu0 %v5145
      %5258 = vmatmul.f32.gmra.mxu0 %v5147
      %v5259 = vpop.f32.mrf.mxu0
      %v5260 = vadd.f32 0.0, %v5259
      %5261 = vmatmul.f32.gmra.mxu0 %v5150
      %v5262 = vpop.f32.mrf.mxu0
      %v5263 = vadd.f32 0.0, %v5262
      %5264 = vmatmul.f32.gmra.mxu0 %v5153
      %v5265 = vpop.f32.mrf.mxu0
      %v5266 = vadd.f32 0.0, %v5265
      %5267 = vmatmul.f32.gmra.mxu0 %v5156
      %v5268 = vpop.f32.mrf.mxu0
      %v5269 = vadd.f32 0.0, %v5268
      %5270 = vmatmul.f32.gmra.mxu0 %v5159
      %v5271 = vpop.f32.mrf.mxu0
      %v5272 = vadd.f32 0.0, %v5271
      %5273 = vmatmul.f32.gmra.mxu0 %v5162
      %v5274 = vpop.f32.mrf.mxu0
      %v5275 = vadd.f32 0.0, %v5274
      %5276 = vmatmul.f32.gmra.mxu0 %v5165
      %v5277 = vpop.f32.mrf.mxu0
      %v5278 = vadd.f32 0.0, %v5277
      %5279 = vmatmul.f32.gmra.mxu0 %v5168
      %v5280 = vpop.f32.mrf.mxu0
      %v5281 = vadd.f32 0.0, %v5280
      %5282 = vmatmul.f32.gmra.mxu0 %v5171
      %v5283 = vpop.f32.mrf.mxu0
      %v5284 = vadd.f32 0.0, %v5283
      %5285 = vmatmul.f32.gmra.mxu0 %v5174
      %v5286 = vpop.f32.mrf.mxu0
      %v5287 = vadd.f32 0.0, %v5286
      %5288 = vmatmul.f32.gmra.mxu0 %v5177
      %v5289 = vpop.f32.mrf.mxu0
      %v5290 = vadd.f32 0.0, %v5289
      %5291 = vmatmul.f32.gmra.mxu0 %v5180
      %v5292 = vpop.f32.mrf.mxu0
      %v5293 = vadd.f32 0.0, %v5292
      %5294 = vmatmul.f32.gmra.mxu0 %v5183
      %v5295 = vpop.f32.mrf.mxu0
      %v5296 = vadd.f32 0.0, %v5295
      %5297 = vmatmul.f32.gmra.mxu0 %v5186
      %v5298 = vpop.f32.mrf.mxu0
      %v5299 = vadd.f32 0.0, %v5298
      %5300 = vmatmul.f32.gmra.mxu0 %v5189
      %v5301 = vpop.f32.mrf.mxu0
      %v5302 = vadd.f32 0.0, %v5301
      %5303 = vmatmul.f32.gmra.mxu0 %v5192
      %v5304 = vpop.f32.mrf.mxu0
      %v5305 = vadd.f32 0.0, %v5304
      %5306 = vmatmul.f32.gmra.mxu0 %v5195
      %v5307 = vpop.f32.mrf.mxu0
      %v5308 = vadd.f32 0.0, %v5307
      %5309 = vmatmul.f32.gmra.mxu0 %v5198
      %v5310 = vpop.f32.mrf.mxu0
      %v5311 = vadd.f32 0.0, %v5310
      %5312 = vmatmul.f32.gmra.mxu0 %v5201
      %v5313 = vpop.f32.mrf.mxu0
      %v5314 = vadd.f32 0.0, %v5313
      %5315 = vmatmul.f32.gmra.mxu0 %v5204
      %v5316 = vpop.f32.mrf.mxu0
      %v5317 = vadd.f32 0.0, %v5316
      %5318 = vmatmul.f32.gmra.mxu0 %v5207
      %v5319 = vpop.f32.mrf.mxu0
      %v5320 = vadd.f32 0.0, %v5319
      %5321 = vmatmul.f32.gmra.mxu0 %v5210
      %v5322 = vpop.f32.mrf.mxu0
      %v5323 = vadd.f32 0.0, %v5322
      %5324 = vmatmul.f32.gmra.mxu0 %v5213
      %v5325 = vpop.f32.mrf.mxu0
      %v5326 = vadd.f32 0.0, %v5325
      %5327 = vmatmul.f32.gmra.mxu0 %v5216
      %v5328 = vpop.f32.mrf.mxu0
      %v5329 = vadd.f32 0.0, %v5328
      %5330 = vmatmul.f32.gmra.mxu0 %v5219
      %v5331 = vpop.f32.mrf.mxu0
      %v5332 = vadd.f32 0.0, %v5331
      %5333 = vmatmul.f32.gmra.mxu0 %v5222
      %v5334 = vpop.f32.mrf.mxu0
      %v5335 = vadd.f32 0.0, %v5334
      %5336 = vmatmul.f32.gmra.mxu0 %v5225
      %v5337 = vpop.f32.mrf.mxu0
      %v5338 = vadd.f32 0.0, %v5337
      %5339 = vmatmul.f32.gmra.mxu0 %v5228
      %v5340 = vpop.f32.mrf.mxu0
      %v5341 = vadd.f32 0.0, %v5340
      %5342 = vmatmul.f32.gmra.mxu0 %v5231
      %v5343 = vpop.f32.mrf.mxu0
      %v5344 = vadd.f32 0.0, %v5343
      %5345 = vmatmul.f32.gmra.mxu0 %v5234
      %v5346 = vpop.f32.mrf.mxu0
      %v5347 = vadd.f32 0.0, %v5346
      %5348 = vmatmul.f32.gmra.mxu0 %v5237
      %v5349 = vpop.f32.mrf.mxu0
      %v5350 = vadd.f32 0.0, %v5349
      %5351 = vmatmul.f32.gmra.mxu0 %v5240
      %v5352 = vpop.f32.mrf.mxu0
      %v5353 = vadd.f32 0.0, %v5352
      %5354 = vdwg.mxu0
      %v5355 = vadd.f32 %v5080, %v5260
      %v5356 = vadd.f32 %v5081, %v5263
      %v5357 = vadd.f32 %v5082, %v5266
      %v5358 = vadd.f32 %v5083, %v5269
      %v5359 = vadd.f32 %v5084, %v5272
      %v5360 = vadd.f32 %v5085, %v5275
      %v5361 = vadd.f32 %v5086, %v5278
      %v5362 = vadd.f32 %v5087, %v5281
      %v5363 = vadd.f32 %v5088, %v5284
      %v5364 = vadd.f32 %v5089, %v5287
      %v5365 = vadd.f32 %v5090, %v5290
      %v5366 = vadd.f32 %v5091, %v5293
      %v5367 = vadd.f32 %v5092, %v5296
      %v5368 = vadd.f32 %v5093, %v5299
      %v5369 = vadd.f32 %v5094, %v5302
      %v5370 = vadd.f32 %v5095, %v5305
      %v5371 = vadd.f32 %v5096, %v5308
      %v5372 = vadd.f32 %v5097, %v5311
      %v5373 = vadd.f32 %v5098, %v5314
      %v5374 = vadd.f32 %v5099, %v5317
      %v5375 = vadd.f32 %v5100, %v5320
      %v5376 = vadd.f32 %v5101, %v5323
      %v5377 = vadd.f32 %v5102, %v5326
      %v5378 = vadd.f32 %v5103, %v5329
      %v5379 = vadd.f32 %v5104, %v5332
      %v5380 = vadd.f32 %v5105, %v5335
      %v5381 = vadd.f32 %v5106, %v5338
      %v5382 = vadd.f32 %v5107, %v5341
      %v5383 = vadd.f32 %v5108, %v5344
      %v5384 = vadd.f32 %v5109, %v5347
      %v5385 = vadd.f32 %v5110, %v5350
      %v5386 = vadd.f32 %v5111, %v5353
      %v5387 = vld [vmem:[%s4] sm:$0x1]
      %v5389 = vperm.slane %v5387, 0
      %v5391 = vadd.f32 %v5355, %v5389
      %v5392 = vadd.f32 %v5356, %v5389
      %v5393 = vadd.f32 %v5357, %v5389
      %v5394 = vadd.f32 %v5358, %v5389
      %v5395 = vadd.f32 %v5359, %v5389
      %v5396 = vadd.f32 %v5360, %v5389
      %v5397 = vadd.f32 %v5361, %v5389
      %v5398 = vadd.f32 %v5362, %v5389
      %v5399 = vadd.f32 %v5363, %v5389
      %v5400 = vadd.f32 %v5364, %v5389
      %v5401 = vadd.f32 %v5365, %v5389
      %v5402 = vadd.f32 %v5366, %v5389
      %v5403 = vadd.f32 %v5367, %v5389
      %v5404 = vadd.f32 %v5368, %v5389
      %v5405 = vadd.f32 %v5369, %v5389
      %v5406 = vadd.f32 %v5370, %v5389
      %v5407 = vadd.f32 %v5371, %v5389
      %v5408 = vadd.f32 %v5372, %v5389
      %v5409 = vadd.f32 %v5373, %v5389
      %v5410 = vadd.f32 %v5374, %v5389
      %v5411 = vadd.f32 %v5375, %v5389
      %v5412 = vadd.f32 %v5376, %v5389
      %v5413 = vadd.f32 %v5377, %v5389
      %v5414 = vadd.f32 %v5378, %v5389
      %v5415 = vadd.f32 %v5379, %v5389
      %v5416 = vadd.f32 %v5380, %v5389
      %v5417 = vadd.f32 %v5381, %v5389
      %v5418 = vadd.f32 %v5382, %v5389
      %v5419 = vadd.f32 %v5383, %v5389
      %v5420 = vadd.f32 %v5384, %v5389
      %v5421 = vadd.f32 %v5385, %v5389
      %v5422 = vadd.f32 %v5386, %v5389
      %v5423 = vmax.f32 %v5391, 0.0
      %v5424 = vmax.f32 %v5392, 0.0
      %v5425 = vmax.f32 %v5393, 0.0
      %v5426 = vmax.f32 %v5394, 0.0
      %v5427 = vmax.f32 %v5395, 0.0
      %v5428 = vmax.f32 %v5396, 0.0
      %v5429 = vmax.f32 %v5397, 0.0
      %v5430 = vmax.f32 %v5398, 0.0
      %v5431 = vmax.f32 %v5399, 0.0
      %v5432 = vmax.f32 %v5400, 0.0
      %v5433 = vmax.f32 %v5401, 0.0
      %v5434 = vmax.f32 %v5402, 0.0
      %v5435 = vmax.f32 %v5403, 0.0
      %v5436 = vmax.f32 %v5404, 0.0
      %v5437 = vmax.f32 %v5405, 0.0
      %v5438 = vmax.f32 %v5406, 0.0
      %v5439 = vmax.f32 %v5407, 0.0
      %v5440 = vmax.f32 %v5408, 0.0
      %v5441 = vmax.f32 %v5409, 0.0
      %v5442 = vmax.f32 %v5410, 0.0
      %v5443 = vmax.f32 %v5411, 0.0
      %v5444 = vmax.f32 %v5412, 0.0
      %v5445 = vmax.f32 %v5413, 0.0
      %v5446 = vmax.f32 %v5414, 0.0
      %v5447 = vmax.f32 %v5415, 0.0
      %v5448 = vmax.f32 %v5416, 0.0
      %v5449 = vmax.f32 %v5417, 0.0
      %v5450 = vmax.f32 %v5418, 0.0
      %v5451 = vmax.f32 %v5419, 0.0
      %v5452 = vmax.f32 %v5420, 0.0
      %v5453 = vmax.f32 %v5421, 0.0
      %v5454 = vmax.f32 %v5422, 0.0
      %5455 = vst.msk [vmem:[%s224] sm:$0xff] %vm2870, %v5423
      %5456 = vst.msk [vmem:[%s224 + $0x8] sm:$0xff] %vm2870, %v5424
      %5457 = vst.msk [vmem:[%s224 + $0x10] sm:$0xff] %vm2870, %v5425
      %5458 = vst.msk [vmem:[%s224 + $0x18] sm:$0xff] %vm2870, %v5426
      %5459 = vst.msk [vmem:[%s224 + $0x20] sm:$0xff] %vm2870, %v5427
      %5460 = vst.msk [vmem:[%s224 + $0x28] sm:$0xff] %vm2870, %v5428
      %5461 = vst.msk [vmem:[%s224 + $0x30] sm:$0xff] %vm2870, %v5429
      %5462 = vst.msk [vmem:[%s224 + $0x38] sm:$0xff] %vm2870, %v5430
      %5463 = vst.msk [vmem:[%s224 + $0x40] sm:$0xff] %vm2870, %v5431
      %5464 = vst.msk [vmem:[%s224 + $0x48] sm:$0xff] %vm2870, %v5432
      %5465 = vst.msk [vmem:[%s224 + $0x50] sm:$0xff] %vm2870, %v5433
      %5466 = vst.msk [vmem:[%s224 + $0x58] sm:$0xff] %vm2870, %v5434
      %5467 = vst.msk [vmem:[%s224 + $0x60] sm:$0xff] %vm2870, %v5435
      %5468 = vst.msk [vmem:[%s224 + $0x68] sm:$0xff] %vm2870, %v5436
      %5469 = vst.msk [vmem:[%s224 + $0x70] sm:$0xff] %vm2870, %v5437
      %5470 = vst.msk [vmem:[%s224 + $0x78] sm:$0xff] %vm2870, %v5438
      %5471 = vst.msk [vmem:[%s224 + $0x80] sm:$0xff] %vm2870, %v5439
      %5472 = vst.msk [vmem:[%s224 + $0x88] sm:$0xff] %vm2870, %v5440
      %5473 = vst.msk [vmem:[%s224 + $0x90] sm:$0xff] %vm2870, %v5441
      %5474 = vst.msk [vmem:[%s224 + $0x98] sm:$0xff] %vm2870, %v5442
      %5475 = vst.msk [vmem:[%s224 + $0xa0] sm:$0xff] %vm2870, %v5443
      %5476 = vst.msk [vmem:[%s224 + $0xa8] sm:$0xff] %vm2870, %v5444
      %5477 = vst.msk [vmem:[%s224 + $0xb0] sm:$0xff] %vm2870, %v5445
      %5478 = vst.msk [vmem:[%s224 + $0xb8] sm:$0xff] %vm2870, %v5446
      %5479 = vst.msk [vmem:[%s224 + $0xc0] sm:$0xff] %vm2870, %v5447
      %5480 = vst.msk [vmem:[%s224 + $0xc8] sm:$0xff] %vm2870, %v5448
      %5481 = vst.msk [vmem:[%s224 + $0xd0] sm:$0xff] %vm2870, %v5449
      %5482 = vst.msk [vmem:[%s224 + $0xd8] sm:$0xff] %vm2870, %v5450
      %5483 = vst.msk [vmem:[%s224 + $0xe0] sm:$0xff] %vm2870, %v5451
      %5484 = vst.msk [vmem:[%s224 + $0xe8] sm:$0xff] %vm2870, %v5452
      %5485 = vst.msk [vmem:[%s224 + $0xf0] sm:$0xff] %vm2870, %v5453
      %5486 = vst.msk [vmem:[%s224 + $0xf8] sm:$0xff] %vm2870, %v5454
      %p5487 = scmp.lt.s32.totalorder %s16, 1
      %s5488 = scalar_select %p5487, %s16, 1
      %s5489 = smul.addr %s5488, 32
      %s5490 = smul.addr %s5489, 8
      %s5491 = scalar_lea.vmem %s5, %s5490
      // Predicated region
      $region41: #{tpu_custom_call.1} parent=39 // pred_check
        %p5492 = pneg %p144
      $region42: #{tpu_custom_call.1} parent=39 // pred_check_branch
        %5494 = sbr.rel (%p5492) target = $region44
      $region43: #{tpu_custom_call.1} parent=39 // pred_region
        _
      $region44: #{tpu_custom_call.1} parent=39 // pred_fallthru
        _
    $region40: #{tpu_custom_call.1} parent=5 // pred_fallthru
      _
    %p5495 = scmp.le.s32.totalorder 2, %s11
    // Predicated region
    $region45: #{tpu_custom_call.1} parent=5 // pred_check
      %p5496 = pneg %p5495
    $region46: #{tpu_custom_call.1} parent=5 // pred_check_branch
      %5498 = sbr.rel (%p5496) target = $region48
    $region47: #{tpu_custom_call.1} parent=5 // pred_region
      %s5499 = ssub.s32 %s11, 2
      // Predicated region
      $region49: #{tpu_custom_call.1} parent=47 // pred_check
        %p5500 = pneg %p150
      $region50: #{tpu_custom_call.1} parent=47 // pred_check_branch
        %5502 = sbr.rel (%p5500) target = $region52
      $region51: #{tpu_custom_call.1} parent=47 // pred_region
        %p5503 = scmp.lt.s32.totalorder %s17, 1
        %s5504 = scalar_select %p5503, %s17, 1
        %s5505 = smul.addr %s5504, 32
        %s5506 = smul.addr %s5505, 8
        %s5507 = scalar_lea.vmem %s5, %s5506
      $region52: #{tpu_custom_call.1} parent=47 // pred_fallthru
        _
    $region48: #{tpu_custom_call.1} parent=5 // pred_fallthru
      _
  $region6: #{tpu_custom_call.1} parent=0 // loop_footer
    %s15 = sadd.s32 1, %s11
  $region7: #{tpu_custom_call.1} parent=0 // loop_footer_branch
    %10 = sbr.rel target = $region3
  $region8: #{tpu_custom_call.1} parent=0 // loop_exit
    _

</llo_original>
